<compile_context>
chip_gen: v5e
topology: v5e:2x2
jax: 0.10.0
libtpu: 0.0.40
codegen_flags: <defaults>
</compile_context>

<pallas_src>
import functools

import jax
import jax.numpy as jnp
from jax.experimental import pallas as pl
from jax.experimental.pallas import tpu as pltpu


# --------------------------- Fused encoder kernel -----------------------------
def _fused_encoder_kernel(T, B, H, n_l1, *refs):
    """Single-invocation kernel (grid=()); everything lives in VMEM.

    refs layout:
      refs[0]                     : x_ref       (B, T, D)
      refs[1 : 1+3*(n_l1+1)]      : (wih, whh, b) for each lstm1 layer, then lstm2
                                    wih: (Din, 4H), whh: (H, 4H), b: (1, 4H)
      refs[-3]                    : y_ref       (B, T, H)   lstm2 output sequence
      refs[-2]                    : hn_ref      (B, H)      lstm2 final hidden
      refs[-1]                    : seq_buf     (B, T, H)   VMEM scratch (intermediate seq)
    """
    n_total = n_l1 + 1
    x_ref = refs[0]
    w_refs = refs[1:1 + 3 * n_total]
    y_ref, hn_ref, seq_buf = refs[1 + 3 * n_total:]

    def run_layer(seq, wih_ref, whh_ref, b_ref, out_ref):
        """seq: (B, T, Din) value. Writes per-step h into out_ref, returns last h."""
        Din = seq.shape[-1]
        whh = whh_ref[...]
        # Batched input projection for all timesteps at once (off the serial chain).
        g_in = (jnp.dot(seq.reshape(B * T, Din), wih_ref[...],
                        preferred_element_type=jnp.float32)
                + b_ref[...]).reshape(B, T, 4 * H)

        h = jnp.zeros((B, H), jnp.float32)
        c = jnp.zeros((B, H), jnp.float32)
        for t in range(T):  # static unrolled time loop (T is small)
            gates = g_in[:, t, :] + jnp.dot(h, whh,
                                            preferred_element_type=jnp.float32)
            # One sigmoid pass + one tanh pass over the full (B, 4H) vreg.
            sg = jax.nn.sigmoid(gates)
            th = jnp.tanh(gates)
            i_g = sg[:, 0 * H:1 * H]
            f_g = sg[:, 1 * H:2 * H]
            o_g = sg[:, 3 * H:4 * H]
            g_g = th[:, 2 * H:3 * H]
            c = f_g * c + i_g * g_g
            h = o_g * jnp.tanh(c)
            out_ref[:, t, :] = h.astype(out_ref.dtype)
        return h

    # lstm1 stack (intermediate sequences stay in the VMEM scratch buffer).
    seq = x_ref[...]
    for li in range(n_l1):
        wih, whh, b = w_refs[3 * li], w_refs[3 * li + 1], w_refs[3 * li + 2]
        run_layer(seq, wih, whh, b, seq_buf)
        seq = seq_buf[...]

    # ReLU on lstm1's output sequence, then lstm2 writes the real outputs.
    seq = jnp.maximum(seq, 0.0)
    wih2, whh2, b2 = w_refs[3 * n_l1], w_refs[3 * n_l1 + 1], w_refs[3 * n_l1 + 2]
    h_last = run_layer(seq, wih2, whh2, b2, y_ref)
    hn_ref[...] = h_last.astype(hn_ref.dtype)


def lstm_encoder_forward(x_btd, params):
    """Equivalent of LSTMEncoder.forward.

    x_btd: (B, T, D) batch-first, like the PyTorch module.
    Returns (dynamic_x: (B, T, H), hidden_n: (B, H)).
    """
    B, T, D = x_btd.shape
    H = params["lstm2"][1].shape[0]
    n_l1 = len(params["lstm1"])

    flat_w = []
    for (wih, whh, b) in params["lstm1"] + [params["lstm2"]]:
        flat_w += [wih, whh, b.reshape(1, 4 * H)]

    kernel = functools.partial(_fused_encoder_kernel, T, B, H, n_l1)
    n_in = 1 + len(flat_w)

    y, hn = pl.pallas_call(
        kernel,
        out_shape=(jax.ShapeDtypeStruct((B, T, H), jnp.float32),
                   jax.ShapeDtypeStruct((B, H), jnp.float32)),
        in_specs=[pl.BlockSpec(memory_space=pltpu.MemorySpace.VMEM)] * n_in,
        out_specs=(pl.BlockSpec(memory_space=pltpu.MemorySpace.VMEM),
                   pl.BlockSpec(memory_space=pltpu.MemorySpace.VMEM)),
        scratch_shapes=[pltpu.VMEM((B, T, H), jnp.float32)],
    )(x_btd, *flat_w)
    return y, hn


# ------------------------- Parameter initialization ---------------------------
def _kaiming_uniform(key, shape, fan_in, gain):
    bound = gain * (3.0 / fan_in) ** 0.5
    return jax.random.uniform(key, shape, jnp.float32, -bound, bound)


def init_params(key, dynamic_input_size, hidden_size, num_layers):
    # NOTE: weights stored as (Din, 4H)/(H, 4H), i.e. transposed relative to
    # PyTorch's (4H, Din)/(4H, H); transpose if porting real nn.LSTM weights.
    gain_tanh = 5.0 / 3.0  # kaiming_uniform_(nonlinearity='tanh')
    H = hidden_size
    params = {"lstm1": [], "lstm2": None}
    for li in range(num_layers):
        in_dim = dynamic_input_size if li == 0 else H
        key, k1, k2 = jax.random.split(key, 3)
        wih = _kaiming_uniform(k1, (in_dim, 4 * H), fan_in=in_dim, gain=gain_tanh)
        whh = _kaiming_uniform(k2, (H, 4 * H), fan_in=H, gain=gain_tanh)
        b = jnp.full((4 * H,), 0.02, jnp.float32)  # bias_ih + bias_hh, each 0.01
        params["lstm1"].append((wih, whh, b))
    key, k1, k2 = jax.random.split(key, 3)
    wih2 = _kaiming_uniform(k1, (H, 4 * H), fan_in=H, gain=gain_tanh)
    whh2 = _kaiming_uniform(k2, (H, 4 * H), fan_in=H, gain=gain_tanh)
    b2 = jnp.full((4 * H,), 0.02, jnp.float32)
    params["lstm2"] = (wih2, whh2, b2)
    return params


# ------------------------------ Pure-JAX reference ----------------------------
def _lstm_layer_ref(x_tm, wih, whh, b):
    T, B, _ = x_tm.shape
    H = whh.shape[0]
    prec = jax.lax.Precision.HIGHEST

    def step(carry, x_t):
        h, c = carry
        gates = (jnp.dot(x_t, wih, precision=prec)
                 + jnp.dot(h, whh, precision=prec) + b)
        i = jax.nn.sigmoid(gates[:, :H])
        f = jax.nn.sigmoid(gates[:, H:2 * H])
        g = jnp.tanh(gates[:, 2 * H:3 * H])
        o = jax.nn.sigmoid(gates[:, 3 * H:])
        c = f * c + i * g
        h = o * jnp.tanh(c)
        return (h, c), h

    (h, _), ys = jax.lax.scan(step, (jnp.zeros((B, H)), jnp.zeros((B, H))), x_tm)
    return ys, h


def lstm_encoder_ref(x_btd, params):
    x = jnp.transpose(x_btd, (1, 0, 2))  # time-major for the scan
    for wih, whh, b in params["lstm1"]:
        x, _ = _lstm_layer_ref(x, wih, whh, b)
    x = jnp.maximum(x, 0.0)
    y, hn = _lstm_layer_ref(x, *params["lstm2"])
    return jnp.transpose(y, (1, 0, 2)), hn


# ----------------------------------- Main -------------------------------------
if __name__ == "__main__":
    B, T, D, H, NL = 2, 8, 16, 32, 2  # batch, seq_len, dynamic_input_size, hidden_size, num_layers

    key = jax.random.PRNGKey(0)
    key, kx, kp = jax.random.split(key, 3)
    x = jax.random.normal(kx, (B, T, D), jnp.float32)  # (batch, seq, features), batch_first
    params = init_params(kp, D, H, NL)

    fwd = jax.jit(lstm_encoder_forward)
    y, hn = jax.block_until_ready(fwd(x, params))

    # correctness check against pure-JAX reference
    y_ref, hn_ref = lstm_encoder_ref(x, params)
    assert y.shape == (B, T, H) and hn.shape == (B, H)
    assert jnp.allclose(y, y_ref, atol=1e-4, rtol=1e-4)
    assert jnp.allclose(hn, hn_ref, atol=1e-4, rtol=1e-4)

    print("KERNEL_OK")
</pallas_src>

<mosaic_0001>
module attributes {stable_mosaic.version = 11 : i64} {
  func.func @_fused_encoder_kernel(%arg0: memref<2x8x16xf32, #tpu.memory_space<vmem>>, %arg1: memref<16x128xf32, #tpu.memory_space<vmem>>, %arg2: memref<32x128xf32, #tpu.memory_space<vmem>>, %arg3: memref<1x128xf32, #tpu.memory_space<vmem>>, %arg4: memref<32x128xf32, #tpu.memory_space<vmem>>, %arg5: memref<32x128xf32, #tpu.memory_space<vmem>>, %arg6: memref<1x128xf32, #tpu.memory_space<vmem>>, %arg7: memref<32x128xf32, #tpu.memory_space<vmem>>, %arg8: memref<32x128xf32, #tpu.memory_space<vmem>>, %arg9: memref<1x128xf32, #tpu.memory_space<vmem>>, %arg10: memref<2x8x32xf32, #tpu.memory_space<vmem>>, %arg11: memref<2x32xf32, #tpu.memory_space<vmem>>, %arg12: memref<2x8x32xf32, #tpu.memory_space<vmem>>) attributes {dimension_semantics = [], scalar_prefetch = 0 : i64, scratch_operands = 1 : i64, tpu.core_type = #tpu.core_type<tc>} {
    %c0 = arith.constant 0 : index
    %c0_0 = arith.constant 0 : index
    %c0_1 = arith.constant 0 : index
    %0 = vector.load %arg0[%c0, %c0_0, %c0_1] : memref<2x8x16xf32, #tpu.memory_space<vmem>>, vector<2x8x16xf32>
    %c0_2 = arith.constant 0 : index
    %c0_3 = arith.constant 0 : index
    %1 = vector.load %arg2[%c0_2, %c0_3] : memref<32x128xf32, #tpu.memory_space<vmem>>, vector<32x128xf32>
    %2 = vector.shape_cast %0 : vector<2x8x16xf32> to vector<16x16xf32>
    %c0_4 = arith.constant 0 : index
    %c0_5 = arith.constant 0 : index
    %3 = vector.load %arg1[%c0_4, %c0_5] : memref<16x128xf32, #tpu.memory_space<vmem>>, vector<16x128xf32>
    %cst = arith.constant dense<0.000000e+00> : vector<16x128xf32>
    %4 = tpu.matmul %2, %3, %cst {dimension_numbers = #tpu.dot_dimension_numbers<[1], [0], [0], [1], [0, 0, 1, 1], [], []>} : vector<16x16xf32>, vector<16x128xf32>, vector<16x128xf32> -> vector<16x128xf32>
    %c0_6 = arith.constant 0 : index
    %c0_7 = arith.constant 0 : index
    %5 = vector.load %arg3[%c0_6, %c0_7] : memref<1x128xf32, #tpu.memory_space<vmem>>, vector<1x128xf32>
    %6 = vector.broadcast %5 : vector<1x128xf32> to vector<16x128xf32>
    %7 = arith.addf %4, %6 : vector<16x128xf32>
    %8 = vector.shape_cast %7 : vector<16x128xf32> to vector<2x8x128xf32>
    %cst_8 = arith.constant 0.000000e+00 : f32
    %9 = vector.broadcast %cst_8 : f32 to vector<2x32xf32>
    %cst_9 = arith.constant 0.000000e+00 : f32
    %10 = vector.broadcast %cst_9 : f32 to vector<2x32xf32>
    %11 = vector.extract_strided_slice %8 {offsets = [0, 0, 0], sizes = [2, 1, 128], strides = [1, 1, 1]} : vector<2x8x128xf32> to vector<2x1x128xf32>
    %12 = vector.shape_cast %11 : vector<2x1x128xf32> to vector<2x128xf32>
    %cst_10 = arith.constant dense<0.000000e+00> : vector<2x128xf32>
    %13 = tpu.matmul %9, %1, %cst_10 {dimension_numbers = #tpu.dot_dimension_numbers<[1], [0], [0], [1], [0, 0, 1, 1], [], []>} : vector<2x32xf32>, vector<32x128xf32>, vector<2x128xf32> -> vector<2x128xf32>
    %14 = arith.addf %12, %13 : vector<2x128xf32>
    %15 = arith.negf %14 : vector<2x128xf32>
    %16 = math.exp %15 : vector<2x128xf32>
    %cst_11 = arith.constant 1.000000e+00 : f32
    %17 = vector.broadcast %cst_11 : f32 to vector<2x128xf32>
    %18 = arith.addf %17, %16 : vector<2x128xf32>
    %19 = arith.divf %17, %18 : vector<2x128xf32>
    %20 = math.tanh %14 : vector<2x128xf32>
    %21 = vector.extract_strided_slice %19 {offsets = [0, 0], sizes = [2, 32], strides = [1, 1]} : vector<2x128xf32> to vector<2x32xf32>
    %22 = vector.extract_strided_slice %19 {offsets = [0, 32], sizes = [2, 32], strides = [1, 1]} : vector<2x128xf32> to vector<2x32xf32>
    %23 = vector.extract_strided_slice %19 {offsets = [0, 96], sizes = [2, 32], strides = [1, 1]} : vector<2x128xf32> to vector<2x32xf32>
    %24 = vector.extract_strided_slice %20 {offsets = [0, 64], sizes = [2, 32], strides = [1, 1]} : vector<2x128xf32> to vector<2x32xf32>
    %25 = arith.mulf %22, %10 : vector<2x32xf32>
    %26 = arith.mulf %21, %24 : vector<2x32xf32>
    %27 = arith.addf %25, %26 : vector<2x32xf32>
    %28 = math.tanh %27 : vector<2x32xf32>
    %29 = arith.mulf %23, %28 : vector<2x32xf32>
    %c0_12 = arith.constant 0 : index
    %c0_13 = arith.constant 0 : index
    %c0_14 = arith.constant 0 : index
    %30 = vector.load %arg12[%c0_12, %c0_13, %c0_14] : memref<2x8x32xf32, #tpu.memory_space<vmem>>, vector<2x1x32xf32>
    %31 = vector.shape_cast %30 : vector<2x1x32xf32> to vector<2x32xf32>
    %32 = vector.shape_cast %29 : vector<2x32xf32> to vector<2x1x32xf32>
    tpu.vector_store %arg12[%c0_12, %c0_13, %c0_14], %32 {strides = array<i32>} : memref<2x8x32xf32, #tpu.memory_space<vmem>>, vector<2x1x32xf32>,
    %33 = vector.extract_strided_slice %8 {offsets = [0, 1, 0], sizes = [2, 1, 128], strides = [1, 1, 1]} : vector<2x8x128xf32> to vector<2x1x128xf32>
    %34 = vector.shape_cast %33 : vector<2x1x128xf32> to vector<2x128xf32>
    %cst_15 = arith.constant dense<0.000000e+00> : vector<2x128xf32>
    %35 = tpu.matmul %29, %1, %cst_15 {dimension_numbers = #tpu.dot_dimension_numbers<[1], [0], [0], [1], [0, 0, 1, 1], [], []>} : vector<2x32xf32>, vector<32x128xf32>, vector<2x128xf32> -> vector<2x128xf32>
    %36 = arith.addf %34, %35 : vector<2x128xf32>
    %37 = arith.negf %36 : vector<2x128xf32>
    %38 = math.exp %37 : vector<2x128xf32>
    %cst_16 = arith.constant 1.000000e+00 : f32
    %39 = vector.broadcast %cst_16 : f32 to vector<2x128xf32>
    %40 = arith.addf %39, %38 : vector<2x128xf32>
    %41 = arith.divf %39, %40 : vector<2x128xf32>
    %42 = math.tanh %36 : vector<2x128xf32>
    %43 = vector.extract_strided_slice %41 {offsets = [0, 0], sizes = [2, 32], strides = [1, 1]} : vector<2x128xf32> to vector<2x32xf32>
    %44 = vector.extract_strided_slice %41 {offsets = [0, 32], sizes = [2, 32], strides = [1, 1]} : vector<2x128xf32> to vector<2x32xf32>
    %45 = vector.extract_strided_slice %41 {offsets = [0, 96], sizes = [2, 32], strides = [1, 1]} : vector<2x128xf32> to vector<2x32xf32>
    %46 = vector.extract_strided_slice %42 {offsets = [0, 64], sizes = [2, 32], strides = [1, 1]} : vector<2x128xf32> to vector<2x32xf32>
    %47 = arith.mulf %44, %27 : vector<2x32xf32>
    %48 = arith.mulf %43, %46 : vector<2x32xf32>
    %49 = arith.addf %47, %48 : vector<2x32xf32>
    %50 = math.tanh %49 : vector<2x32xf32>
    %51 = arith.mulf %45, %50 : vector<2x32xf32>
    %c0_17 = arith.constant 0 : index
    %c1 = arith.constant 1 : index
    %c0_18 = arith.constant 0 : index
    %52 = vector.load %arg12[%c0_17, %c1, %c0_18] : memref<2x8x32xf32, #tpu.memory_space<vmem>>, vector<2x1x32xf32>
    %53 = vector.shape_cast %52 : vector<2x1x32xf32> to vector<2x32xf32>
    %54 = vector.shape_cast %51 : vector<2x32xf32> to vector<2x1x32xf32>
    tpu.vector_store %arg12[%c0_17, %c1, %c0_18], %54 {strides = array<i32>} : memref<2x8x32xf32, #tpu.memory_space<vmem>>, vector<2x1x32xf32>,
    %55 = vector.extract_strided_slice %8 {offsets = [0, 2, 0], sizes = [2, 1, 128], strides = [1, 1, 1]} : vector<2x8x128xf32> to vector<2x1x128xf32>
    %56 = vector.shape_cast %55 : vector<2x1x128xf32> to vector<2x128xf32>
    %cst_19 = arith.constant dense<0.000000e+00> : vector<2x128xf32>
    %57 = tpu.matmul %51, %1, %cst_19 {dimension_numbers = #tpu.dot_dimension_numbers<[1], [0], [0], [1], [0, 0, 1, 1], [], []>} : vector<2x32xf32>, vector<32x128xf32>, vector<2x128xf32> -> vector<2x128xf32>
    %58 = arith.addf %56, %57 : vector<2x128xf32>
    %59 = arith.negf %58 : vector<2x128xf32>
    %60 = math.exp %59 : vector<2x128xf32>
    %cst_20 = arith.constant 1.000000e+00 : f32
    %61 = vector.broadcast %cst_20 : f32 to vector<2x128xf32>
    %62 = arith.addf %61, %60 : vector<2x128xf32>
    %63 = arith.divf %61, %62 : vector<2x128xf32>
    %64 = math.tanh %58 : vector<2x128xf32>
    %65 = vector.extract_strided_slice %63 {offsets = [0, 0], sizes = [2, 32], strides = [1, 1]} : vector<2x128xf32> to vector<2x32xf32>
    %66 = vector.extract_strided_slice %63 {offsets = [0, 32], sizes = [2, 32], strides = [1, 1]} : vector<2x128xf32> to vector<2x32xf32>
    %67 = vector.extract_strided_slice %63 {offsets = [0, 96], sizes = [2, 32], strides = [1, 1]} : vector<2x128xf32> to vector<2x32xf32>
    %68 = vector.extract_strided_slice %64 {offsets = [0, 64], sizes = [2, 32], strides = [1, 1]} : vector<2x128xf32> to vector<2x32xf32>
    %69 = arith.mulf %66, %49 : vector<2x32xf32>
    %70 = arith.mulf %65, %68 : vector<2x32xf32>
    %71 = arith.addf %69, %70 : vector<2x32xf32>
    %72 = math.tanh %71 : vector<2x32xf32>
    %73 = arith.mulf %67, %72 : vector<2x32xf32>
    %c0_21 = arith.constant 0 : index
    %c2 = arith.constant 2 : index
    %c0_22 = arith.constant 0 : index
    %74 = vector.load %arg12[%c0_21, %c2, %c0_22] : memref<2x8x32xf32, #tpu.memory_space<vmem>>, vector<2x1x32xf32>
    %75 = vector.shape_cast %74 : vector<2x1x32xf32> to vector<2x32xf32>
    %76 = vector.shape_cast %73 : vector<2x32xf32> to vector<2x1x32xf32>
    tpu.vector_store %arg12[%c0_21, %c2, %c0_22], %76 {strides = array<i32>} : memref<2x8x32xf32, #tpu.memory_space<vmem>>, vector<2x1x32xf32>,
    %77 = vector.extract_strided_slice %8 {offsets = [0, 3, 0], sizes = [2, 1, 128], strides = [1, 1, 1]} : vector<2x8x128xf32> to vector<2x1x128xf32>
    %78 = vector.shape_cast %77 : vector<2x1x128xf32> to vector<2x128xf32>
    %cst_23 = arith.constant dense<0.000000e+00> : vector<2x128xf32>
    %79 = tpu.matmul %73, %1, %cst_23 {dimension_numbers = #tpu.dot_dimension_numbers<[1], [0], [0], [1], [0, 0, 1, 1], [], []>} : vector<2x32xf32>, vector<32x128xf32>, vector<2x128xf32> -> vector<2x128xf32>
    %80 = arith.addf %78, %79 : vector<2x128xf32>
    %81 = arith.negf %80 : vector<2x128xf32>
    %82 = math.exp %81 : vector<2x128xf32>
    %cst_24 = arith.constant 1.000000e+00 : f32
    %83 = vector.broadcast %cst_24 : f32 to vector<2x128xf32>
    %84 = arith.addf %83, %82 : vector<2x128xf32>
    %85 = arith.divf %83, %84 : vector<2x128xf32>
    %86 = math.tanh %80 : vector<2x128xf32>
    %87 = vector.extract_strided_slice %85 {offsets = [0, 0], sizes = [2, 32], strides = [1, 1]} : vector<2x128xf32> to vector<2x32xf32>
    %88 = vector.extract_strided_slice %85 {offsets = [0, 32], sizes = [2, 32], strides = [1, 1]} : vector<2x128xf32> to vector<2x32xf32>
    %89 = vector.extract_strided_slice %85 {offsets = [0, 96], sizes = [2, 32], strides = [1, 1]} : vector<2x128xf32> to vector<2x32xf32>
    %90 = vector.extract_strided_slice %86 {offsets = [0, 64], sizes = [2, 32], strides = [1, 1]} : vector<2x128xf32> to vector<2x32xf32>
    %91 = arith.mulf %88, %71 : vector<2x32xf32>
    %92 = arith.mulf %87, %90 : vector<2x32xf32>
    %93 = arith.addf %91, %92 : vector<2x32xf32>
    %94 = math.tanh %93 : vector<2x32xf32>
    %95 = arith.mulf %89, %94 : vector<2x32xf32>
    %c0_25 = arith.constant 0 : index
    %c3 = arith.constant 3 : index
    %c0_26 = arith.constant 0 : index
    %96 = vector.load %arg12[%c0_25, %c3, %c0_26] : memref<2x8x32xf32, #tpu.memory_space<vmem>>, vector<2x1x32xf32>
    %97 = vector.shape_cast %96 : vector<2x1x32xf32> to vector<2x32xf32>
    %98 = vector.shape_cast %95 : vector<2x32xf32> to vector<2x1x32xf32>
    tpu.vector_store %arg12[%c0_25, %c3, %c0_26], %98 {strides = array<i32>} : memref<2x8x32xf32, #tpu.memory_space<vmem>>, vector<2x1x32xf32>,
    %99 = vector.extract_strided_slice %8 {offsets = [0, 4, 0], sizes = [2, 1, 128], strides = [1, 1, 1]} : vector<2x8x128xf32> to vector<2x1x128xf32>
    %100 = vector.shape_cast %99 : vector<2x1x128xf32> to vector<2x128xf32>
    %cst_27 = arith.constant dense<0.000000e+00> : vector<2x128xf32>
    %101 = tpu.matmul %95, %1, %cst_27 {dimension_numbers = #tpu.dot_dimension_numbers<[1], [0], [0], [1], [0, 0, 1, 1], [], []>} : vector<2x32xf32>, vector<32x128xf32>, vector<2x128xf32> -> vector<2x128xf32>
    %102 = arith.addf %100, %101 : vector<2x128xf32>
    %103 = arith.negf %102 : vector<2x128xf32>
    %104 = math.exp %103 : vector<2x128xf32>
    %cst_28 = arith.constant 1.000000e+00 : f32
    %105 = vector.broadcast %cst_28 : f32 to vector<2x128xf32>
    %106 = arith.addf %105, %104 : vector<2x128xf32>
    %107 = arith.divf %105, %106 : vector<2x128xf32>
    %108 = math.tanh %102 : vector<2x128xf32>
    %109 = vector.extract_strided_slice %107 {offsets = [0, 0], sizes = [2, 32], strides = [1, 1]} : vector<2x128xf32> to vector<2x32xf32>
    %110 = vector.extract_strided_slice %107 {offsets = [0, 32], sizes = [2, 32], strides = [1, 1]} : vector<2x128xf32> to vector<2x32xf32>
    %111 = vector.extract_strided_slice %107 {offsets = [0, 96], sizes = [2, 32], strides = [1, 1]} : vector<2x128xf32> to vector<2x32xf32>
    %112 = vector.extract_strided_slice %108 {offsets = [0, 64], sizes = [2, 32], strides = [1, 1]} : vector<2x128xf32> to vector<2x32xf32>
    %113 = arith.mulf %110, %93 : vector<2x32xf32>
    %114 = arith.mulf %109, %112 : vector<2x32xf32>
    %115 = arith.addf %113, %114 : vector<2x32xf32>
    %116 = math.tanh %115 : vector<2x32xf32>
    %117 = arith.mulf %111, %116 : vector<2x32xf32>
    %c0_29 = arith.constant 0 : index
    %c4 = arith.constant 4 : index
    %c0_30 = arith.constant 0 : index
    %118 = vector.load %arg12[%c0_29, %c4, %c0_30] : memref<2x8x32xf32, #tpu.memory_space<vmem>>, vector<2x1x32xf32>
    %119 = vector.shape_cast %118 : vector<2x1x32xf32> to vector<2x32xf32>
    %120 = vector.shape_cast %117 : vector<2x32xf32> to vector<2x1x32xf32>
    tpu.vector_store %arg12[%c0_29, %c4, %c0_30], %120 {strides = array<i32>} : memref<2x8x32xf32, #tpu.memory_space<vmem>>, vector<2x1x32xf32>,
    %121 = vector.extract_strided_slice %8 {offsets = [0, 5, 0], sizes = [2, 1, 128], strides = [1, 1, 1]} : vector<2x8x128xf32> to vector<2x1x128xf32>
    %122 = vector.shape_cast %121 : vector<2x1x128xf32> to vector<2x128xf32>
    %cst_31 = arith.constant dense<0.000000e+00> : vector<2x128xf32>
    %123 = tpu.matmul %117, %1, %cst_31 {dimension_numbers = #tpu.dot_dimension_numbers<[1], [0], [0], [1], [0, 0, 1, 1], [], []>} : vector<2x32xf32>, vector<32x128xf32>, vector<2x128xf32> -> vector<2x128xf32>
    %124 = arith.addf %122, %123 : vector<2x128xf32>
    %125 = arith.negf %124 : vector<2x128xf32>
    %126 = math.exp %125 : vector<2x128xf32>
    %cst_32 = arith.constant 1.000000e+00 : f32
    %127 = vector.broadcast %cst_32 : f32 to vector<2x128xf32>
    %128 = arith.addf %127, %126 : vector<2x128xf32>
    %129 = arith.divf %127, %128 : vector<2x128xf32>
    %130 = math.tanh %124 : vector<2x128xf32>
    %131 = vector.extract_strided_slice %129 {offsets = [0, 0], sizes = [2, 32], strides = [1, 1]} : vector<2x128xf32> to vector<2x32xf32>
    %132 = vector.extract_strided_slice %129 {offsets = [0, 32], sizes = [2, 32], strides = [1, 1]} : vector<2x128xf32> to vector<2x32xf32>
    %133 = vector.extract_strided_slice %129 {offsets = [0, 96], sizes = [2, 32], strides = [1, 1]} : vector<2x128xf32> to vector<2x32xf32>
    %134 = vector.extract_strided_slice %130 {offsets = [0, 64], sizes = [2, 32], strides = [1, 1]} : vector<2x128xf32> to vector<2x32xf32>
    %135 = arith.mulf %132, %115 : vector<2x32xf32>
    %136 = arith.mulf %131, %134 : vector<2x32xf32>
    %137 = arith.addf %135, %136 : vector<2x32xf32>
    %138 = math.tanh %137 : vector<2x32xf32>
    %139 = arith.mulf %133, %138 : vector<2x32xf32>
    %c0_33 = arith.constant 0 : index
    %c5 = arith.constant 5 : index
    %c0_34 = arith.constant 0 : index
    %140 = vector.load %arg12[%c0_33, %c5, %c0_34] : memref<2x8x32xf32, #tpu.memory_space<vmem>>, vector<2x1x32xf32>
    %141 = vector.shape_cast %140 : vector<2x1x32xf32> to vector<2x32xf32>
    %142 = vector.shape_cast %139 : vector<2x32xf32> to vector<2x1x32xf32>
    tpu.vector_store %arg12[%c0_33, %c5, %c0_34], %142 {strides = array<i32>} : memref<2x8x32xf32, #tpu.memory_space<vmem>>, vector<2x1x32xf32>,
    %143 = vector.extract_strided_slice %8 {offsets = [0, 6, 0], sizes = [2, 1, 128], strides = [1, 1, 1]} : vector<2x8x128xf32> to vector<2x1x128xf32>
    %144 = vector.shape_cast %143 : vector<2x1x128xf32> to vector<2x128xf32>
    %cst_35 = arith.constant dense<0.000000e+00> : vector<2x128xf32>
    %145 = tpu.matmul %139, %1, %cst_35 {dimension_numbers = #tpu.dot_dimension_numbers<[1], [0], [0], [1], [0, 0, 1, 1], [], []>} : vector<2x32xf32>, vector<32x128xf32>, vector<2x128xf32> -> vector<2x128xf32>
    %146 = arith.addf %144, %145 : vector<2x128xf32>
    %147 = arith.negf %146 : vector<2x128xf32>
    %148 = math.exp %147 : vector<2x128xf32>
    %cst_36 = arith.constant 1.000000e+00 : f32
    %149 = vector.broadcast %cst_36 : f32 to vector<2x128xf32>
    %150 = arith.addf %149, %148 : vector<2x128xf32>
    %151 = arith.divf %149, %150 : vector<2x128xf32>
    %152 = math.tanh %146 : vector<2x128xf32>
    %153 = vector.extract_strided_slice %151 {offsets = [0, 0], sizes = [2, 32], strides = [1, 1]} : vector<2x128xf32> to vector<2x32xf32>
    %154 = vector.extract_strided_slice %151 {offsets = [0, 32], sizes = [2, 32], strides = [1, 1]} : vector<2x128xf32> to vector<2x32xf32>
    %155 = vector.extract_strided_slice %151 {offsets = [0, 96], sizes = [2, 32], strides = [1, 1]} : vector<2x128xf32> to vector<2x32xf32>
    %156 = vector.extract_strided_slice %152 {offsets = [0, 64], sizes = [2, 32], strides = [1, 1]} : vector<2x128xf32> to vector<2x32xf32>
    %157 = arith.mulf %154, %137 : vector<2x32xf32>
    %158 = arith.mulf %153, %156 : vector<2x32xf32>
    %159 = arith.addf %157, %158 : vector<2x32xf32>
    %160 = math.tanh %159 : vector<2x32xf32>
    %161 = arith.mulf %155, %160 : vector<2x32xf32>
    %c0_37 = arith.constant 0 : index
    %c6 = arith.constant 6 : index
    %c0_38 = arith.constant 0 : index
    %162 = vector.load %arg12[%c0_37, %c6, %c0_38] : memref<2x8x32xf32, #tpu.memory_space<vmem>>, vector<2x1x32xf32>
    %163 = vector.shape_cast %162 : vector<2x1x32xf32> to vector<2x32xf32>
    %164 = vector.shape_cast %161 : vector<2x32xf32> to vector<2x1x32xf32>
    tpu.vector_store %arg12[%c0_37, %c6, %c0_38], %164 {strides = array<i32>} : memref<2x8x32xf32, #tpu.memory_space<vmem>>, vector<2x1x32xf32>,
    %165 = vector.extract_strided_slice %8 {offsets = [0, 7, 0], sizes = [2, 1, 128], strides = [1, 1, 1]} : vector<2x8x128xf32> to vector<2x1x128xf32>
    %166 = vector.shape_cast %165 : vector<2x1x128xf32> to vector<2x128xf32>
    %cst_39 = arith.constant dense<0.000000e+00> : vector<2x128xf32>
    %167 = tpu.matmul %161, %1, %cst_39 {dimension_numbers = #tpu.dot_dimension_numbers<[1], [0], [0], [1], [0, 0, 1, 1], [], []>} : vector<2x32xf32>, vector<32x128xf32>, vector<2x128xf32> -> vector<2x128xf32>
    %168 = arith.addf %166, %167 : vector<2x128xf32>
    %169 = arith.negf %168 : vector<2x128xf32>
    %170 = math.exp %169 : vector<2x128xf32>
    %cst_40 = arith.constant 1.000000e+00 : f32
    %171 = vector.broadcast %cst_40 : f32 to vector<2x128xf32>
    %172 = arith.addf %171, %170 : vector<2x128xf32>
    %173 = arith.divf %171, %172 : vector<2x128xf32>
    %174 = math.tanh %168 : vector<2x128xf32>
    %175 = vector.extract_strided_slice %173 {offsets = [0, 0], sizes = [2, 32], strides = [1, 1]} : vector<2x128xf32> to vector<2x32xf32>
    %176 = vector.extract_strided_slice %173 {offsets = [0, 32], sizes = [2, 32], strides = [1, 1]} : vector<2x128xf32> to vector<2x32xf32>
    %177 = vector.extract_strided_slice %173 {offsets = [0, 96], sizes = [2, 32], strides = [1, 1]} : vector<2x128xf32> to vector<2x32xf32>
    %178 = vector.extract_strided_slice %174 {offsets = [0, 64], sizes = [2, 32], strides = [1, 1]} : vector<2x128xf32> to vector<2x32xf32>
    %179 = arith.mulf %176, %159 : vector<2x32xf32>
    %180 = arith.mulf %175, %178 : vector<2x32xf32>
    %181 = arith.addf %179, %180 : vector<2x32xf32>
    %182 = math.tanh %181 : vector<2x32xf32>
    %183 = arith.mulf %177, %182 : vector<2x32xf32>
    %c0_41 = arith.constant 0 : index
    %c7 = arith.constant 7 : index
    %c0_42 = arith.constant 0 : index
    %184 = vector.load %arg12[%c0_41, %c7, %c0_42] : memref<2x8x32xf32, #tpu.memory_space<vmem>>, vector<2x1x32xf32>
    %185 = vector.shape_cast %184 : vector<2x1x32xf32> to vector<2x32xf32>
    %186 = vector.shape_cast %183 : vector<2x32xf32> to vector<2x1x32xf32>
    tpu.vector_store %arg12[%c0_41, %c7, %c0_42], %186 {strides = array<i32>} : memref<2x8x32xf32, #tpu.memory_space<vmem>>, vector<2x1x32xf32>,
    %c0_43 = arith.constant 0 : index
    %c0_44 = arith.constant 0 : index
    %c0_45 = arith.constant 0 : index
    %187 = vector.load %arg12[%c0_43, %c0_44, %c0_45] : memref<2x8x32xf32, #tpu.memory_space<vmem>>, vector<2x8x32xf32>
    %c0_46 = arith.constant 0 : index
    %c0_47 = arith.constant 0 : index
    %188 = vector.load %arg5[%c0_46, %c0_47] : memref<32x128xf32, #tpu.memory_space<vmem>>, vector<32x128xf32>
    %189 = vector.shape_cast %187 : vector<2x8x32xf32> to vector<16x32xf32>
    %c0_48 = arith.constant 0 : index
    %c0_49 = arith.constant 0 : index
    %190 = vector.load %arg4[%c0_48, %c0_49] : memref<32x128xf32, #tpu.memory_space<vmem>>, vector<32x128xf32>
    %cst_50 = arith.constant dense<0.000000e+00> : vector<16x128xf32>
    %191 = tpu.matmul %189, %190, %cst_50 {dimension_numbers = #tpu.dot_dimension_numbers<[1], [0], [0], [1], [0, 0, 1, 1], [], []>} : vector<16x32xf32>, vector<32x128xf32>, vector<16x128xf32> -> vector<16x128xf32>
    %c0_51 = arith.constant 0 : index
    %c0_52 = arith.constant 0 : index
    %192 = vector.load %arg6[%c0_51, %c0_52] : memref<1x128xf32, #tpu.memory_space<vmem>>, vector<1x128xf32>
    %193 = vector.broadcast %192 : vector<1x128xf32> to vector<16x128xf32>
    %194 = arith.addf %191, %193 : vector<16x128xf32>
    %195 = vector.shape_cast %194 : vector<16x128xf32> to vector<2x8x128xf32>
    %cst_53 = arith.constant 0.000000e+00 : f32
    %196 = vector.broadcast %cst_53 : f32 to vector<2x32xf32>
    %cst_54 = arith.constant 0.000000e+00 : f32
    %197 = vector.broadcast %cst_54 : f32 to vector<2x32xf32>
    %198 = vector.extract_strided_slice %195 {offsets = [0, 0, 0], sizes = [2, 1, 128], strides = [1, 1, 1]} : vector<2x8x128xf32> to vector<2x1x128xf32>
    %199 = vector.shape_cast %198 : vector<2x1x128xf32> to vector<2x128xf32>
    %cst_55 = arith.constant dense<0.000000e+00> : vector<2x128xf32>
    %200 = tpu.matmul %196, %188, %cst_55 {dimension_numbers = #tpu.dot_dimension_numbers<[1], [0], [0], [1], [0, 0, 1, 1], [], []>} : vector<2x32xf32>, vector<32x128xf32>, vector<2x128xf32> -> vector<2x128xf32>
    %201 = arith.addf %199, %200 : vector<2x128xf32>
    %202 = arith.negf %201 : vector<2x128xf32>
    %203 = math.exp %202 : vector<2x128xf32>
    %cst_56 = arith.constant 1.000000e+00 : f32
    %204 = vector.broadcast %cst_56 : f32 to vector<2x128xf32>
    %205 = arith.addf %204, %203 : vector<2x128xf32>
    %206 = arith.divf %204, %205 : vector<2x128xf32>
    %207 = math.tanh %201 : vector<2x128xf32>
    %208 = vector.extract_strided_slice %206 {offsets = [0, 0], sizes = [2, 32], strides = [1, 1]} : vector<2x128xf32> to vector<2x32xf32>
    %209 = vector.extract_strided_slice %206 {offsets = [0, 32], sizes = [2, 32], strides = [1, 1]} : vector<2x128xf32> to vector<2x32xf32>
    %210 = vector.extract_strided_slice %206 {offsets = [0, 96], sizes = [2, 32], strides = [1, 1]} : vector<2x128xf32> to vector<2x32xf32>
    %211 = vector.extract_strided_slice %207 {offsets = [0, 64], sizes = [2, 32], strides = [1, 1]} : vector<2x128xf32> to vector<2x32xf32>
    %212 = arith.mulf %209, %197 : vector<2x32xf32>
    %213 = arith.mulf %208, %211 : vector<2x32xf32>
    %214 = arith.addf %212, %213 : vector<2x32xf32>
    %215 = math.tanh %214 : vector<2x32xf32>
    %216 = arith.mulf %210, %215 : vector<2x32xf32>
    %c0_57 = arith.constant 0 : index
    %c0_58 = arith.constant 0 : index
    %c0_59 = arith.constant 0 : index
    %217 = vector.load %arg12[%c0_57, %c0_58, %c0_59] : memref<2x8x32xf32, #tpu.memory_space<vmem>>, vector<2x1x32xf32>
    %218 = vector.shape_cast %217 : vector<2x1x32xf32> to vector<2x32xf32>
    %219 = vector.shape_cast %216 : vector<2x32xf32> to vector<2x1x32xf32>
    tpu.vector_store %arg12[%c0_57, %c0_58, %c0_59], %219 {strides = array<i32>} : memref<2x8x32xf32, #tpu.memory_space<vmem>>, vector<2x1x32xf32>,
    %220 = vector.extract_strided_slice %195 {offsets = [0, 1, 0], sizes = [2, 1, 128], strides = [1, 1, 1]} : vector<2x8x128xf32> to vector<2x1x128xf32>
    %221 = vector.shape_cast %220 : vector<2x1x128xf32> to vector<2x128xf32>
    %cst_60 = arith.constant dense<0.000000e+00> : vector<2x128xf32>
    %222 = tpu.matmul %216, %188, %cst_60 {dimension_numbers = #tpu.dot_dimension_numbers<[1], [0], [0], [1], [0, 0, 1, 1], [], []>} : vector<2x32xf32>, vector<32x128xf32>, vector<2x128xf32> -> vector<2x128xf32>
    %223 = arith.addf %221, %222 : vector<2x128xf32>
    %224 = arith.negf %223 : vector<2x128xf32>
    %225 = math.exp %224 : vector<2x128xf32>
    %cst_61 = arith.constant 1.000000e+00 : f32
    %226 = vector.broadcast %cst_61 : f32 to vector<2x128xf32>
    %227 = arith.addf %226, %225 : vector<2x128xf32>
    %228 = arith.divf %226, %227 : vector<2x128xf32>
    %229 = math.tanh %223 : vector<2x128xf32>
    %230 = vector.extract_strided_slice %228 {offsets = [0, 0], sizes = [2, 32], strides = [1, 1]} : vector<2x128xf32> to vector<2x32xf32>
    %231 = vector.extract_strided_slice %228 {offsets = [0, 32], sizes = [2, 32], strides = [1, 1]} : vector<2x128xf32> to vector<2x32xf32>
    %232 = vector.extract_strided_slice %228 {offsets = [0, 96], sizes = [2, 32], strides = [1, 1]} : vector<2x128xf32> to vector<2x32xf32>
    %233 = vector.extract_strided_slice %229 {offsets = [0, 64], sizes = [2, 32], strides = [1, 1]} : vector<2x128xf32> to vector<2x32xf32>
    %234 = arith.mulf %231, %214 : vector<2x32xf32>
    %235 = arith.mulf %230, %233 : vector<2x32xf32>
    %236 = arith.addf %234, %235 : vector<2x32xf32>
    %237 = math.tanh %236 : vector<2x32xf32>
    %238 = arith.mulf %232, %237 : vector<2x32xf32>
    %c0_62 = arith.constant 0 : index
    %c1_63 = arith.constant 1 : index
    %c0_64 = arith.constant 0 : index
    %239 = vector.load %arg12[%c0_62, %c1_63, %c0_64] : memref<2x8x32xf32, #tpu.memory_space<vmem>>, vector<2x1x32xf32>
    %240 = vector.shape_cast %239 : vector<2x1x32xf32> to vector<2x32xf32>
    %241 = vector.shape_cast %238 : vector<2x32xf32> to vector<2x1x32xf32>
    tpu.vector_store %arg12[%c0_62, %c1_63, %c0_64], %241 {strides = array<i32>} : memref<2x8x32xf32, #tpu.memory_space<vmem>>, vector<2x1x32xf32>,
    %242 = vector.extract_strided_slice %195 {offsets = [0, 2, 0], sizes = [2, 1, 128], strides = [1, 1, 1]} : vector<2x8x128xf32> to vector<2x1x128xf32>
    %243 = vector.shape_cast %242 : vector<2x1x128xf32> to vector<2x128xf32>
    %cst_65 = arith.constant dense<0.000000e+00> : vector<2x128xf32>
    %244 = tpu.matmul %238, %188, %cst_65 {dimension_numbers = #tpu.dot_dimension_numbers<[1], [0], [0], [1], [0, 0, 1, 1], [], []>} : vector<2x32xf32>, vector<32x128xf32>, vector<2x128xf32> -> vector<2x128xf32>
    %245 = arith.addf %243, %244 : vector<2x128xf32>
    %246 = arith.negf %245 : vector<2x128xf32>
    %247 = math.exp %246 : vector<2x128xf32>
    %cst_66 = arith.constant 1.000000e+00 : f32
    %248 = vector.broadcast %cst_66 : f32 to vector<2x128xf32>
    %249 = arith.addf %248, %247 : vector<2x128xf32>
    %250 = arith.divf %248, %249 : vector<2x128xf32>
    %251 = math.tanh %245 : vector<2x128xf32>
    %252 = vector.extract_strided_slice %250 {offsets = [0, 0], sizes = [2, 32], strides = [1, 1]} : vector<2x128xf32> to vector<2x32xf32>
    %253 = vector.extract_strided_slice %250 {offsets = [0, 32], sizes = [2, 32], strides = [1, 1]} : vector<2x128xf32> to vector<2x32xf32>
    %254 = vector.extract_strided_slice %250 {offsets = [0, 96], sizes = [2, 32], strides = [1, 1]} : vector<2x128xf32> to vector<2x32xf32>
    %255 = vector.extract_strided_slice %251 {offsets = [0, 64], sizes = [2, 32], strides = [1, 1]} : vector<2x128xf32> to vector<2x32xf32>
    %256 = arith.mulf %253, %236 : vector<2x32xf32>
    %257 = arith.mulf %252, %255 : vector<2x32xf32>
    %258 = arith.addf %256, %257 : vector<2x32xf32>
    %259 = math.tanh %258 : vector<2x32xf32>
    %260 = arith.mulf %254, %259 : vector<2x32xf32>
    %c0_67 = arith.constant 0 : index
    %c2_68 = arith.constant 2 : index
    %c0_69 = arith.constant 0 : index
    %261 = vector.load %arg12[%c0_67, %c2_68, %c0_69] : memref<2x8x32xf32, #tpu.memory_space<vmem>>, vector<2x1x32xf32>
    %262 = vector.shape_cast %261 : vector<2x1x32xf32> to vector<2x32xf32>
    %263 = vector.shape_cast %260 : vector<2x32xf32> to vector<2x1x32xf32>
    tpu.vector_store %arg12[%c0_67, %c2_68, %c0_69], %263 {strides = array<i32>} : memref<2x8x32xf32, #tpu.memory_space<vmem>>, vector<2x1x32xf32>,
    %264 = vector.extract_strided_slice %195 {offsets = [0, 3, 0], sizes = [2, 1, 128], strides = [1, 1, 1]} : vector<2x8x128xf32> to vector<2x1x128xf32>
    %265 = vector.shape_cast %264 : vector<2x1x128xf32> to vector<2x128xf32>
    %cst_70 = arith.constant dense<0.000000e+00> : vector<2x128xf32>
    %266 = tpu.matmul %260, %188, %cst_70 {dimension_numbers = #tpu.dot_dimension_numbers<[1], [0], [0], [1], [0, 0, 1, 1], [], []>} : vector<2x32xf32>, vector<32x128xf32>, vector<2x128xf32> -> vector<2x128xf32>
    %267 = arith.addf %265, %266 : vector<2x128xf32>
    %268 = arith.negf %267 : vector<2x128xf32>
    %269 = math.exp %268 : vector<2x128xf32>
    %cst_71 = arith.constant 1.000000e+00 : f32
    %270 = vector.broadcast %cst_71 : f32 to vector<2x128xf32>
    %271 = arith.addf %270, %269 : vector<2x128xf32>
    %272 = arith.divf %270, %271 : vector<2x128xf32>
    %273 = math.tanh %267 : vector<2x128xf32>
    %274 = vector.extract_strided_slice %272 {offsets = [0, 0], sizes = [2, 32], strides = [1, 1]} : vector<2x128xf32> to vector<2x32xf32>
    %275 = vector.extract_strided_slice %272 {offsets = [0, 32], sizes = [2, 32], strides = [1, 1]} : vector<2x128xf32> to vector<2x32xf32>
    %276 = vector.extract_strided_slice %272 {offsets = [0, 96], sizes = [2, 32], strides = [1, 1]} : vector<2x128xf32> to vector<2x32xf32>
    %277 = vector.extract_strided_slice %273 {offsets = [0, 64], sizes = [2, 32], strides = [1, 1]} : vector<2x128xf32> to vector<2x32xf32>
    %278 = arith.mulf %275, %258 : vector<2x32xf32>
    %279 = arith.mulf %274, %277 : vector<2x32xf32>
    %280 = arith.addf %278, %279 : vector<2x32xf32>
    %281 = math.tanh %280 : vector<2x32xf32>
    %282 = arith.mulf %276, %281 : vector<2x32xf32>
    %c0_72 = arith.constant 0 : index
    %c3_73 = arith.constant 3 : index
    %c0_74 = arith.constant 0 : index
    %283 = vector.load %arg12[%c0_72, %c3_73, %c0_74] : memref<2x8x32xf32, #tpu.memory_space<vmem>>, vector<2x1x32xf32>
    %284 = vector.shape_cast %283 : vector<2x1x32xf32> to vector<2x32xf32>
    %285 = vector.shape_cast %282 : vector<2x32xf32> to vector<2x1x32xf32>
    tpu.vector_store %arg12[%c0_72, %c3_73, %c0_74], %285 {strides = array<i32>} : memref<2x8x32xf32, #tpu.memory_space<vmem>>, vector<2x1x32xf32>,
    %286 = vector.extract_strided_slice %195 {offsets = [0, 4, 0], sizes = [2, 1, 128], strides = [1, 1, 1]} : vector<2x8x128xf32> to vector<2x1x128xf32>
    %287 = vector.shape_cast %286 : vector<2x1x128xf32> to vector<2x128xf32>
    %cst_75 = arith.constant dense<0.000000e+00> : vector<2x128xf32>
    %288 = tpu.matmul %282, %188, %cst_75 {dimension_numbers = #tpu.dot_dimension_numbers<[1], [0], [0], [1], [0, 0, 1, 1], [], []>} : vector<2x32xf32>, vector<32x128xf32>, vector<2x128xf32> -> vector<2x128xf32>
    %289 = arith.addf %287, %288 : vector<2x128xf32>
    %290 = arith.negf %289 : vector<2x128xf32>
    %291 = math.exp %290 : vector<2x128xf32>
    %cst_76 = arith.constant 1.000000e+00 : f32
    %292 = vector.broadcast %cst_76 : f32 to vector<2x128xf32>
    %293 = arith.addf %292, %291 : vector<2x128xf32>
    %294 = arith.divf %292, %293 : vector<2x128xf32>
    %295 = math.tanh %289 : vector<2x128xf32>
    %296 = vector.extract_strided_slice %294 {offsets = [0, 0], sizes = [2, 32], strides = [1, 1]} : vector<2x128xf32> to vector<2x32xf32>
    %297 = vector.extract_strided_slice %294 {offsets = [0, 32], sizes = [2, 32], strides = [1, 1]} : vector<2x128xf32> to vector<2x32xf32>
    %298 = vector.extract_strided_slice %294 {offsets = [0, 96], sizes = [2, 32], strides = [1, 1]} : vector<2x128xf32> to vector<2x32xf32>
    %299 = vector.extract_strided_slice %295 {offsets = [0, 64], sizes = [2, 32], strides = [1, 1]} : vector<2x128xf32> to vector<2x32xf32>
    %300 = arith.mulf %297, %280 : vector<2x32xf32>
    %301 = arith.mulf %296, %299 : vector<2x32xf32>
    %302 = arith.addf %300, %301 : vector<2x32xf32>
    %303 = math.tanh %302 : vector<2x32xf32>
    %304 = arith.mulf %298, %303 : vector<2x32xf32>
    %c0_77 = arith.constant 0 : index
    %c4_78 = arith.constant 4 : index
    %c0_79 = arith.constant 0 : index
    %305 = vector.load %arg12[%c0_77, %c4_78, %c0_79] : memref<2x8x32xf32, #tpu.memory_space<vmem>>, vector<2x1x32xf32>
    %306 = vector.shape_cast %305 : vector<2x1x32xf32> to vector<2x32xf32>
    %307 = vector.shape_cast %304 : vector<2x32xf32> to vector<2x1x32xf32>
    tpu.vector_store %arg12[%c0_77, %c4_78, %c0_79], %307 {strides = array<i32>} : memref<2x8x32xf32, #tpu.memory_space<vmem>>, vector<2x1x32xf32>,
    %308 = vector.extract_strided_slice %195 {offsets = [0, 5, 0], sizes = [2, 1, 128], strides = [1, 1, 1]} : vector<2x8x128xf32> to vector<2x1x128xf32>
    %309 = vector.shape_cast %308 : vector<2x1x128xf32> to vector<2x128xf32>
    %cst_80 = arith.constant dense<0.000000e+00> : vector<2x128xf32>
    %310 = tpu.matmul %304, %188, %cst_80 {dimension_numbers = #tpu.dot_dimension_numbers<[1], [0], [0], [1], [0, 0, 1, 1], [], []>} : vector<2x32xf32>, vector<32x128xf32>, vector<2x128xf32> -> vector<2x128xf32>
    %311 = arith.addf %309, %310 : vector<2x128xf32>
    %312 = arith.negf %311 : vector<2x128xf32>
    %313 = math.exp %312 : vector<2x128xf32>
    %cst_81 = arith.constant 1.000000e+00 : f32
    %314 = vector.broadcast %cst_81 : f32 to vector<2x128xf32>
    %315 = arith.addf %314, %313 : vector<2x128xf32>
    %316 = arith.divf %314, %315 : vector<2x128xf32>
    %317 = math.tanh %311 : vector<2x128xf32>
    %318 = vector.extract_strided_slice %316 {offsets = [0, 0], sizes = [2, 32], strides = [1, 1]} : vector<2x128xf32> to vector<2x32xf32>
    %319 = vector.extract_strided_slice %316 {offsets = [0, 32], sizes = [2, 32], strides = [1, 1]} : vector<2x128xf32> to vector<2x32xf32>
    %320 = vector.extract_strided_slice %316 {offsets = [0, 96], sizes = [2, 32], strides = [1, 1]} : vector<2x128xf32> to vector<2x32xf32>
    %321 = vector.extract_strided_slice %317 {offsets = [0, 64], sizes = [2, 32], strides = [1, 1]} : vector<2x128xf32> to vector<2x32xf32>
    %322 = arith.mulf %319, %302 : vector<2x32xf32>
    %323 = arith.mulf %318, %321 : vector<2x32xf32>
    %324 = arith.addf %322, %323 : vector<2x32xf32>
    %325 = math.tanh %324 : vector<2x32xf32>
    %326 = arith.mulf %320, %325 : vector<2x32xf32>
    %c0_82 = arith.constant 0 : index
    %c5_83 = arith.constant 5 : index
    %c0_84 = arith.constant 0 : index
    %327 = vector.load %arg12[%c0_82, %c5_83, %c0_84] : memref<2x8x32xf32, #tpu.memory_space<vmem>>, vector<2x1x32xf32>
    %328 = vector.shape_cast %327 : vector<2x1x32xf32> to vector<2x32xf32>
    %329 = vector.shape_cast %326 : vector<2x32xf32> to vector<2x1x32xf32>
    tpu.vector_store %arg12[%c0_82, %c5_83, %c0_84], %329 {strides = array<i32>} : memref<2x8x32xf32, #tpu.memory_space<vmem>>, vector<2x1x32xf32>,
    %330 = vector.extract_strided_slice %195 {offsets = [0, 6, 0], sizes = [2, 1, 128], strides = [1, 1, 1]} : vector<2x8x128xf32> to vector<2x1x128xf32>
    %331 = vector.shape_cast %330 : vector<2x1x128xf32> to vector<2x128xf32>
    %cst_85 = arith.constant dense<0.000000e+00> : vector<2x128xf32>
    %332 = tpu.matmul %326, %188, %cst_85 {dimension_numbers = #tpu.dot_dimension_numbers<[1], [0], [0], [1], [0, 0, 1, 1], [], []>} : vector<2x32xf32>, vector<32x128xf32>, vector<2x128xf32> -> vector<2x128xf32>
    %333 = arith.addf %331, %332 : vector<2x128xf32>
    %334 = arith.negf %333 : vector<2x128xf32>
    %335 = math.exp %334 : vector<2x128xf32>
    %cst_86 = arith.constant 1.000000e+00 : f32
    %336 = vector.broadcast %cst_86 : f32 to vector<2x128xf32>
    %337 = arith.addf %336, %335 : vector<2x128xf32>
    %338 = arith.divf %336, %337 : vector<2x128xf32>
    %339 = math.tanh %333 : vector<2x128xf32>
    %340 = vector.extract_strided_slice %338 {offsets = [0, 0], sizes = [2, 32], strides = [1, 1]} : vector<2x128xf32> to vector<2x32xf32>
    %341 = vector.extract_strided_slice %338 {offsets = [0, 32], sizes = [2, 32], strides = [1, 1]} : vector<2x128xf32> to vector<2x32xf32>
    %342 = vector.extract_strided_slice %338 {offsets = [0, 96], sizes = [2, 32], strides = [1, 1]} : vector<2x128xf32> to vector<2x32xf32>
    %343 = vector.extract_strided_slice %339 {offsets = [0, 64], sizes = [2, 32], strides = [1, 1]} : vector<2x128xf32> to vector<2x32xf32>
    %344 = arith.mulf %341, %324 : vector<2x32xf32>
    %345 = arith.mulf %340, %343 : vector<2x32xf32>
    %346 = arith.addf %344, %345 : vector<2x32xf32>
    %347 = math.tanh %346 : vector<2x32xf32>
    %348 = arith.mulf %342, %347 : vector<2x32xf32>
    %c0_87 = arith.constant 0 : index
    %c6_88 = arith.constant 6 : index
    %c0_89 = arith.constant 0 : index
    %349 = vector.load %arg12[%c0_87, %c6_88, %c0_89] : memref<2x8x32xf32, #tpu.memory_space<vmem>>, vector<2x1x32xf32>
    %350 = vector.shape_cast %349 : vector<2x1x32xf32> to vector<2x32xf32>
    %351 = vector.shape_cast %348 : vector<2x32xf32> to vector<2x1x32xf32>
    tpu.vector_store %arg12[%c0_87, %c6_88, %c0_89], %351 {strides = array<i32>} : memref<2x8x32xf32, #tpu.memory_space<vmem>>, vector<2x1x32xf32>,
    %352 = vector.extract_strided_slice %195 {offsets = [0, 7, 0], sizes = [2, 1, 128], strides = [1, 1, 1]} : vector<2x8x128xf32> to vector<2x1x128xf32>
    %353 = vector.shape_cast %352 : vector<2x1x128xf32> to vector<2x128xf32>
    %cst_90 = arith.constant dense<0.000000e+00> : vector<2x128xf32>
    %354 = tpu.matmul %348, %188, %cst_90 {dimension_numbers = #tpu.dot_dimension_numbers<[1], [0], [0], [1], [0, 0, 1, 1], [], []>} : vector<2x32xf32>, vector<32x128xf32>, vector<2x128xf32> -> vector<2x128xf32>
    %355 = arith.addf %353, %354 : vector<2x128xf32>
    %356 = arith.negf %355 : vector<2x128xf32>
    %357 = math.exp %356 : vector<2x128xf32>
    %cst_91 = arith.constant 1.000000e+00 : f32
    %358 = vector.broadcast %cst_91 : f32 to vector<2x128xf32>
    %359 = arith.addf %358, %357 : vector<2x128xf32>
    %360 = arith.divf %358, %359 : vector<2x128xf32>
    %361 = math.tanh %355 : vector<2x128xf32>
    %362 = vector.extract_strided_slice %360 {offsets = [0, 0], sizes = [2, 32], strides = [1, 1]} : vector<2x128xf32> to vector<2x32xf32>
    %363 = vector.extract_strided_slice %360 {offsets = [0, 32], sizes = [2, 32], strides = [1, 1]} : vector<2x128xf32> to vector<2x32xf32>
    %364 = vector.extract_strided_slice %360 {offsets = [0, 96], sizes = [2, 32], strides = [1, 1]} : vector<2x128xf32> to vector<2x32xf32>
    %365 = vector.extract_strided_slice %361 {offsets = [0, 64], sizes = [2, 32], strides = [1, 1]} : vector<2x128xf32> to vector<2x32xf32>
    %366 = arith.mulf %363, %346 : vector<2x32xf32>
    %367 = arith.mulf %362, %365 : vector<2x32xf32>
    %368 = arith.addf %366, %367 : vector<2x32xf32>
    %369 = math.tanh %368 : vector<2x32xf32>
    %370 = arith.mulf %364, %369 : vector<2x32xf32>
    %c0_92 = arith.constant 0 : index
    %c7_93 = arith.constant 7 : index
    %c0_94 = arith.constant 0 : index
    %371 = vector.load %arg12[%c0_92, %c7_93, %c0_94] : memref<2x8x32xf32, #tpu.memory_space<vmem>>, vector<2x1x32xf32>
    %372 = vector.shape_cast %371 : vector<2x1x32xf32> to vector<2x32xf32>
    %373 = vector.shape_cast %370 : vector<2x32xf32> to vector<2x1x32xf32>
    tpu.vector_store %arg12[%c0_92, %c7_93, %c0_94], %373 {strides = array<i32>} : memref<2x8x32xf32, #tpu.memory_space<vmem>>, vector<2x1x32xf32>,
    %c0_95 = arith.constant 0 : index
    %c0_96 = arith.constant 0 : index
    %c0_97 = arith.constant 0 : index
    %374 = vector.load %arg12[%c0_95, %c0_96, %c0_97] : memref<2x8x32xf32, #tpu.memory_space<vmem>>, vector<2x8x32xf32>
    %cst_98 = arith.constant 0.000000e+00 : f32
    %375 = vector.broadcast %cst_98 : f32 to vector<2x8x32xf32>
    %376 = arith.maximumf %374, %375 : vector<2x8x32xf32>
    %c0_99 = arith.constant 0 : index
    %c0_100 = arith.constant 0 : index
    %377 = vector.load %arg8[%c0_99, %c0_100] : memref<32x128xf32, #tpu.memory_space<vmem>>, vector<32x128xf32>
    %378 = vector.shape_cast %376 : vector<2x8x32xf32> to vector<16x32xf32>
    %c0_101 = arith.constant 0 : index
    %c0_102 = arith.constant 0 : index
    %379 = vector.load %arg7[%c0_101, %c0_102] : memref<32x128xf32, #tpu.memory_space<vmem>>, vector<32x128xf32>
    %cst_103 = arith.constant dense<0.000000e+00> : vector<16x128xf32>
    %380 = tpu.matmul %378, %379, %cst_103 {dimension_numbers = #tpu.dot_dimension_numbers<[1], [0], [0], [1], [0, 0, 1, 1], [], []>} : vector<16x32xf32>, vector<32x128xf32>, vector<16x128xf32> -> vector<16x128xf32>
    %c0_104 = arith.constant 0 : index
    %c0_105 = arith.constant 0 : index
    %381 = vector.load %arg9[%c0_104, %c0_105] : memref<1x128xf32, #tpu.memory_space<vmem>>, vector<1x128xf32>
    %382 = vector.broadcast %381 : vector<1x128xf32> to vector<16x128xf32>
    %383 = arith.addf %380, %382 : vector<16x128xf32>
    %384 = vector.shape_cast %383 : vector<16x128xf32> to vector<2x8x128xf32>
    %cst_106 = arith.constant 0.000000e+00 : f32
    %385 = vector.broadcast %cst_106 : f32 to vector<2x32xf32>
    %cst_107 = arith.constant 0.000000e+00 : f32
    %386 = vector.broadcast %cst_107 : f32 to vector<2x32xf32>
    %387 = vector.extract_strided_slice %384 {offsets = [0, 0, 0], sizes = [2, 1, 128], strides = [1, 1, 1]} : vector<2x8x128xf32> to vector<2x1x128xf32>
    %388 = vector.shape_cast %387 : vector<2x1x128xf32> to vector<2x128xf32>
    %cst_108 = arith.constant dense<0.000000e+00> : vector<2x128xf32>
    %389 = tpu.matmul %385, %377, %cst_108 {dimension_numbers = #tpu.dot_dimension_numbers<[1], [0], [0], [1], [0, 0, 1, 1], [], []>} : vector<2x32xf32>, vector<32x128xf32>, vector<2x128xf32> -> vector<2x128xf32>
    %390 = arith.addf %388, %389 : vector<2x128xf32>
    %391 = arith.negf %390 : vector<2x128xf32>
    %392 = math.exp %391 : vector<2x128xf32>
    %cst_109 = arith.constant 1.000000e+00 : f32
    %393 = vector.broadcast %cst_109 : f32 to vector<2x128xf32>
    %394 = arith.addf %393, %392 : vector<2x128xf32>
    %395 = arith.divf %393, %394 : vector<2x128xf32>
    %396 = math.tanh %390 : vector<2x128xf32>
    %397 = vector.extract_strided_slice %395 {offsets = [0, 0], sizes = [2, 32], strides = [1, 1]} : vector<2x128xf32> to vector<2x32xf32>
    %398 = vector.extract_strided_slice %395 {offsets = [0, 32], sizes = [2, 32], strides = [1, 1]} : vector<2x128xf32> to vector<2x32xf32>
    %399 = vector.extract_strided_slice %395 {offsets = [0, 96], sizes = [2, 32], strides = [1, 1]} : vector<2x128xf32> to vector<2x32xf32>
    %400 = vector.extract_strided_slice %396 {offsets = [0, 64], sizes = [2, 32], strides = [1, 1]} : vector<2x128xf32> to vector<2x32xf32>
    %401 = arith.mulf %398, %386 : vector<2x32xf32>
    %402 = arith.mulf %397, %400 : vector<2x32xf32>
    %403 = arith.addf %401, %402 : vector<2x32xf32>
    %404 = math.tanh %403 : vector<2x32xf32>
    %405 = arith.mulf %399, %404 : vector<2x32xf32>
    %c0_110 = arith.constant 0 : index
    %c0_111 = arith.constant 0 : index
    %c0_112 = arith.constant 0 : index
    %406 = vector.load %arg10[%c0_110, %c0_111, %c0_112] : memref<2x8x32xf32, #tpu.memory_space<vmem>>, vector<2x1x32xf32>
    %407 = vector.shape_cast %406 : vector<2x1x32xf32> to vector<2x32xf32>
    %408 = vector.shape_cast %405 : vector<2x32xf32> to vector<2x1x32xf32>
    tpu.vector_store %arg10[%c0_110, %c0_111, %c0_112], %408 {strides = array<i32>} : memref<2x8x32xf32, #tpu.memory_space<vmem>>, vector<2x1x32xf32>,
    %409 = vector.extract_strided_slice %384 {offsets = [0, 1, 0], sizes = [2, 1, 128], strides = [1, 1, 1]} : vector<2x8x128xf32> to vector<2x1x128xf32>
    %410 = vector.shape_cast %409 : vector<2x1x128xf32> to vector<2x128xf32>
    %cst_113 = arith.constant dense<0.000000e+00> : vector<2x128xf32>
    %411 = tpu.matmul %405, %377, %cst_113 {dimension_numbers = #tpu.dot_dimension_numbers<[1], [0], [0], [1], [0, 0, 1, 1], [], []>} : vector<2x32xf32>, vector<32x128xf32>, vector<2x128xf32> -> vector<2x128xf32>
    %412 = arith.addf %410, %411 : vector<2x128xf32>
    %413 = arith.negf %412 : vector<2x128xf32>
    %414 = math.exp %413 : vector<2x128xf32>
    %cst_114 = arith.constant 1.000000e+00 : f32
    %415 = vector.broadcast %cst_114 : f32 to vector<2x128xf32>
    %416 = arith.addf %415, %414 : vector<2x128xf32>
    %417 = arith.divf %415, %416 : vector<2x128xf32>
    %418 = math.tanh %412 : vector<2x128xf32>
    %419 = vector.extract_strided_slice %417 {offsets = [0, 0], sizes = [2, 32], strides = [1, 1]} : vector<2x128xf32> to vector<2x32xf32>
    %420 = vector.extract_strided_slice %417 {offsets = [0, 32], sizes = [2, 32], strides = [1, 1]} : vector<2x128xf32> to vector<2x32xf32>
    %421 = vector.extract_strided_slice %417 {offsets = [0, 96], sizes = [2, 32], strides = [1, 1]} : vector<2x128xf32> to vector<2x32xf32>
    %422 = vector.extract_strided_slice %418 {offsets = [0, 64], sizes = [2, 32], strides = [1, 1]} : vector<2x128xf32> to vector<2x32xf32>
    %423 = arith.mulf %420, %403 : vector<2x32xf32>
    %424 = arith.mulf %419, %422 : vector<2x32xf32>
    %425 = arith.addf %423, %424 : vector<2x32xf32>
    %426 = math.tanh %425 : vector<2x32xf32>
    %427 = arith.mulf %421, %426 : vector<2x32xf32>
    %c0_115 = arith.constant 0 : index
    %c1_116 = arith.constant 1 : index
    %c0_117 = arith.constant 0 : index
    %428 = vector.load %arg10[%c0_115, %c1_116, %c0_117] : memref<2x8x32xf32, #tpu.memory_space<vmem>>, vector<2x1x32xf32>
    %429 = vector.shape_cast %428 : vector<2x1x32xf32> to vector<2x32xf32>
    %430 = vector.shape_cast %427 : vector<2x32xf32> to vector<2x1x32xf32>
    tpu.vector_store %arg10[%c0_115, %c1_116, %c0_117], %430 {strides = array<i32>} : memref<2x8x32xf32, #tpu.memory_space<vmem>>, vector<2x1x32xf32>,
    %431 = vector.extract_strided_slice %384 {offsets = [0, 2, 0], sizes = [2, 1, 128], strides = [1, 1, 1]} : vector<2x8x128xf32> to vector<2x1x128xf32>
    %432 = vector.shape_cast %431 : vector<2x1x128xf32> to vector<2x128xf32>
    %cst_118 = arith.constant dense<0.000000e+00> : vector<2x128xf32>
    %433 = tpu.matmul %427, %377, %cst_118 {dimension_numbers = #tpu.dot_dimension_numbers<[1], [0], [0], [1], [0, 0, 1, 1], [], []>} : vector<2x32xf32>, vector<32x128xf32>, vector<2x128xf32> -> vector<2x128xf32>
    %434 = arith.addf %432, %433 : vector<2x128xf32>
    %435 = arith.negf %434 : vector<2x128xf32>
    %436 = math.exp %435 : vector<2x128xf32>
    %cst_119 = arith.constant 1.000000e+00 : f32
    %437 = vector.broadcast %cst_119 : f32 to vector<2x128xf32>
    %438 = arith.addf %437, %436 : vector<2x128xf32>
    %439 = arith.divf %437, %438 : vector<2x128xf32>
    %440 = math.tanh %434 : vector<2x128xf32>
    %441 = vector.extract_strided_slice %439 {offsets = [0, 0], sizes = [2, 32], strides = [1, 1]} : vector<2x128xf32> to vector<2x32xf32>
    %442 = vector.extract_strided_slice %439 {offsets = [0, 32], sizes = [2, 32], strides = [1, 1]} : vector<2x128xf32> to vector<2x32xf32>
    %443 = vector.extract_strided_slice %439 {offsets = [0, 96], sizes = [2, 32], strides = [1, 1]} : vector<2x128xf32> to vector<2x32xf32>
    %444 = vector.extract_strided_slice %440 {offsets = [0, 64], sizes = [2, 32], strides = [1, 1]} : vector<2x128xf32> to vector<2x32xf32>
    %445 = arith.mulf %442, %425 : vector<2x32xf32>
    %446 = arith.mulf %441, %444 : vector<2x32xf32>
    %447 = arith.addf %445, %446 : vector<2x32xf32>
    %448 = math.tanh %447 : vector<2x32xf32>
    %449 = arith.mulf %443, %448 : vector<2x32xf32>
    %c0_120 = arith.constant 0 : index
    %c2_121 = arith.constant 2 : index
    %c0_122 = arith.constant 0 : index
    %450 = vector.load %arg10[%c0_120, %c2_121, %c0_122] : memref<2x8x32xf32, #tpu.memory_space<vmem>>, vector<2x1x32xf32>
    %451 = vector.shape_cast %450 : vector<2x1x32xf32> to vector<2x32xf32>
    %452 = vector.shape_cast %449 : vector<2x32xf32> to vector<2x1x32xf32>
    tpu.vector_store %arg10[%c0_120, %c2_121, %c0_122], %452 {strides = array<i32>} : memref<2x8x32xf32, #tpu.memory_space<vmem>>, vector<2x1x32xf32>,
    %453 = vector.extract_strided_slice %384 {offsets = [0, 3, 0], sizes = [2, 1, 128], strides = [1, 1, 1]} : vector<2x8x128xf32> to vector<2x1x128xf32>
    %454 = vector.shape_cast %453 : vector<2x1x128xf32> to vector<2x128xf32>
    %cst_123 = arith.constant dense<0.000000e+00> : vector<2x128xf32>
    %455 = tpu.matmul %449, %377, %cst_123 {dimension_numbers = #tpu.dot_dimension_numbers<[1], [0], [0], [1], [0, 0, 1, 1], [], []>} : vector<2x32xf32>, vector<32x128xf32>, vector<2x128xf32> -> vector<2x128xf32>
    %456 = arith.addf %454, %455 : vector<2x128xf32>
    %457 = arith.negf %456 : vector<2x128xf32>
    %458 = math.exp %457 : vector<2x128xf32>
    %cst_124 = arith.constant 1.000000e+00 : f32
    %459 = vector.broadcast %cst_124 : f32 to vector<2x128xf32>
    %460 = arith.addf %459, %458 : vector<2x128xf32>
    %461 = arith.divf %459, %460 : vector<2x128xf32>
    %462 = math.tanh %456 : vector<2x128xf32>
    %463 = vector.extract_strided_slice %461 {offsets = [0, 0], sizes = [2, 32], strides = [1, 1]} : vector<2x128xf32> to vector<2x32xf32>
    %464 = vector.extract_strided_slice %461 {offsets = [0, 32], sizes = [2, 32], strides = [1, 1]} : vector<2x128xf32> to vector<2x32xf32>
    %465 = vector.extract_strided_slice %461 {offsets = [0, 96], sizes = [2, 32], strides = [1, 1]} : vector<2x128xf32> to vector<2x32xf32>
    %466 = vector.extract_strided_slice %462 {offsets = [0, 64], sizes = [2, 32], strides = [1, 1]} : vector<2x128xf32> to vector<2x32xf32>
    %467 = arith.mulf %464, %447 : vector<2x32xf32>
    %468 = arith.mulf %463, %466 : vector<2x32xf32>
    %469 = arith.addf %467, %468 : vector<2x32xf32>
    %470 = math.tanh %469 : vector<2x32xf32>
    %471 = arith.mulf %465, %470 : vector<2x32xf32>
    %c0_125 = arith.constant 0 : index
    %c3_126 = arith.constant 3 : index
    %c0_127 = arith.constant 0 : index
    %472 = vector.load %arg10[%c0_125, %c3_126, %c0_127] : memref<2x8x32xf32, #tpu.memory_space<vmem>>, vector<2x1x32xf32>
    %473 = vector.shape_cast %472 : vector<2x1x32xf32> to vector<2x32xf32>
    %474 = vector.shape_cast %471 : vector<2x32xf32> to vector<2x1x32xf32>
    tpu.vector_store %arg10[%c0_125, %c3_126, %c0_127], %474 {strides = array<i32>} : memref<2x8x32xf32, #tpu.memory_space<vmem>>, vector<2x1x32xf32>,
    %475 = vector.extract_strided_slice %384 {offsets = [0, 4, 0], sizes = [2, 1, 128], strides = [1, 1, 1]} : vector<2x8x128xf32> to vector<2x1x128xf32>
    %476 = vector.shape_cast %475 : vector<2x1x128xf32> to vector<2x128xf32>
    %cst_128 = arith.constant dense<0.000000e+00> : vector<2x128xf32>
    %477 = tpu.matmul %471, %377, %cst_128 {dimension_numbers = #tpu.dot_dimension_numbers<[1], [0], [0], [1], [0, 0, 1, 1], [], []>} : vector<2x32xf32>, vector<32x128xf32>, vector<2x128xf32> -> vector<2x128xf32>
    %478 = arith.addf %476, %477 : vector<2x128xf32>
    %479 = arith.negf %478 : vector<2x128xf32>
    %480 = math.exp %479 : vector<2x128xf32>
    %cst_129 = arith.constant 1.000000e+00 : f32
    %481 = vector.broadcast %cst_129 : f32 to vector<2x128xf32>
    %482 = arith.addf %481, %480 : vector<2x128xf32>
    %483 = arith.divf %481, %482 : vector<2x128xf32>
    %484 = math.tanh %478 : vector<2x128xf32>
    %485 = vector.extract_strided_slice %483 {offsets = [0, 0], sizes = [2, 32], strides = [1, 1]} : vector<2x128xf32> to vector<2x32xf32>
    %486 = vector.extract_strided_slice %483 {offsets = [0, 32], sizes = [2, 32], strides = [1, 1]} : vector<2x128xf32> to vector<2x32xf32>
    %487 = vector.extract_strided_slice %483 {offsets = [0, 96], sizes = [2, 32], strides = [1, 1]} : vector<2x128xf32> to vector<2x32xf32>
    %488 = vector.extract_strided_slice %484 {offsets = [0, 64], sizes = [2, 32], strides = [1, 1]} : vector<2x128xf32> to vector<2x32xf32>
    %489 = arith.mulf %486, %469 : vector<2x32xf32>
    %490 = arith.mulf %485, %488 : vector<2x32xf32>
    %491 = arith.addf %489, %490 : vector<2x32xf32>
    %492 = math.tanh %491 : vector<2x32xf32>
    %493 = arith.mulf %487, %492 : vector<2x32xf32>
    %c0_130 = arith.constant 0 : index
    %c4_131 = arith.constant 4 : index
    %c0_132 = arith.constant 0 : index
    %494 = vector.load %arg10[%c0_130, %c4_131, %c0_132] : memref<2x8x32xf32, #tpu.memory_space<vmem>>, vector<2x1x32xf32>
    %495 = vector.shape_cast %494 : vector<2x1x32xf32> to vector<2x32xf32>
    %496 = vector.shape_cast %493 : vector<2x32xf32> to vector<2x1x32xf32>
    tpu.vector_store %arg10[%c0_130, %c4_131, %c0_132], %496 {strides = array<i32>} : memref<2x8x32xf32, #tpu.memory_space<vmem>>, vector<2x1x32xf32>,
    %497 = vector.extract_strided_slice %384 {offsets = [0, 5, 0], sizes = [2, 1, 128], strides = [1, 1, 1]} : vector<2x8x128xf32> to vector<2x1x128xf32>
    %498 = vector.shape_cast %497 : vector<2x1x128xf32> to vector<2x128xf32>
    %cst_133 = arith.constant dense<0.000000e+00> : vector<2x128xf32>
    %499 = tpu.matmul %493, %377, %cst_133 {dimension_numbers = #tpu.dot_dimension_numbers<[1], [0], [0], [1], [0, 0, 1, 1], [], []>} : vector<2x32xf32>, vector<32x128xf32>, vector<2x128xf32> -> vector<2x128xf32>
    %500 = arith.addf %498, %499 : vector<2x128xf32>
    %501 = arith.negf %500 : vector<2x128xf32>
    %502 = math.exp %501 : vector<2x128xf32>
    %cst_134 = arith.constant 1.000000e+00 : f32
    %503 = vector.broadcast %cst_134 : f32 to vector<2x128xf32>
    %504 = arith.addf %503, %502 : vector<2x128xf32>
    %505 = arith.divf %503, %504 : vector<2x128xf32>
    %506 = math.tanh %500 : vector<2x128xf32>
    %507 = vector.extract_strided_slice %505 {offsets = [0, 0], sizes = [2, 32], strides = [1, 1]} : vector<2x128xf32> to vector<2x32xf32>
    %508 = vector.extract_strided_slice %505 {offsets = [0, 32], sizes = [2, 32], strides = [1, 1]} : vector<2x128xf32> to vector<2x32xf32>
    %509 = vector.extract_strided_slice %505 {offsets = [0, 96], sizes = [2, 32], strides = [1, 1]} : vector<2x128xf32> to vector<2x32xf32>
    %510 = vector.extract_strided_slice %506 {offsets = [0, 64], sizes = [2, 32], strides = [1, 1]} : vector<2x128xf32> to vector<2x32xf32>
    %511 = arith.mulf %508, %491 : vector<2x32xf32>
    %512 = arith.mulf %507, %510 : vector<2x32xf32>
    %513 = arith.addf %511, %512 : vector<2x32xf32>
    %514 = math.tanh %513 : vector<2x32xf32>
    %515 = arith.mulf %509, %514 : vector<2x32xf32>
    %c0_135 = arith.constant 0 : index
    %c5_136 = arith.constant 5 : index
    %c0_137 = arith.constant 0 : index
    %516 = vector.load %arg10[%c0_135, %c5_136, %c0_137] : memref<2x8x32xf32, #tpu.memory_space<vmem>>, vector<2x1x32xf32>
    %517 = vector.shape_cast %516 : vector<2x1x32xf32> to vector<2x32xf32>
    %518 = vector.shape_cast %515 : vector<2x32xf32> to vector<2x1x32xf32>
    tpu.vector_store %arg10[%c0_135, %c5_136, %c0_137], %518 {strides = array<i32>} : memref<2x8x32xf32, #tpu.memory_space<vmem>>, vector<2x1x32xf32>,
    %519 = vector.extract_strided_slice %384 {offsets = [0, 6, 0], sizes = [2, 1, 128], strides = [1, 1, 1]} : vector<2x8x128xf32> to vector<2x1x128xf32>
    %520 = vector.shape_cast %519 : vector<2x1x128xf32> to vector<2x128xf32>
    %cst_138 = arith.constant dense<0.000000e+00> : vector<2x128xf32>
    %521 = tpu.matmul %515, %377, %cst_138 {dimension_numbers = #tpu.dot_dimension_numbers<[1], [0], [0], [1], [0, 0, 1, 1], [], []>} : vector<2x32xf32>, vector<32x128xf32>, vector<2x128xf32> -> vector<2x128xf32>
    %522 = arith.addf %520, %521 : vector<2x128xf32>
    %523 = arith.negf %522 : vector<2x128xf32>
    %524 = math.exp %523 : vector<2x128xf32>
    %cst_139 = arith.constant 1.000000e+00 : f32
    %525 = vector.broadcast %cst_139 : f32 to vector<2x128xf32>
    %526 = arith.addf %525, %524 : vector<2x128xf32>
    %527 = arith.divf %525, %526 : vector<2x128xf32>
    %528 = math.tanh %522 : vector<2x128xf32>
    %529 = vector.extract_strided_slice %527 {offsets = [0, 0], sizes = [2, 32], strides = [1, 1]} : vector<2x128xf32> to vector<2x32xf32>
    %530 = vector.extract_strided_slice %527 {offsets = [0, 32], sizes = [2, 32], strides = [1, 1]} : vector<2x128xf32> to vector<2x32xf32>
    %531 = vector.extract_strided_slice %527 {offsets = [0, 96], sizes = [2, 32], strides = [1, 1]} : vector<2x128xf32> to vector<2x32xf32>
    %532 = vector.extract_strided_slice %528 {offsets = [0, 64], sizes = [2, 32], strides = [1, 1]} : vector<2x128xf32> to vector<2x32xf32>
    %533 = arith.mulf %530, %513 : vector<2x32xf32>
    %534 = arith.mulf %529, %532 : vector<2x32xf32>
    %535 = arith.addf %533, %534 : vector<2x32xf32>
    %536 = math.tanh %535 : vector<2x32xf32>
    %537 = arith.mulf %531, %536 : vector<2x32xf32>
    %c0_140 = arith.constant 0 : index
    %c6_141 = arith.constant 6 : index
    %c0_142 = arith.constant 0 : index
    %538 = vector.load %arg10[%c0_140, %c6_141, %c0_142] : memref<2x8x32xf32, #tpu.memory_space<vmem>>, vector<2x1x32xf32>
    %539 = vector.shape_cast %538 : vector<2x1x32xf32> to vector<2x32xf32>
    %540 = vector.shape_cast %537 : vector<2x32xf32> to vector<2x1x32xf32>
    tpu.vector_store %arg10[%c0_140, %c6_141, %c0_142], %540 {strides = array<i32>} : memref<2x8x32xf32, #tpu.memory_space<vmem>>, vector<2x1x32xf32>,
    %541 = vector.extract_strided_slice %384 {offsets = [0, 7, 0], sizes = [2, 1, 128], strides = [1, 1, 1]} : vector<2x8x128xf32> to vector<2x1x128xf32>
    %542 = vector.shape_cast %541 : vector<2x1x128xf32> to vector<2x128xf32>
    %cst_143 = arith.constant dense<0.000000e+00> : vector<2x128xf32>
    %543 = tpu.matmul %537, %377, %cst_143 {dimension_numbers = #tpu.dot_dimension_numbers<[1], [0], [0], [1], [0, 0, 1, 1], [], []>} : vector<2x32xf32>, vector<32x128xf32>, vector<2x128xf32> -> vector<2x128xf32>
    %544 = arith.addf %542, %543 : vector<2x128xf32>
    %545 = arith.negf %544 : vector<2x128xf32>
    %546 = math.exp %545 : vector<2x128xf32>
    %cst_144 = arith.constant 1.000000e+00 : f32
    %547 = vector.broadcast %cst_144 : f32 to vector<2x128xf32>
    %548 = arith.addf %547, %546 : vector<2x128xf32>
    %549 = arith.divf %547, %548 : vector<2x128xf32>
    %550 = math.tanh %544 : vector<2x128xf32>
    %551 = vector.extract_strided_slice %549 {offsets = [0, 0], sizes = [2, 32], strides = [1, 1]} : vector<2x128xf32> to vector<2x32xf32>
    %552 = vector.extract_strided_slice %549 {offsets = [0, 32], sizes = [2, 32], strides = [1, 1]} : vector<2x128xf32> to vector<2x32xf32>
    %553 = vector.extract_strided_slice %549 {offsets = [0, 96], sizes = [2, 32], strides = [1, 1]} : vector<2x128xf32> to vector<2x32xf32>
    %554 = vector.extract_strided_slice %550 {offsets = [0, 64], sizes = [2, 32], strides = [1, 1]} : vector<2x128xf32> to vector<2x32xf32>
    %555 = arith.mulf %552, %535 : vector<2x32xf32>
    %556 = arith.mulf %551, %554 : vector<2x32xf32>
    %557 = arith.addf %555, %556 : vector<2x32xf32>
    %558 = math.tanh %557 : vector<2x32xf32>
    %559 = arith.mulf %553, %558 : vector<2x32xf32>
    %c0_145 = arith.constant 0 : index
    %c7_146 = arith.constant 7 : index
    %c0_147 = arith.constant 0 : index
    %560 = vector.load %arg10[%c0_145, %c7_146, %c0_147] : memref<2x8x32xf32, #tpu.memory_space<vmem>>, vector<2x1x32xf32>
    %561 = vector.shape_cast %560 : vector<2x1x32xf32> to vector<2x32xf32>
    %562 = vector.shape_cast %559 : vector<2x32xf32> to vector<2x1x32xf32>
    tpu.vector_store %arg10[%c0_145, %c7_146, %c0_147], %562 {strides = array<i32>} : memref<2x8x32xf32, #tpu.memory_space<vmem>>, vector<2x1x32xf32>,
    %c0_148 = arith.constant 0 : index
    %c0_149 = arith.constant 0 : index
    %563 = vector.load %arg11[%c0_148, %c0_149] : memref<2x32xf32, #tpu.memory_space<vmem>>, vector<2x32xf32>
    tpu.vector_store %arg11[%c0_148, %c0_149], %559 {strides = array<i32>} : memref<2x32xf32, #tpu.memory_space<vmem>>, vector<2x32xf32>,
    return
  }
}

</mosaic_0001>

<llo_original>
// kernel: lstm_encoder_forward.1
$region0: #{lstm_encoder_forward.1}
  #allocation0 [shape = 'u32[]', space=smem, size = 0x4, offset = 0x4, fixed_abs, tag = 'smem constant byte address 0x4 - core index']
  #allocation1 [shape = 'u32[72,128]{1,0:T(1,128)}', space=vmem, size = 0x9000, scoped, tag = 'internal scratch']
  #allocation2 [shape = 'f32[2,8,32]{2,1,0:T(8,128)}', space=vmem, size = 0x2000, scoped, tag = 'scratch operand']
  %s0 = inlined_call_operand.hbm [shape: f32[2,8,16], index: 0, kind: input, shape index: {}]
  %s1 = inlined_call_operand.hbm [shape: f32[16,128], index: 1, kind: input, shape index: {}]
  %s2 = inlined_call_operand.hbm [shape: f32[32,128], index: 2, kind: input, shape index: {}]
  %s3 = inlined_call_operand.vmem [shape: f32[1,128], index: 3, kind: input, shape index: {}]
  %s4 = inlined_call_operand.hbm [shape: f32[32,128], index: 4, kind: input, shape index: {}]
  %s5 = inlined_call_operand.hbm [shape: f32[32,128], index: 5, kind: input, shape index: {}]
  %s6 = inlined_call_operand.vmem [shape: f32[1,128], index: 6, kind: input, shape index: {}]
  %s7 = inlined_call_operand.hbm [shape: f32[32,128], index: 7, kind: input, shape index: {}]
  %s8 = inlined_call_operand.hbm [shape: f32[32,128], index: 8, kind: input, shape index: {}]
  %s9 = inlined_call_operand.vmem [shape: f32[1,128], index: 9, kind: input, shape index: {}]
  %s10 = inlined_call_operand.hbm [shape: f32[2,8,32], index: 10, kind: output, shape index: {0}]
  %s11 = inlined_call_operand.hbm [shape: f32[2,32], index: 11, kind: output, shape index: {1}]
  %12 = xla_tuple %s10, %s11
  %s13 = sld [smem:[#allocation0]]
  $region86: #{lstm_encoder_forward.1} parent=0
    _
  %s15 = ssub.s32 1, %s13
  %s16 = scalar_select 0, %s15, %s13
  $region1: #{lstm_encoder_forward.1} parent=0
    #allocation3 [shape = 'u8[8192]{0}', space=vmem, size = 0x2000, scoped, tag = 'input window, operand 0, single buffered']
    #allocation4 [shape = 's32[1]{0}', space=sflag, size = 0x4, scoped, tag = 'scoped memory for lstm_encoder_forward.1']
    #allocation5 [shape = 's32[1]{0}', space=sflag, size = 0x4, scoped, tag = 'scoped memory for lstm_encoder_forward.1']
    #allocation6 [shape = 'u8[8192]{0}', space=vmem, size = 0x2000, scoped, tag = 'input window, operand 1, single buffered']
    #allocation7 [shape = 's32[1]{0}', space=sflag, size = 0x4, scoped, tag = 'scoped memory for lstm_encoder_forward.1']
    #allocation8 [shape = 'u8[16384]{0}', space=vmem, size = 0x4000, scoped, tag = 'input window, operand 2, single buffered']
    #allocation9 [shape = 'u8[16384]{0}', space=vmem, size = 0x4000, scoped, tag = 'input window, operand 4, single buffered']
    #allocation10 [shape = 's32[1]{0}', space=sflag, size = 0x4, scoped, tag = 'scoped memory for lstm_encoder_forward.1']
    #allocation11 [shape = 'u8[16384]{0}', space=vmem, size = 0x4000, scoped, tag = 'input window, operand 5, single buffered']
    #allocation12 [shape = 'u8[16384]{0}', space=vmem, size = 0x4000, scoped, tag = 'input window, operand 7, single buffered']
    #allocation13 [shape = 's32[1]{0}', space=sflag, size = 0x4, scoped, tag = 'scoped memory for lstm_encoder_forward.1']
    #allocation14 [shape = 'u8[16384]{0}', space=vmem, size = 0x4000, scoped, tag = 'input window, operand 8, single buffered']
    #allocation15 [shape = 'u8[8192]{0}', space=vmem, size = 0x2000, scoped, tag = 'output window, operand 0, single buffered']
    #allocation16 [shape = 'u8[1024]{0}', space=vmem, size = 0x400, scoped, tag = 'output window, operand 1, single buffered']
    #allocation17 [shape = 's32[1]{0}', space=sflag, size = 0x4, scoped, tag = 'scoped memory for lstm_encoder_forward.1']
    %17 = vsyncpa [#allocation4], 0
    %18 = vsyncpa [#allocation7], 0
    %19 = vsyncpa [#allocation10], 0
    %20 = vsyncpa [#allocation13], 0
    %21 = vsyncpa [#allocation5], 0
    %22 = vsyncpa [#allocation17], 0
    // Predicated region
    $region2: #{lstm_encoder_forward.1} parent=1 // pred_check
      _
    $region3: #{lstm_encoder_forward.1} parent=1 // pred_check_branch
      %24 = sbr.rel (0) target = $region5
    $region4: #{lstm_encoder_forward.1} parent=1 // pred_region
      %26 = vsyncadd [#allocation4], 0
      %s27 = sshll.u32 %s0, 4
      %s28 = int_to_ptr.hbm [resolvable:$true] %s27
      %s29 = sshll.u32 [#allocation3], 4
      %s30 = int_to_ptr.vmem [resolvable:$true] %s29
      %35 = dma.hbm_to_vmem [thread:$0]  %s28, 256, %s30, [#allocation4], 128, 128, 8
    $region5: #{lstm_encoder_forward.1} parent=1 // pred_fallthru
      _
    // Predicated region
    $region6: #{lstm_encoder_forward.1} parent=1 // pred_check
      _
    $region7: #{lstm_encoder_forward.1} parent=1 // pred_check_branch
      %37 = sbr.rel (0) target = $region9
    $region8: #{lstm_encoder_forward.1} parent=1 // pred_region
      %39 = vsyncadd [#allocation7], 0
      %s40 = sshll.u32 %s1, 4
      %s41 = int_to_ptr.hbm [resolvable:$true] %s40
      %s42 = sshll.u32 [#allocation6], 4
      %s43 = int_to_ptr.vmem [resolvable:$true] %s42
      %48 = dma.hbm_to_vmem [thread:$0]  %s41, 256, %s43, [#allocation7], 128, 128, 8
    $region9: #{lstm_encoder_forward.1} parent=1 // pred_fallthru
      _
    // Predicated region
    $region10: #{lstm_encoder_forward.1} parent=1 // pred_check
      _
    $region11: #{lstm_encoder_forward.1} parent=1 // pred_check_branch
      %50 = sbr.rel (0) target = $region13
    $region12: #{lstm_encoder_forward.1} parent=1 // pred_region
      %52 = vsyncadd [#allocation7], 0
      %s53 = sshll.u32 %s2, 4
      %s54 = int_to_ptr.hbm [resolvable:$true] %s53
      %s55 = sshll.u32 [#allocation8], 4
      %s56 = int_to_ptr.vmem [resolvable:$true] %s55
      %61 = dma.hbm_to_vmem [thread:$0]  %s54, 512, %s56, [#allocation7], 128, 128, 8
    $region13: #{lstm_encoder_forward.1} parent=1 // pred_fallthru
      _
    // Predicated region
    $region14: #{lstm_encoder_forward.1} parent=1 // pred_check
      _
    $region15: #{lstm_encoder_forward.1} parent=1 // pred_check_branch
      %63 = sbr.rel (0) target = $region17
    $region16: #{lstm_encoder_forward.1} parent=1 // pred_region
      _
    $region17: #{lstm_encoder_forward.1} parent=1 // pred_fallthru
      _
    // Predicated region
    $region18: #{lstm_encoder_forward.1} parent=1 // pred_check
      _
    $region19: #{lstm_encoder_forward.1} parent=1 // pred_check_branch
      %65 = sbr.rel (0) target = $region21
    $region20: #{lstm_encoder_forward.1} parent=1 // pred_region
      %67 = vsyncadd [#allocation10], 0
      %s68 = sshll.u32 %s4, 4
      %s69 = int_to_ptr.hbm [resolvable:$true] %s68
      %s70 = sshll.u32 [#allocation9], 4
      %s71 = int_to_ptr.vmem [resolvable:$true] %s70
      %76 = dma.hbm_to_vmem [thread:$0]  %s69, 512, %s71, [#allocation10], 128, 128, 8
    $region21: #{lstm_encoder_forward.1} parent=1 // pred_fallthru
      _
    // Predicated region
    $region22: #{lstm_encoder_forward.1} parent=1 // pred_check
      _
    $region23: #{lstm_encoder_forward.1} parent=1 // pred_check_branch
      %78 = sbr.rel (0) target = $region25
    $region24: #{lstm_encoder_forward.1} parent=1 // pred_region
      %80 = vsyncadd [#allocation10], 0
      %s81 = sshll.u32 %s5, 4
      %s82 = int_to_ptr.hbm [resolvable:$true] %s81
      %s83 = sshll.u32 [#allocation11], 4
      %s84 = int_to_ptr.vmem [resolvable:$true] %s83
      %89 = dma.hbm_to_vmem [thread:$0]  %s82, 512, %s84, [#allocation10], 128, 128, 8
    $region25: #{lstm_encoder_forward.1} parent=1 // pred_fallthru
      _
    // Predicated region
    $region26: #{lstm_encoder_forward.1} parent=1 // pred_check
      _
    $region27: #{lstm_encoder_forward.1} parent=1 // pred_check_branch
      %91 = sbr.rel (0) target = $region29
    $region28: #{lstm_encoder_forward.1} parent=1 // pred_region
      _
    $region29: #{lstm_encoder_forward.1} parent=1 // pred_fallthru
      _
    // Predicated region
    $region30: #{lstm_encoder_forward.1} parent=1 // pred_check
      _
    $region31: #{lstm_encoder_forward.1} parent=1 // pred_check_branch
      %93 = sbr.rel (0) target = $region33
    $region32: #{lstm_encoder_forward.1} parent=1 // pred_region
      %95 = vsyncadd [#allocation13], 0
      %s96 = sshll.u32 %s7, 4
      %s97 = int_to_ptr.hbm [resolvable:$true] %s96
      %s98 = sshll.u32 [#allocation12], 4
      %s99 = int_to_ptr.vmem [resolvable:$true] %s98
      %104 = dma.hbm_to_vmem [thread:$0]  %s97, 512, %s99, [#allocation13], 128, 128, 8
    $region33: #{lstm_encoder_forward.1} parent=1 // pred_fallthru
      _
    // Predicated region
    $region34: #{lstm_encoder_forward.1} parent=1 // pred_check
      _
    $region35: #{lstm_encoder_forward.1} parent=1 // pred_check_branch
      %106 = sbr.rel (0) target = $region37
    $region36: #{lstm_encoder_forward.1} parent=1 // pred_region
      %108 = vsyncadd [#allocation13], 0
      %s109 = sshll.u32 %s8, 4
      %s110 = int_to_ptr.hbm [resolvable:$true] %s109
      %s111 = sshll.u32 [#allocation14], 4
      %s112 = int_to_ptr.vmem [resolvable:$true] %s111
      %117 = dma.hbm_to_vmem [thread:$0]  %s110, 512, %s112, [#allocation13], 128, 128, 8
    $region37: #{lstm_encoder_forward.1} parent=1 // pred_fallthru
      _
    // Predicated region
    $region38: #{lstm_encoder_forward.1} parent=1 // pred_check
      _
    $region39: #{lstm_encoder_forward.1} parent=1 // pred_check_branch
      %119 = sbr.rel (0) target = $region41
    $region40: #{lstm_encoder_forward.1} parent=1 // pred_region
      _
    $region41: #{lstm_encoder_forward.1} parent=1 // pred_fallthru
      _
    // Predicated region
    $region42: #{lstm_encoder_forward.1} parent=1 // pred_check
      _
    $region43: #{lstm_encoder_forward.1} parent=1 // pred_check_branch
      %121 = sbr.rel (0) target = $region45
    $region44: #{lstm_encoder_forward.1} parent=1 // pred_region
      %123 = dma.done [#allocation4], 256
    $region45: #{lstm_encoder_forward.1} parent=1 // pred_fallthru
      _
    // Predicated region
    $region46: #{lstm_encoder_forward.1} parent=1 // pred_check
      _
    $region47: #{lstm_encoder_forward.1} parent=1 // pred_check_branch
      %125 = sbr.rel (0) target = $region49
    $region48: #{lstm_encoder_forward.1} parent=1 // pred_region
      %127 = dma.done [#allocation7], 256
    $region49: #{lstm_encoder_forward.1} parent=1 // pred_fallthru
      _
    // Predicated region
    $region50: #{lstm_encoder_forward.1} parent=1 // pred_check
      _
    $region51: #{lstm_encoder_forward.1} parent=1 // pred_check_branch
      %129 = sbr.rel (0) target = $region53
    $region52: #{lstm_encoder_forward.1} parent=1 // pred_region
      %131 = dma.done [#allocation7], 512
    $region53: #{lstm_encoder_forward.1} parent=1 // pred_fallthru
      _
    // Predicated region
    $region54: #{lstm_encoder_forward.1} parent=1 // pred_check
      _
    $region55: #{lstm_encoder_forward.1} parent=1 // pred_check_branch
      %133 = sbr.rel (0) target = $region57
    $region56: #{lstm_encoder_forward.1} parent=1 // pred_region
      %135 = dma.done [#allocation10], 512
    $region57: #{lstm_encoder_forward.1} parent=1 // pred_fallthru
      _
    // Predicated region
    $region58: #{lstm_encoder_forward.1} parent=1 // pred_check
      _
    $region59: #{lstm_encoder_forward.1} parent=1 // pred_check_branch
      %137 = sbr.rel (0) target = $region61
    $region60: #{lstm_encoder_forward.1} parent=1 // pred_region
      %139 = dma.done [#allocation10], 512
    $region61: #{lstm_encoder_forward.1} parent=1 // pred_fallthru
      _
    // Predicated region
    $region62: #{lstm_encoder_forward.1} parent=1 // pred_check
      _
    $region63: #{lstm_encoder_forward.1} parent=1 // pred_check_branch
      %141 = sbr.rel (0) target = $region65
    $region64: #{lstm_encoder_forward.1} parent=1 // pred_region
      %143 = dma.done [#allocation13], 512
    $region65: #{lstm_encoder_forward.1} parent=1 // pred_fallthru
      _
    // Predicated region
    $region66: #{lstm_encoder_forward.1} parent=1 // pred_check
      _
    $region67: #{lstm_encoder_forward.1} parent=1 // pred_check_branch
      %145 = sbr.rel (0) target = $region69
    $region68: #{lstm_encoder_forward.1} parent=1 // pred_region
      %147 = dma.done [#allocation13], 512
    $region69: #{lstm_encoder_forward.1} parent=1 // pred_fallthru
      _
    %v148 = vld [vmem:[#allocation3] sm:$0xff]
    %v149 = vld [vmem:[#allocation3 + $0x8] sm:$0xff]
    %v150 = vld [vmem:[#allocation8] sm:$0xff]
    %v151 = vld [vmem:[#allocation8 + $0x8] sm:$0xff]
    %v152 = vld [vmem:[#allocation8 + $0x10] sm:$0xff]
    %v153 = vld [vmem:[#allocation8 + $0x18] sm:$0xff]
    %v154 = vld [vmem:[#allocation6] sm:$0xff]
    %v155 = vld [vmem:[#allocation6 + $0x8] sm:$0xff]
    %v156 = vld [vmem:[%s3] sm:$0x1]
    %v158 = vperm.slane %v156, 0
    %vm160 = vcmask 130048
    %v162 = vsel %vm160, %v148, 0
    %v165 = vsel %vm160, %v149, 0
    %167 = vmatpush.msra.mxu0 0.0
    %168 = vmatpush.msra.mxu0 0.0
    %169 = vmatpush.msra.mxu0 0.0
    %170 = vmatpush.msra.mxu0 0.0
    %171 = vmatpush.msra.mxu0 0.0
    %172 = vmatpush.msra.mxu0 0.0
    %173 = vmatpush.msra.mxu0 0.0
    %174 = vmatpush.msra.mxu0 0.0
    %175 = vmatpush.msra.mxu0 0.0
    %176 = vmatpush.msra.mxu0 0.0
    %177 = vmatpush.msra.mxu0 0.0
    %178 = vmatpush.msra.mxu0 0.0
    %179 = vmatpush.msra.mxu0 0.0
    %180 = vmatpush.msra.mxu0 0.0
    %181 = vmatpush.msra.mxu0 %v155
    %182 = vmatpush.msra.mxu0 %v154
    %183 = vmatmul.f32.gmra.mxu0 %v162
    %v184 = vpop.f32.mrf.mxu0
    %v185 = vadd.f32 %v158, %v184
    %186 = vmatmul.f32.gmra.mxu0 %v165
    %v187 = vpop.f32.mrf.mxu0
    %v188 = vadd.f32 %v158, %v187
    %189 = vdwg.mxu0
    %vm190 = vcmask 261120
    %v192 = vsel %vm190, 0.0, 0
    %194 = vmatpush.msra.mxu0 0.0
    %195 = vmatpush.msra.mxu0 0.0
    %196 = vmatpush.msra.mxu0 0.0
    %197 = vmatpush.msra.mxu0 0.0
    %198 = vmatpush.msra.mxu0 0.0
    %199 = vmatpush.msra.mxu0 0.0
    %200 = vmatpush.msra.mxu0 0.0
    %201 = vmatpush.msra.mxu0 0.0
    %202 = vmatpush.msra.mxu0 0.0
    %203 = vmatpush.msra.mxu0 0.0
    %204 = vmatpush.msra.mxu0 0.0
    %205 = vmatpush.msra.mxu0 0.0
    %206 = vmatpush.msra.mxu0 %v153
    %207 = vmatpush.msra.mxu0 %v152
    %208 = vmatpush.msra.mxu0 %v151
    %209 = vmatpush.msra.mxu0 %v150
    %210 = vmatmul.f32.gmra.mxu0 %v192
    %v211 = vpop.f32.mrf.mxu0
    %v212 = vadd.f32 0.0, %v211
    %213 = vdwg.mxu0
    %v215 = vrot.slane %v212, 1
    %v218 = vadd.f32 %v185, %v212
    %v219 = vadd.f32 %v188, %v215
    %v220 = vxor.u32 %v218, 2147483648
    %v221 = vxor.u32 %v219, 2147483648
    %v222 = vmul.f32 %v220, 1.442695
    %v223 = vpow.pop %v222
    %v224 = vmul.f32 %v221, 1.442695
    %v225 = vpow.pop %v224
    %v226 = vadd.f32 %v223, 1.0
    %v227 = vadd.f32 %v225, 1.0
    %v228 = vrcp.pop %v226
    %v229 = vmul.f32 %v226, %v228
    %v230 = vsub.f32 1.0, %v229
    %v231 = vmul.f32 %v228, %v230
    %v232 = vadd.f32 %v228, %v231
    %vm233 = vweird.f32 %v226
    %vm234 = vweird.f32 %v228
    %vm235 = vmor %vm233, %vm234
    %v236 = vsel %vm235, %v228, %v232
    %v237 = vand.u32 2147483647, %v226
    %vm238 = vcmp.eq.f32.partialorder %v237, 8.507059e+37
    %v239 = vand.u32 %v226, 2147483648
    %v240 = vor.u32 1.1754944e-38, %v239
    %v241 = vsel %vm238, %v240, %v236
    %v242 = vmul.f32 1.0, %v241
    %v243 = vrcp.pop %v227
    %v244 = vmul.f32 %v227, %v243
    %v245 = vsub.f32 1.0, %v244
    %v246 = vmul.f32 %v243, %v245
    %v247 = vadd.f32 %v243, %v246
    %vm248 = vweird.f32 %v227
    %vm249 = vweird.f32 %v243
    %vm250 = vmor %vm248, %vm249
    %v251 = vsel %vm250, %v243, %v247
    %v252 = vand.u32 2147483647, %v227
    %vm253 = vcmp.eq.f32.partialorder %v252, 8.507059e+37
    %v254 = vand.u32 %v227, 2147483648
    %v255 = vor.u32 1.1754944e-38, %v254
    %v256 = vsel %vm253, %v255, %v251
    %v257 = vmul.f32 1.0, %v256
    %v258 = vtanh.pop %v218
    %v259 = vtanh.pop %v219
    %v260 = vmul.f32 %v242, 0.0
    %v261 = vmul.f32 %v257, 0.0
    %264 = vrot.lane.b32.xlu0 %v258, 64
    %v265 = vpop.permute.xlu0 %264
    %266 = vrot.lane.b32.xlu0 %v259, 64
    %v267 = vpop.permute.xlu0 %266
    %v270 = vmul.f32 %v242, %v265
    %v271 = vmul.f32 %v257, %v267
    %274 = vrot.lane.b32.xlu0 %v270, 32
    %v275 = vpop.permute.xlu0 %274
    %276 = vrot.lane.b32.xlu0 %v271, 32
    %v277 = vpop.permute.xlu0 %276
    %v280 = vadd.f32 %v260, %v275
    %v281 = vadd.f32 %v261, %v277
    %v282 = vtanh.pop %v280
    %v283 = vtanh.pop %v281
    %286 = vrot.lane.b32.xlu0 %v282, 64
    %v287 = vpop.permute.xlu0 %286
    %288 = vrot.lane.b32.xlu0 %v283, 64
    %v289 = vpop.permute.xlu0 %288
    %v292 = vmul.f32 %v242, %v287
    %v293 = vmul.f32 %v257, %v289
    %296 = vrot.lane.b32.xlu0 %v292, 32
    %v297 = vpop.permute.xlu0 %296
    %298 = vrot.lane.b32.xlu0 %v293, 32
    %v299 = vpop.permute.xlu0 %298
    %vm302 = vcmask 253952
    %303 = vst.msk [vmem:[#allocation2] sm:$0x1] %vm302, %v297
    %304 = vst.msk [vmem:[#allocation2 + $0x8] sm:$0x1] %vm302, %v299
    %v305 = vrot.slane %v293, 7
    %vm306 = vcmask 1041409
    %v307 = vsel %vm306, %v305, %v292
    %308 = vrot.lane.b32.xlu0 %v307, 32
    %v309 = vpop.permute.xlu0 %308
    %v310 = vsel %vm190, %v309, 0
    %312 = vmatpush.msra.mxu0 0.0
    %313 = vmatpush.msra.mxu0 0.0
    %314 = vmatpush.msra.mxu0 0.0
    %315 = vmatpush.msra.mxu0 0.0
    %316 = vmatpush.msra.mxu0 0.0
    %317 = vmatpush.msra.mxu0 0.0
    %318 = vmatpush.msra.mxu0 0.0
    %319 = vmatpush.msra.mxu0 0.0
    %320 = vmatpush.msra.mxu0 0.0
    %321 = vmatpush.msra.mxu0 0.0
    %322 = vmatpush.msra.mxu0 0.0
    %323 = vmatpush.msra.mxu0 0.0
    %324 = vmatpush.msra.mxu0 %v153
    %325 = vmatpush.msra.mxu0 %v152
    %326 = vmatpush.msra.mxu0 %v151
    %327 = vmatpush.msra.mxu0 %v150
    %328 = vmatmul.f32.gmra.mxu0 %v310
    %v329 = vpop.f32.mrf.mxu0
    %v330 = vadd.f32 0.0, %v329
    %331 = vdwg.mxu0
    %v333 = vrot.slane %v330, 7
    %v336 = vadd.f32 %v185, %v333
    %v337 = vadd.f32 %v188, %v330
    %v338 = vxor.u32 %v336, 2147483648
    %v339 = vxor.u32 %v337, 2147483648
    %v340 = vmul.f32 %v338, 1.442695
    %v341 = vpow.pop %v340
    %v342 = vmul.f32 %v339, 1.442695
    %v343 = vpow.pop %v342
    %v344 = vadd.f32 %v341, 1.0
    %v345 = vadd.f32 %v343, 1.0
    %v346 = vrcp.pop %v344
    %v347 = vmul.f32 %v344, %v346
    %v348 = vsub.f32 1.0, %v347
    %v349 = vmul.f32 %v346, %v348
    %v350 = vadd.f32 %v346, %v349
    %vm351 = vweird.f32 %v344
    %vm352 = vweird.f32 %v346
    %vm353 = vmor %vm351, %vm352
    %v354 = vsel %vm353, %v346, %v350
    %v355 = vand.u32 2147483647, %v344
    %vm356 = vcmp.eq.f32.partialorder %v355, 8.507059e+37
    %v357 = vand.u32 %v344, 2147483648
    %v358 = vor.u32 1.1754944e-38, %v357
    %v359 = vsel %vm356, %v358, %v354
    %v360 = vmul.f32 1.0, %v359
    %v361 = vrcp.pop %v345
    %v362 = vmul.f32 %v345, %v361
    %v363 = vsub.f32 1.0, %v362
    %v364 = vmul.f32 %v361, %v363
    %v365 = vadd.f32 %v361, %v364
    %vm366 = vweird.f32 %v345
    %vm367 = vweird.f32 %v361
    %vm368 = vmor %vm366, %vm367
    %v369 = vsel %vm368, %v361, %v365
    %v370 = vand.u32 2147483647, %v345
    %vm371 = vcmp.eq.f32.partialorder %v370, 8.507059e+37
    %v372 = vand.u32 %v345, 2147483648
    %v373 = vor.u32 1.1754944e-38, %v372
    %v374 = vsel %vm371, %v373, %v369
    %v375 = vmul.f32 1.0, %v374
    %v376 = vtanh.pop %v336
    %v377 = vtanh.pop %v337
    %v380 = vrot.slane %v280, 7
    %v381 = vrot.slane %v281, 7
    %v384 = vmul.f32 %v360, %v380
    %v385 = vmul.f32 %v375, %v381
    %388 = vrot.lane.b32.xlu0 %v376, 64
    %v389 = vpop.permute.xlu0 %388
    %390 = vrot.lane.b32.xlu0 %v377, 64
    %v391 = vpop.permute.xlu0 %390
    %v394 = vmul.f32 %v360, %v389
    %v395 = vmul.f32 %v375, %v391
    %398 = vrot.lane.b32.xlu0 %v394, 32
    %v399 = vpop.permute.xlu0 %398
    %400 = vrot.lane.b32.xlu0 %v395, 32
    %v401 = vpop.permute.xlu0 %400
    %v404 = vadd.f32 %v384, %v399
    %v405 = vadd.f32 %v385, %v401
    %v406 = vtanh.pop %v404
    %v407 = vtanh.pop %v405
    %410 = vrot.lane.b32.xlu0 %v406, 64
    %v411 = vpop.permute.xlu0 %410
    %412 = vrot.lane.b32.xlu0 %v407, 64
    %v413 = vpop.permute.xlu0 %412
    %v416 = vmul.f32 %v360, %v411
    %v417 = vmul.f32 %v375, %v413
    %420 = vrot.lane.b32.xlu0 %v416, 32
    %v421 = vpop.permute.xlu0 %420
    %422 = vrot.lane.b32.xlu0 %v417, 32
    %v423 = vpop.permute.xlu0 %422
    %vm426 = vcmask 254977
    %427 = vst.msk [vmem:[#allocation2] sm:$0x2] %vm426, %v421
    %428 = vst.msk [vmem:[#allocation2 + $0x8] sm:$0x2] %vm426, %v423
    %v429 = vrot.slane %v416, 1
    %v430 = vsel %vm306, %v417, %v429
    %431 = vrot.lane.b32.xlu0 %v430, 32
    %v432 = vpop.permute.xlu0 %431
    %v433 = vsel %vm190, %v432, 0
    %435 = vmatpush.msra.mxu0 0.0
    %436 = vmatpush.msra.mxu0 0.0
    %437 = vmatpush.msra.mxu0 0.0
    %438 = vmatpush.msra.mxu0 0.0
    %439 = vmatpush.msra.mxu0 0.0
    %440 = vmatpush.msra.mxu0 0.0
    %441 = vmatpush.msra.mxu0 0.0
    %442 = vmatpush.msra.mxu0 0.0
    %443 = vmatpush.msra.mxu0 0.0
    %444 = vmatpush.msra.mxu0 0.0
    %445 = vmatpush.msra.mxu0 0.0
    %446 = vmatpush.msra.mxu0 0.0
    %447 = vmatpush.msra.mxu0 %v153
    %448 = vmatpush.msra.mxu0 %v152
    %449 = vmatpush.msra.mxu0 %v151
    %450 = vmatpush.msra.mxu0 %v150
    %451 = vmatmul.f32.gmra.mxu0 %v433
    %v452 = vpop.f32.mrf.mxu0
    %v453 = vadd.f32 0.0, %v452
    %454 = vdwg.mxu0
    %v456 = vrot.slane %v453, 6
    %v457 = vrot.slane %v453, 7
    %v460 = vadd.f32 %v185, %v456
    %v461 = vadd.f32 %v188, %v457
    %v462 = vxor.u32 %v460, 2147483648
    %v463 = vxor.u32 %v461, 2147483648
    %v464 = vmul.f32 %v462, 1.442695
    %v465 = vpow.pop %v464
    %v466 = vmul.f32 %v463, 1.442695
    %v467 = vpow.pop %v466
    %v468 = vadd.f32 %v465, 1.0
    %v469 = vadd.f32 %v467, 1.0
    %v470 = vrcp.pop %v468
    %v471 = vmul.f32 %v468, %v470
    %v472 = vsub.f32 1.0, %v471
    %v473 = vmul.f32 %v470, %v472
    %v474 = vadd.f32 %v470, %v473
    %vm475 = vweird.f32 %v468
    %vm476 = vweird.f32 %v470
    %vm477 = vmor %vm475, %vm476
    %v478 = vsel %vm477, %v470, %v474
    %v479 = vand.u32 2147483647, %v468
    %vm480 = vcmp.eq.f32.partialorder %v479, 8.507059e+37
    %v481 = vand.u32 %v468, 2147483648
    %v482 = vor.u32 1.1754944e-38, %v481
    %v483 = vsel %vm480, %v482, %v478
    %v484 = vmul.f32 1.0, %v483
    %v485 = vrcp.pop %v469
    %v486 = vmul.f32 %v469, %v485
    %v487 = vsub.f32 1.0, %v486
    %v488 = vmul.f32 %v485, %v487
    %v489 = vadd.f32 %v485, %v488
    %vm490 = vweird.f32 %v469
    %vm491 = vweird.f32 %v485
    %vm492 = vmor %vm490, %vm491
    %v493 = vsel %vm492, %v485, %v489
    %v494 = vand.u32 2147483647, %v469
    %vm495 = vcmp.eq.f32.partialorder %v494, 8.507059e+37
    %v496 = vand.u32 %v469, 2147483648
    %v497 = vor.u32 1.1754944e-38, %v496
    %v498 = vsel %vm495, %v497, %v493
    %v499 = vmul.f32 1.0, %v498
    %v500 = vtanh.pop %v460
    %v501 = vtanh.pop %v461
    %v504 = vrot.slane %v404, 7
    %v505 = vrot.slane %v405, 7
    %v508 = vmul.f32 %v484, %v504
    %v509 = vmul.f32 %v499, %v505
    %512 = vrot.lane.b32.xlu0 %v500, 64
    %v513 = vpop.permute.xlu0 %512
    %514 = vrot.lane.b32.xlu0 %v501, 64
    %v515 = vpop.permute.xlu0 %514
    %v518 = vmul.f32 %v484, %v513
    %v519 = vmul.f32 %v499, %v515
    %522 = vrot.lane.b32.xlu0 %v518, 32
    %v523 = vpop.permute.xlu0 %522
    %524 = vrot.lane.b32.xlu0 %v519, 32
    %v525 = vpop.permute.xlu0 %524
    %v528 = vadd.f32 %v508, %v523
    %v529 = vadd.f32 %v509, %v525
    %v530 = vtanh.pop %v528
    %v531 = vtanh.pop %v529
    %534 = vrot.lane.b32.xlu0 %v530, 64
    %v535 = vpop.permute.xlu0 %534
    %536 = vrot.lane.b32.xlu0 %v531, 64
    %v537 = vpop.permute.xlu0 %536
    %v540 = vmul.f32 %v484, %v535
    %v541 = vmul.f32 %v499, %v537
    %544 = vrot.lane.b32.xlu0 %v540, 32
    %v545 = vpop.permute.xlu0 %544
    %546 = vrot.lane.b32.xlu0 %v541, 32
    %v547 = vpop.permute.xlu0 %546
    %vm550 = vcmask 256002
    %551 = vst.msk [vmem:[#allocation2] sm:$0x4] %vm550, %v545
    %552 = vst.msk [vmem:[#allocation2 + $0x8] sm:$0x4] %vm550, %v547
    %v553 = vrot.slane %v540, 2
    %v554 = vrot.slane %v541, 1
    %v555 = vsel %vm306, %v554, %v553
    %556 = vrot.lane.b32.xlu0 %v555, 32
    %v557 = vpop.permute.xlu0 %556
    %v558 = vsel %vm190, %v557, 0
    %560 = vmatpush.msra.mxu0 0.0
    %561 = vmatpush.msra.mxu0 0.0
    %562 = vmatpush.msra.mxu0 0.0
    %563 = vmatpush.msra.mxu0 0.0
    %564 = vmatpush.msra.mxu0 0.0
    %565 = vmatpush.msra.mxu0 0.0
    %566 = vmatpush.msra.mxu0 0.0
    %567 = vmatpush.msra.mxu0 0.0
    %568 = vmatpush.msra.mxu0 0.0
    %569 = vmatpush.msra.mxu0 0.0
    %570 = vmatpush.msra.mxu0 0.0
    %571 = vmatpush.msra.mxu0 0.0
    %572 = vmatpush.msra.mxu0 %v153
    %573 = vmatpush.msra.mxu0 %v152
    %574 = vmatpush.msra.mxu0 %v151
    %575 = vmatpush.msra.mxu0 %v150
    %576 = vmatmul.f32.gmra.mxu0 %v558
    %v577 = vpop.f32.mrf.mxu0
    %v578 = vadd.f32 0.0, %v577
    %579 = vdwg.mxu0
    %v581 = vrot.slane %v578, 5
    %v582 = vrot.slane %v578, 6
    %v585 = vadd.f32 %v185, %v581
    %v586 = vadd.f32 %v188, %v582
    %v587 = vxor.u32 %v585, 2147483648
    %v588 = vxor.u32 %v586, 2147483648
    %v589 = vmul.f32 %v587, 1.442695
    %v590 = vpow.pop %v589
    %v591 = vmul.f32 %v588, 1.442695
    %v592 = vpow.pop %v591
    %v593 = vadd.f32 %v590, 1.0
    %v594 = vadd.f32 %v592, 1.0
    %v595 = vrcp.pop %v593
    %v596 = vmul.f32 %v593, %v595
    %v597 = vsub.f32 1.0, %v596
    %v598 = vmul.f32 %v595, %v597
    %v599 = vadd.f32 %v595, %v598
    %vm600 = vweird.f32 %v593
    %vm601 = vweird.f32 %v595
    %vm602 = vmor %vm600, %vm601
    %v603 = vsel %vm602, %v595, %v599
    %v604 = vand.u32 2147483647, %v593
    %vm605 = vcmp.eq.f32.partialorder %v604, 8.507059e+37
    %v606 = vand.u32 %v593, 2147483648
    %v607 = vor.u32 1.1754944e-38, %v606
    %v608 = vsel %vm605, %v607, %v603
    %v609 = vmul.f32 1.0, %v608
    %v610 = vrcp.pop %v594
    %v611 = vmul.f32 %v594, %v610
    %v612 = vsub.f32 1.0, %v611
    %v613 = vmul.f32 %v610, %v612
    %v614 = vadd.f32 %v610, %v613
    %vm615 = vweird.f32 %v594
    %vm616 = vweird.f32 %v610
    %vm617 = vmor %vm615, %vm616
    %v618 = vsel %vm617, %v610, %v614
    %v619 = vand.u32 2147483647, %v594
    %vm620 = vcmp.eq.f32.partialorder %v619, 8.507059e+37
    %v621 = vand.u32 %v594, 2147483648
    %v622 = vor.u32 1.1754944e-38, %v621
    %v623 = vsel %vm620, %v622, %v618
    %v624 = vmul.f32 1.0, %v623
    %v625 = vtanh.pop %v585
    %v626 = vtanh.pop %v586
    %v629 = vrot.slane %v528, 7
    %v630 = vrot.slane %v529, 7
    %v633 = vmul.f32 %v609, %v629
    %v634 = vmul.f32 %v624, %v630
    %637 = vrot.lane.b32.xlu0 %v625, 64
    %v638 = vpop.permute.xlu0 %637
    %639 = vrot.lane.b32.xlu0 %v626, 64
    %v640 = vpop.permute.xlu0 %639
    %v643 = vmul.f32 %v609, %v638
    %v644 = vmul.f32 %v624, %v640
    %647 = vrot.lane.b32.xlu0 %v643, 32
    %v648 = vpop.permute.xlu0 %647
    %649 = vrot.lane.b32.xlu0 %v644, 32
    %v650 = vpop.permute.xlu0 %649
    %v653 = vadd.f32 %v633, %v648
    %v654 = vadd.f32 %v634, %v650
    %v655 = vtanh.pop %v653
    %v656 = vtanh.pop %v654
    %659 = vrot.lane.b32.xlu0 %v655, 64
    %v660 = vpop.permute.xlu0 %659
    %661 = vrot.lane.b32.xlu0 %v656, 64
    %v662 = vpop.permute.xlu0 %661
    %v665 = vmul.f32 %v609, %v660
    %v666 = vmul.f32 %v624, %v662
    %669 = vrot.lane.b32.xlu0 %v665, 32
    %v670 = vpop.permute.xlu0 %669
    %671 = vrot.lane.b32.xlu0 %v666, 32
    %v672 = vpop.permute.xlu0 %671
    %vm675 = vcmask 257027
    %676 = vst.msk [vmem:[#allocation2] sm:$0x8] %vm675, %v670
    %677 = vst.msk [vmem:[#allocation2 + $0x8] sm:$0x8] %vm675, %v672
    %v678 = vrot.slane %v665, 3
    %v679 = vrot.slane %v666, 2
    %v680 = vsel %vm306, %v679, %v678
    %681 = vrot.lane.b32.xlu0 %v680, 32
    %v682 = vpop.permute.xlu0 %681
    %v683 = vsel %vm190, %v682, 0
    %685 = vmatpush.msra.mxu0 0.0
    %686 = vmatpush.msra.mxu0 0.0
    %687 = vmatpush.msra.mxu0 0.0
    %688 = vmatpush.msra.mxu0 0.0
    %689 = vmatpush.msra.mxu0 0.0
    %690 = vmatpush.msra.mxu0 0.0
    %691 = vmatpush.msra.mxu0 0.0
    %692 = vmatpush.msra.mxu0 0.0
    %693 = vmatpush.msra.mxu0 0.0
    %694 = vmatpush.msra.mxu0 0.0
    %695 = vmatpush.msra.mxu0 0.0
    %696 = vmatpush.msra.mxu0 0.0
    %697 = vmatpush.msra.mxu0 %v153
    %698 = vmatpush.msra.mxu0 %v152
    %699 = vmatpush.msra.mxu0 %v151
    %700 = vmatpush.msra.mxu0 %v150
    %701 = vmatmul.f32.gmra.mxu0 %v683
    %v702 = vpop.f32.mrf.mxu0
    %v703 = vadd.f32 0.0, %v702
    %704 = vdwg.mxu0
    %v706 = vrot.slane %v703, 4
    %v707 = vrot.slane %v703, 5
    %v710 = vadd.f32 %v185, %v706
    %v711 = vadd.f32 %v188, %v707
    %v712 = vxor.u32 %v710, 2147483648
    %v713 = vxor.u32 %v711, 2147483648
    %v714 = vmul.f32 %v712, 1.442695
    %v715 = vpow.pop %v714
    %v716 = vmul.f32 %v713, 1.442695
    %v717 = vpow.pop %v716
    %v718 = vadd.f32 %v715, 1.0
    %v719 = vadd.f32 %v717, 1.0
    %v720 = vrcp.pop %v718
    %v721 = vmul.f32 %v718, %v720
    %v722 = vsub.f32 1.0, %v721
    %v723 = vmul.f32 %v720, %v722
    %v724 = vadd.f32 %v720, %v723
    %vm725 = vweird.f32 %v718
    %vm726 = vweird.f32 %v720
    %vm727 = vmor %vm725, %vm726
    %v728 = vsel %vm727, %v720, %v724
    %v729 = vand.u32 2147483647, %v718
    %vm730 = vcmp.eq.f32.partialorder %v729, 8.507059e+37
    %v731 = vand.u32 %v718, 2147483648
    %v732 = vor.u32 1.1754944e-38, %v731
    %v733 = vsel %vm730, %v732, %v728
    %v734 = vmul.f32 1.0, %v733
    %v735 = vrcp.pop %v719
    %v736 = vmul.f32 %v719, %v735
    %v737 = vsub.f32 1.0, %v736
    %v738 = vmul.f32 %v735, %v737
    %v739 = vadd.f32 %v735, %v738
    %vm740 = vweird.f32 %v719
    %vm741 = vweird.f32 %v735
    %vm742 = vmor %vm740, %vm741
    %v743 = vsel %vm742, %v735, %v739
    %v744 = vand.u32 2147483647, %v719
    %vm745 = vcmp.eq.f32.partialorder %v744, 8.507059e+37
    %v746 = vand.u32 %v719, 2147483648
    %v747 = vor.u32 1.1754944e-38, %v746
    %v748 = vsel %vm745, %v747, %v743
    %v749 = vmul.f32 1.0, %v748
    %v750 = vtanh.pop %v710
    %v751 = vtanh.pop %v711
    %v754 = vrot.slane %v653, 7
    %v755 = vrot.slane %v654, 7
    %v758 = vmul.f32 %v734, %v754
    %v759 = vmul.f32 %v749, %v755
    %762 = vrot.lane.b32.xlu0 %v750, 64
    %v763 = vpop.permute.xlu0 %762
    %764 = vrot.lane.b32.xlu0 %v751, 64
    %v765 = vpop.permute.xlu0 %764
    %v768 = vmul.f32 %v734, %v763
    %v769 = vmul.f32 %v749, %v765
    %772 = vrot.lane.b32.xlu0 %v768, 32
    %v773 = vpop.permute.xlu0 %772
    %774 = vrot.lane.b32.xlu0 %v769, 32
    %v775 = vpop.permute.xlu0 %774
    %v778 = vadd.f32 %v758, %v773
    %v779 = vadd.f32 %v759, %v775
    %v780 = vtanh.pop %v778
    %v781 = vtanh.pop %v779
    %784 = vrot.lane.b32.xlu0 %v780, 64
    %v785 = vpop.permute.xlu0 %784
    %786 = vrot.lane.b32.xlu0 %v781, 64
    %v787 = vpop.permute.xlu0 %786
    %v790 = vmul.f32 %v734, %v785
    %v791 = vmul.f32 %v749, %v787
    %794 = vrot.lane.b32.xlu0 %v790, 32
    %v795 = vpop.permute.xlu0 %794
    %796 = vrot.lane.b32.xlu0 %v791, 32
    %v797 = vpop.permute.xlu0 %796
    %vm800 = vcmask 258052
    %801 = vst.msk [vmem:[#allocation2] sm:$0x10] %vm800, %v795
    %802 = vst.msk [vmem:[#allocation2 + $0x8] sm:$0x10] %vm800, %v797
    %v803 = vrot.slane %v790, 4
    %v804 = vrot.slane %v791, 3
    %v805 = vsel %vm306, %v804, %v803
    %806 = vrot.lane.b32.xlu0 %v805, 32
    %v807 = vpop.permute.xlu0 %806
    %v808 = vsel %vm190, %v807, 0
    %810 = vmatpush.msra.mxu0 0.0
    %811 = vmatpush.msra.mxu0 0.0
    %812 = vmatpush.msra.mxu0 0.0
    %813 = vmatpush.msra.mxu0 0.0
    %814 = vmatpush.msra.mxu0 0.0
    %815 = vmatpush.msra.mxu0 0.0
    %816 = vmatpush.msra.mxu0 0.0
    %817 = vmatpush.msra.mxu0 0.0
    %818 = vmatpush.msra.mxu0 0.0
    %819 = vmatpush.msra.mxu0 0.0
    %820 = vmatpush.msra.mxu0 0.0
    %821 = vmatpush.msra.mxu0 0.0
    %822 = vmatpush.msra.mxu0 %v153
    %823 = vmatpush.msra.mxu0 %v152
    %824 = vmatpush.msra.mxu0 %v151
    %825 = vmatpush.msra.mxu0 %v150
    %826 = vmatmul.f32.gmra.mxu0 %v808
    %v827 = vpop.f32.mrf.mxu0
    %v828 = vadd.f32 0.0, %v827
    %829 = vdwg.mxu0
    %v831 = vrot.slane %v828, 3
    %v832 = vrot.slane %v828, 4
    %v835 = vadd.f32 %v185, %v831
    %v836 = vadd.f32 %v188, %v832
    %v837 = vxor.u32 %v835, 2147483648
    %v838 = vxor.u32 %v836, 2147483648
    %v839 = vmul.f32 %v837, 1.442695
    %v840 = vpow.pop %v839
    %v841 = vmul.f32 %v838, 1.442695
    %v842 = vpow.pop %v841
    %v843 = vadd.f32 %v840, 1.0
    %v844 = vadd.f32 %v842, 1.0
    %v845 = vrcp.pop %v843
    %v846 = vmul.f32 %v843, %v845
    %v847 = vsub.f32 1.0, %v846
    %v848 = vmul.f32 %v845, %v847
    %v849 = vadd.f32 %v845, %v848
    %vm850 = vweird.f32 %v843
    %vm851 = vweird.f32 %v845
    %vm852 = vmor %vm850, %vm851
    %v853 = vsel %vm852, %v845, %v849
    %v854 = vand.u32 2147483647, %v843
    %vm855 = vcmp.eq.f32.partialorder %v854, 8.507059e+37
    %v856 = vand.u32 %v843, 2147483648
    %v857 = vor.u32 1.1754944e-38, %v856
    %v858 = vsel %vm855, %v857, %v853
    %v859 = vmul.f32 1.0, %v858
    %v860 = vrcp.pop %v844
    %v861 = vmul.f32 %v844, %v860
    %v862 = vsub.f32 1.0, %v861
    %v863 = vmul.f32 %v860, %v862
    %v864 = vadd.f32 %v860, %v863
    %vm865 = vweird.f32 %v844
    %vm866 = vweird.f32 %v860
    %vm867 = vmor %vm865, %vm866
    %v868 = vsel %vm867, %v860, %v864
    %v869 = vand.u32 2147483647, %v844
    %vm870 = vcmp.eq.f32.partialorder %v869, 8.507059e+37
    %v871 = vand.u32 %v844, 2147483648
    %v872 = vor.u32 1.1754944e-38, %v871
    %v873 = vsel %vm870, %v872, %v868
    %v874 = vmul.f32 1.0, %v873
    %v875 = vtanh.pop %v835
    %v876 = vtanh.pop %v836
    %v879 = vrot.slane %v778, 7
    %v880 = vrot.slane %v779, 7
    %v883 = vmul.f32 %v859, %v879
    %v884 = vmul.f32 %v874, %v880
    %887 = vrot.lane.b32.xlu0 %v875, 64
    %v888 = vpop.permute.xlu0 %887
    %889 = vrot.lane.b32.xlu0 %v876, 64
    %v890 = vpop.permute.xlu0 %889
    %v893 = vmul.f32 %v859, %v888
    %v894 = vmul.f32 %v874, %v890
    %897 = vrot.lane.b32.xlu0 %v893, 32
    %v898 = vpop.permute.xlu0 %897
    %899 = vrot.lane.b32.xlu0 %v894, 32
    %v900 = vpop.permute.xlu0 %899
    %v903 = vadd.f32 %v883, %v898
    %v904 = vadd.f32 %v884, %v900
    %v905 = vtanh.pop %v903
    %v906 = vtanh.pop %v904
    %909 = vrot.lane.b32.xlu0 %v905, 64
    %v910 = vpop.permute.xlu0 %909
    %911 = vrot.lane.b32.xlu0 %v906, 64
    %v912 = vpop.permute.xlu0 %911
    %v915 = vmul.f32 %v859, %v910
    %v916 = vmul.f32 %v874, %v912
    %919 = vrot.lane.b32.xlu0 %v915, 32
    %v920 = vpop.permute.xlu0 %919
    %921 = vrot.lane.b32.xlu0 %v916, 32
    %v922 = vpop.permute.xlu0 %921
    %vm925 = vcmask 259077
    %926 = vst.msk [vmem:[#allocation2] sm:$0x20] %vm925, %v920
    %927 = vst.msk [vmem:[#allocation2 + $0x8] sm:$0x20] %vm925, %v922
    %v928 = vrot.slane %v915, 5
    %v929 = vrot.slane %v916, 4
    %v930 = vsel %vm306, %v929, %v928
    %931 = vrot.lane.b32.xlu0 %v930, 32
    %v932 = vpop.permute.xlu0 %931
    %v933 = vsel %vm190, %v932, 0
    %935 = vmatpush.msra.mxu0 0.0
    %936 = vmatpush.msra.mxu0 0.0
    %937 = vmatpush.msra.mxu0 0.0
    %938 = vmatpush.msra.mxu0 0.0
    %939 = vmatpush.msra.mxu0 0.0
    %940 = vmatpush.msra.mxu0 0.0
    %941 = vmatpush.msra.mxu0 0.0
    %942 = vmatpush.msra.mxu0 0.0
    %943 = vmatpush.msra.mxu0 0.0
    %944 = vmatpush.msra.mxu0 0.0
    %945 = vmatpush.msra.mxu0 0.0
    %946 = vmatpush.msra.mxu0 0.0
    %947 = vmatpush.msra.mxu0 %v153
    %948 = vmatpush.msra.mxu0 %v152
    %949 = vmatpush.msra.mxu0 %v151
    %950 = vmatpush.msra.mxu0 %v150
    %951 = vmatmul.f32.gmra.mxu0 %v933
    %v952 = vpop.f32.mrf.mxu0
    %v953 = vadd.f32 0.0, %v952
    %954 = vdwg.mxu0
    %v956 = vrot.slane %v953, 2
    %v957 = vrot.slane %v953, 3
    %v960 = vadd.f32 %v185, %v956
    %v961 = vadd.f32 %v188, %v957
    %v962 = vxor.u32 %v960, 2147483648
    %v963 = vxor.u32 %v961, 2147483648
    %v964 = vmul.f32 %v962, 1.442695
    %v965 = vpow.pop %v964
    %v966 = vmul.f32 %v963, 1.442695
    %v967 = vpow.pop %v966
    %v968 = vadd.f32 %v965, 1.0
    %v969 = vadd.f32 %v967, 1.0
    %v970 = vrcp.pop %v968
    %v971 = vmul.f32 %v968, %v970
    %v972 = vsub.f32 1.0, %v971
    %v973 = vmul.f32 %v970, %v972
    %v974 = vadd.f32 %v970, %v973
    %vm975 = vweird.f32 %v968
    %vm976 = vweird.f32 %v970
    %vm977 = vmor %vm975, %vm976
    %v978 = vsel %vm977, %v970, %v974
    %v979 = vand.u32 2147483647, %v968
    %vm980 = vcmp.eq.f32.partialorder %v979, 8.507059e+37
    %v981 = vand.u32 %v968, 2147483648
    %v982 = vor.u32 1.1754944e-38, %v981
    %v983 = vsel %vm980, %v982, %v978
    %v984 = vmul.f32 1.0, %v983
    %v985 = vrcp.pop %v969
    %v986 = vmul.f32 %v969, %v985
    %v987 = vsub.f32 1.0, %v986
    %v988 = vmul.f32 %v985, %v987
    %v989 = vadd.f32 %v985, %v988
    %vm990 = vweird.f32 %v969
    %vm991 = vweird.f32 %v985
    %vm992 = vmor %vm990, %vm991
    %v993 = vsel %vm992, %v985, %v989
    %v994 = vand.u32 2147483647, %v969
    %vm995 = vcmp.eq.f32.partialorder %v994, 8.507059e+37
    %v996 = vand.u32 %v969, 2147483648
    %v997 = vor.u32 1.1754944e-38, %v996
    %v998 = vsel %vm995, %v997, %v993
    %v999 = vmul.f32 1.0, %v998
    %v1000 = vtanh.pop %v960
    %v1001 = vtanh.pop %v961
    %v1004 = vrot.slane %v903, 7
    %v1005 = vrot.slane %v904, 7
    %v1008 = vmul.f32 %v984, %v1004
    %v1009 = vmul.f32 %v999, %v1005
    %1012 = vrot.lane.b32.xlu0 %v1000, 64
    %v1013 = vpop.permute.xlu0 %1012
    %1014 = vrot.lane.b32.xlu0 %v1001, 64
    %v1015 = vpop.permute.xlu0 %1014
    %v1018 = vmul.f32 %v984, %v1013
    %v1019 = vmul.f32 %v999, %v1015
    %1022 = vrot.lane.b32.xlu0 %v1018, 32
    %v1023 = vpop.permute.xlu0 %1022
    %1024 = vrot.lane.b32.xlu0 %v1019, 32
    %v1025 = vpop.permute.xlu0 %1024
    %v1028 = vadd.f32 %v1008, %v1023
    %v1029 = vadd.f32 %v1009, %v1025
    %v1030 = vtanh.pop %v1028
    %v1031 = vtanh.pop %v1029
    %1034 = vrot.lane.b32.xlu0 %v1030, 64
    %v1035 = vpop.permute.xlu0 %1034
    %1036 = vrot.lane.b32.xlu0 %v1031, 64
    %v1037 = vpop.permute.xlu0 %1036
    %v1040 = vmul.f32 %v984, %v1035
    %v1041 = vmul.f32 %v999, %v1037
    %1044 = vrot.lane.b32.xlu0 %v1040, 32
    %v1045 = vpop.permute.xlu0 %1044
    %1046 = vrot.lane.b32.xlu0 %v1041, 32
    %v1047 = vpop.permute.xlu0 %1046
    %vm1050 = vcmask 260102
    %1051 = vst.msk [vmem:[#allocation2] sm:$0x40] %vm1050, %v1045
    %1052 = vst.msk [vmem:[#allocation2 + $0x8] sm:$0x40] %vm1050, %v1047
    %v1053 = vrot.slane %v1040, 6
    %v1054 = vrot.slane %v1041, 5
    %v1055 = vsel %vm306, %v1054, %v1053
    %1056 = vrot.lane.b32.xlu0 %v1055, 32
    %v1057 = vpop.permute.xlu0 %1056
    %v1058 = vsel %vm190, %v1057, 0
    %1060 = vmatpush.msra.mxu0 0.0
    %1061 = vmatpush.msra.mxu0 0.0
    %1062 = vmatpush.msra.mxu0 0.0
    %1063 = vmatpush.msra.mxu0 0.0
    %1064 = vmatpush.msra.mxu0 0.0
    %1065 = vmatpush.msra.mxu0 0.0
    %1066 = vmatpush.msra.mxu0 0.0
    %1067 = vmatpush.msra.mxu0 0.0
    %1068 = vmatpush.msra.mxu0 0.0
    %1069 = vmatpush.msra.mxu0 0.0
    %1070 = vmatpush.msra.mxu0 0.0
    %1071 = vmatpush.msra.mxu0 0.0
    %1072 = vmatpush.msra.mxu0 %v153
    %1073 = vmatpush.msra.mxu0 %v152
    %1074 = vmatpush.msra.mxu0 %v151
    %1075 = vmatpush.msra.mxu0 %v150
    %1076 = vmatmul.f32.gmra.mxu0 %v1058
    %v1077 = vpop.f32.mrf.mxu0
    %v1078 = vadd.f32 0.0, %v1077
    %1079 = vdwg.mxu0
    %v1081 = vrot.slane %v1078, 1
    %v1082 = vrot.slane %v1078, 2
    %v1085 = vadd.f32 %v185, %v1081
    %v1086 = vadd.f32 %v188, %v1082
    %v1087 = vxor.u32 %v1085, 2147483648
    %v1088 = vxor.u32 %v1086, 2147483648
    %v1089 = vmul.f32 %v1087, 1.442695
    %v1090 = vpow.pop %v1089
    %v1091 = vmul.f32 %v1088, 1.442695
    %v1092 = vpow.pop %v1091
    %v1093 = vadd.f32 %v1090, 1.0
    %v1094 = vadd.f32 %v1092, 1.0
    %v1095 = vrcp.pop %v1093
    %v1096 = vmul.f32 %v1093, %v1095
    %v1097 = vsub.f32 1.0, %v1096
    %v1098 = vmul.f32 %v1095, %v1097
    %v1099 = vadd.f32 %v1095, %v1098
    %vm1100 = vweird.f32 %v1093
    %vm1101 = vweird.f32 %v1095
    %vm1102 = vmor %vm1100, %vm1101
    %v1103 = vsel %vm1102, %v1095, %v1099
    %v1104 = vand.u32 2147483647, %v1093
    %vm1105 = vcmp.eq.f32.partialorder %v1104, 8.507059e+37
    %v1106 = vand.u32 %v1093, 2147483648
    %v1107 = vor.u32 1.1754944e-38, %v1106
    %v1108 = vsel %vm1105, %v1107, %v1103
    %v1109 = vmul.f32 1.0, %v1108
    %v1110 = vrcp.pop %v1094
    %v1111 = vmul.f32 %v1094, %v1110
    %v1112 = vsub.f32 1.0, %v1111
    %v1113 = vmul.f32 %v1110, %v1112
    %v1114 = vadd.f32 %v1110, %v1113
    %vm1115 = vweird.f32 %v1094
    %vm1116 = vweird.f32 %v1110
    %vm1117 = vmor %vm1115, %vm1116
    %v1118 = vsel %vm1117, %v1110, %v1114
    %v1119 = vand.u32 2147483647, %v1094
    %vm1120 = vcmp.eq.f32.partialorder %v1119, 8.507059e+37
    %v1121 = vand.u32 %v1094, 2147483648
    %v1122 = vor.u32 1.1754944e-38, %v1121
    %v1123 = vsel %vm1120, %v1122, %v1118
    %v1124 = vmul.f32 1.0, %v1123
    %v1125 = vtanh.pop %v1085
    %v1126 = vtanh.pop %v1086
    %v1129 = vrot.slane %v1028, 7
    %v1130 = vrot.slane %v1029, 7
    %v1133 = vmul.f32 %v1109, %v1129
    %v1134 = vmul.f32 %v1124, %v1130
    %1137 = vrot.lane.b32.xlu0 %v1125, 64
    %v1138 = vpop.permute.xlu0 %1137
    %1139 = vrot.lane.b32.xlu0 %v1126, 64
    %v1140 = vpop.permute.xlu0 %1139
    %v1143 = vmul.f32 %v1109, %v1138
    %v1144 = vmul.f32 %v1124, %v1140
    %1147 = vrot.lane.b32.xlu0 %v1143, 32
    %v1148 = vpop.permute.xlu0 %1147
    %1149 = vrot.lane.b32.xlu0 %v1144, 32
    %v1150 = vpop.permute.xlu0 %1149
    %v1153 = vadd.f32 %v1133, %v1148
    %v1154 = vadd.f32 %v1134, %v1150
    %v1155 = vtanh.pop %v1153
    %v1156 = vtanh.pop %v1154
    %1159 = vrot.lane.b32.xlu0 %v1155, 64
    %v1160 = vpop.permute.xlu0 %1159
    %1161 = vrot.lane.b32.xlu0 %v1156, 64
    %v1162 = vpop.permute.xlu0 %1161
    %v1165 = vmul.f32 %v1109, %v1160
    %v1166 = vmul.f32 %v1124, %v1162
    %1169 = vrot.lane.b32.xlu0 %v1165, 32
    %v1170 = vpop.permute.xlu0 %1169
    %1171 = vrot.lane.b32.xlu0 %v1166, 32
    %v1172 = vpop.permute.xlu0 %1171
    %vm1175 = vcmask 261127
    %1176 = vst.msk [vmem:[#allocation2] sm:$0x80] %vm1175, %v1170
    %1177 = vst.msk [vmem:[#allocation2 + $0x8] sm:$0x80] %vm1175, %v1172
    %v1178 = vld [vmem:[#allocation2] sm:$0xff]
    %v1179 = vld [vmem:[#allocation2 + $0x8] sm:$0xff]
    %v1180 = vld [vmem:[#allocation11] sm:$0xff]
    %v1181 = vld [vmem:[#allocation11 + $0x8] sm:$0xff]
    %v1182 = vld [vmem:[#allocation11 + $0x10] sm:$0xff]
    %v1183 = vld [vmem:[#allocation11 + $0x18] sm:$0xff]
    %v1184 = vld [vmem:[#allocation9] sm:$0xff]
    %v1185 = vld [vmem:[#allocation9 + $0x8] sm:$0xff]
    %v1186 = vld [vmem:[#allocation9 + $0x10] sm:$0xff]
    %v1187 = vld [vmem:[#allocation9 + $0x18] sm:$0xff]
    %v1188 = vld [vmem:[%s6] sm:$0x1]
    %v1190 = vperm.slane %v1188, 0
    %v1193 = vsel %vm190, %v1178, 0
    %v1196 = vsel %vm190, %v1179, 0
    %1198 = vmatpush.msra.mxu0 0.0
    %1199 = vmatpush.msra.mxu0 0.0
    %1200 = vmatpush.msra.mxu0 0.0
    %1201 = vmatpush.msra.mxu0 0.0
    %1202 = vmatpush.msra.mxu0 0.0
    %1203 = vmatpush.msra.mxu0 0.0
    %1204 = vmatpush.msra.mxu0 0.0
    %1205 = vmatpush.msra.mxu0 0.0
    %1206 = vmatpush.msra.mxu0 0.0
    %1207 = vmatpush.msra.mxu0 0.0
    %1208 = vmatpush.msra.mxu0 0.0
    %1209 = vmatpush.msra.mxu0 0.0
    %1210 = vmatpush.msra.mxu0 %v1187
    %1211 = vmatpush.msra.mxu0 %v1186
    %1212 = vmatpush.msra.mxu0 %v1185
    %1213 = vmatpush.msra.mxu0 %v1184
    %1214 = vmatmul.f32.gmra.mxu0 %v1193
    %v1215 = vpop.f32.mrf.mxu0
    %v1216 = vadd.f32 %v1190, %v1215
    %1217 = vmatmul.f32.gmra.mxu0 %v1196
    %v1218 = vpop.f32.mrf.mxu0
    %v1219 = vadd.f32 %v1190, %v1218
    %1220 = vdwg.mxu0
    %1221 = vmatpush.msra.mxu0 0.0
    %1222 = vmatpush.msra.mxu0 0.0
    %1223 = vmatpush.msra.mxu0 0.0
    %1224 = vmatpush.msra.mxu0 0.0
    %1225 = vmatpush.msra.mxu0 0.0
    %1226 = vmatpush.msra.mxu0 0.0
    %1227 = vmatpush.msra.mxu0 0.0
    %1228 = vmatpush.msra.mxu0 0.0
    %1229 = vmatpush.msra.mxu0 0.0
    %1230 = vmatpush.msra.mxu0 0.0
    %1231 = vmatpush.msra.mxu0 0.0
    %1232 = vmatpush.msra.mxu0 0.0
    %1233 = vmatpush.msra.mxu0 %v1183
    %1234 = vmatpush.msra.mxu0 %v1182
    %1235 = vmatpush.msra.mxu0 %v1181
    %1236 = vmatpush.msra.mxu0 %v1180
    %1237 = vmatmul.f32.gmra.mxu0 %v192
    %v1238 = vpop.f32.mrf.mxu0
    %v1239 = vadd.f32 0.0, %v1238
    %1240 = vdwg.mxu0
    %v1242 = vrot.slane %v1239, 1
    %v1245 = vadd.f32 %v1216, %v1239
    %v1246 = vadd.f32 %v1219, %v1242
    %v1247 = vxor.u32 %v1245, 2147483648
    %v1248 = vxor.u32 %v1246, 2147483648
    %v1249 = vmul.f32 %v1247, 1.442695
    %v1250 = vpow.pop %v1249
    %v1251 = vmul.f32 %v1248, 1.442695
    %v1252 = vpow.pop %v1251
    %v1253 = vadd.f32 %v1250, 1.0
    %v1254 = vadd.f32 %v1252, 1.0
    %v1255 = vrcp.pop %v1253
    %v1256 = vmul.f32 %v1253, %v1255
    %v1257 = vsub.f32 1.0, %v1256
    %v1258 = vmul.f32 %v1255, %v1257
    %v1259 = vadd.f32 %v1255, %v1258
    %vm1260 = vweird.f32 %v1253
    %vm1261 = vweird.f32 %v1255
    %vm1262 = vmor %vm1260, %vm1261
    %v1263 = vsel %vm1262, %v1255, %v1259
    %v1264 = vand.u32 2147483647, %v1253
    %vm1265 = vcmp.eq.f32.partialorder %v1264, 8.507059e+37
    %v1266 = vand.u32 %v1253, 2147483648
    %v1267 = vor.u32 1.1754944e-38, %v1266
    %v1268 = vsel %vm1265, %v1267, %v1263
    %v1269 = vmul.f32 1.0, %v1268
    %v1270 = vrcp.pop %v1254
    %v1271 = vmul.f32 %v1254, %v1270
    %v1272 = vsub.f32 1.0, %v1271
    %v1273 = vmul.f32 %v1270, %v1272
    %v1274 = vadd.f32 %v1270, %v1273
    %vm1275 = vweird.f32 %v1254
    %vm1276 = vweird.f32 %v1270
    %vm1277 = vmor %vm1275, %vm1276
    %v1278 = vsel %vm1277, %v1270, %v1274
    %v1279 = vand.u32 2147483647, %v1254
    %vm1280 = vcmp.eq.f32.partialorder %v1279, 8.507059e+37
    %v1281 = vand.u32 %v1254, 2147483648
    %v1282 = vor.u32 1.1754944e-38, %v1281
    %v1283 = vsel %vm1280, %v1282, %v1278
    %v1284 = vmul.f32 1.0, %v1283
    %v1285 = vtanh.pop %v1245
    %v1286 = vtanh.pop %v1246
    %v1287 = vmul.f32 %v1269, 0.0
    %v1288 = vmul.f32 %v1284, 0.0
    %1291 = vrot.lane.b32.xlu0 %v1285, 64
    %v1292 = vpop.permute.xlu0 %1291
    %1293 = vrot.lane.b32.xlu0 %v1286, 64
    %v1294 = vpop.permute.xlu0 %1293
    %v1297 = vmul.f32 %v1269, %v1292
    %v1298 = vmul.f32 %v1284, %v1294
    %1301 = vrot.lane.b32.xlu0 %v1297, 32
    %v1302 = vpop.permute.xlu0 %1301
    %1303 = vrot.lane.b32.xlu0 %v1298, 32
    %v1304 = vpop.permute.xlu0 %1303
    %v1307 = vadd.f32 %v1287, %v1302
    %v1308 = vadd.f32 %v1288, %v1304
    %v1309 = vtanh.pop %v1307
    %v1310 = vtanh.pop %v1308
    %1313 = vrot.lane.b32.xlu0 %v1309, 64
    %v1314 = vpop.permute.xlu0 %1313
    %1315 = vrot.lane.b32.xlu0 %v1310, 64
    %v1316 = vpop.permute.xlu0 %1315
    %v1319 = vmul.f32 %v1269, %v1314
    %v1320 = vmul.f32 %v1284, %v1316
    %1323 = vrot.lane.b32.xlu0 %v1319, 32
    %v1324 = vpop.permute.xlu0 %1323
    %1325 = vrot.lane.b32.xlu0 %v1320, 32
    %v1326 = vpop.permute.xlu0 %1325
    %1329 = vst.msk [vmem:[#allocation2] sm:$0x1] %vm302, %v1324
    %1330 = vst.msk [vmem:[#allocation2 + $0x8] sm:$0x1] %vm302, %v1326
    %v1331 = vrot.slane %v1320, 7
    %v1332 = vsel %vm306, %v1331, %v1319
    %1333 = vrot.lane.b32.xlu0 %v1332, 32
    %v1334 = vpop.permute.xlu0 %1333
    %v1335 = vsel %vm190, %v1334, 0
    %1337 = vmatpush.msra.mxu0 0.0
    %1338 = vmatpush.msra.mxu0 0.0
    %1339 = vmatpush.msra.mxu0 0.0
    %1340 = vmatpush.msra.mxu0 0.0
    %1341 = vmatpush.msra.mxu0 0.0
    %1342 = vmatpush.msra.mxu0 0.0
    %1343 = vmatpush.msra.mxu0 0.0
    %1344 = vmatpush.msra.mxu0 0.0
    %1345 = vmatpush.msra.mxu0 0.0
    %1346 = vmatpush.msra.mxu0 0.0
    %1347 = vmatpush.msra.mxu0 0.0
    %1348 = vmatpush.msra.mxu0 0.0
    %1349 = vmatpush.msra.mxu0 %v1183
    %1350 = vmatpush.msra.mxu0 %v1182
    %1351 = vmatpush.msra.mxu0 %v1181
    %1352 = vmatpush.msra.mxu0 %v1180
    %1353 = vmatmul.f32.gmra.mxu0 %v1335
    %v1354 = vpop.f32.mrf.mxu0
    %v1355 = vadd.f32 0.0, %v1354
    %1356 = vdwg.mxu0
    %v1358 = vrot.slane %v1355, 7
    %v1361 = vadd.f32 %v1216, %v1358
    %v1362 = vadd.f32 %v1219, %v1355
    %v1363 = vxor.u32 %v1361, 2147483648
    %v1364 = vxor.u32 %v1362, 2147483648
    %v1365 = vmul.f32 %v1363, 1.442695
    %v1366 = vpow.pop %v1365
    %v1367 = vmul.f32 %v1364, 1.442695
    %v1368 = vpow.pop %v1367
    %v1369 = vadd.f32 %v1366, 1.0
    %v1370 = vadd.f32 %v1368, 1.0
    %v1371 = vrcp.pop %v1369
    %v1372 = vmul.f32 %v1369, %v1371
    %v1373 = vsub.f32 1.0, %v1372
    %v1374 = vmul.f32 %v1371, %v1373
    %v1375 = vadd.f32 %v1371, %v1374
    %vm1376 = vweird.f32 %v1369
    %vm1377 = vweird.f32 %v1371
    %vm1378 = vmor %vm1376, %vm1377
    %v1379 = vsel %vm1378, %v1371, %v1375
    %v1380 = vand.u32 2147483647, %v1369
    %vm1381 = vcmp.eq.f32.partialorder %v1380, 8.507059e+37
    %v1382 = vand.u32 %v1369, 2147483648
    %v1383 = vor.u32 1.1754944e-38, %v1382
    %v1384 = vsel %vm1381, %v1383, %v1379
    %v1385 = vmul.f32 1.0, %v1384
    %v1386 = vrcp.pop %v1370
    %v1387 = vmul.f32 %v1370, %v1386
    %v1388 = vsub.f32 1.0, %v1387
    %v1389 = vmul.f32 %v1386, %v1388
    %v1390 = vadd.f32 %v1386, %v1389
    %vm1391 = vweird.f32 %v1370
    %vm1392 = vweird.f32 %v1386
    %vm1393 = vmor %vm1391, %vm1392
    %v1394 = vsel %vm1393, %v1386, %v1390
    %v1395 = vand.u32 2147483647, %v1370
    %vm1396 = vcmp.eq.f32.partialorder %v1395, 8.507059e+37
    %v1397 = vand.u32 %v1370, 2147483648
    %v1398 = vor.u32 1.1754944e-38, %v1397
    %v1399 = vsel %vm1396, %v1398, %v1394
    %v1400 = vmul.f32 1.0, %v1399
    %v1401 = vtanh.pop %v1361
    %v1402 = vtanh.pop %v1362
    %v1405 = vrot.slane %v1307, 7
    %v1406 = vrot.slane %v1308, 7
    %v1409 = vmul.f32 %v1385, %v1405
    %v1410 = vmul.f32 %v1400, %v1406
    %1413 = vrot.lane.b32.xlu0 %v1401, 64
    %v1414 = vpop.permute.xlu0 %1413
    %1415 = vrot.lane.b32.xlu0 %v1402, 64
    %v1416 = vpop.permute.xlu0 %1415
    %v1419 = vmul.f32 %v1385, %v1414
    %v1420 = vmul.f32 %v1400, %v1416
    %1423 = vrot.lane.b32.xlu0 %v1419, 32
    %v1424 = vpop.permute.xlu0 %1423
    %1425 = vrot.lane.b32.xlu0 %v1420, 32
    %v1426 = vpop.permute.xlu0 %1425
    %v1429 = vadd.f32 %v1409, %v1424
    %v1430 = vadd.f32 %v1410, %v1426
    %v1431 = vtanh.pop %v1429
    %v1432 = vtanh.pop %v1430
    %1435 = vrot.lane.b32.xlu0 %v1431, 64
    %v1436 = vpop.permute.xlu0 %1435
    %1437 = vrot.lane.b32.xlu0 %v1432, 64
    %v1438 = vpop.permute.xlu0 %1437
    %v1441 = vmul.f32 %v1385, %v1436
    %v1442 = vmul.f32 %v1400, %v1438
    %1445 = vrot.lane.b32.xlu0 %v1441, 32
    %v1446 = vpop.permute.xlu0 %1445
    %1447 = vrot.lane.b32.xlu0 %v1442, 32
    %v1448 = vpop.permute.xlu0 %1447
    %1451 = vst.msk [vmem:[#allocation2] sm:$0x2] %vm426, %v1446
    %1452 = vst.msk [vmem:[#allocation2 + $0x8] sm:$0x2] %vm426, %v1448
    %v1453 = vrot.slane %v1441, 1
    %v1454 = vsel %vm306, %v1442, %v1453
    %1455 = vrot.lane.b32.xlu0 %v1454, 32
    %v1456 = vpop.permute.xlu0 %1455
    %v1457 = vsel %vm190, %v1456, 0
    %1459 = vmatpush.msra.mxu0 0.0
    %1460 = vmatpush.msra.mxu0 0.0
    %1461 = vmatpush.msra.mxu0 0.0
    %1462 = vmatpush.msra.mxu0 0.0
    %1463 = vmatpush.msra.mxu0 0.0
    %1464 = vmatpush.msra.mxu0 0.0
    %1465 = vmatpush.msra.mxu0 0.0
    %1466 = vmatpush.msra.mxu0 0.0
    %1467 = vmatpush.msra.mxu0 0.0
    %1468 = vmatpush.msra.mxu0 0.0
    %1469 = vmatpush.msra.mxu0 0.0
    %1470 = vmatpush.msra.mxu0 0.0
    %1471 = vmatpush.msra.mxu0 %v1183
    %1472 = vmatpush.msra.mxu0 %v1182
    %1473 = vmatpush.msra.mxu0 %v1181
    %1474 = vmatpush.msra.mxu0 %v1180
    %1475 = vmatmul.f32.gmra.mxu0 %v1457
    %v1476 = vpop.f32.mrf.mxu0
    %v1477 = vadd.f32 0.0, %v1476
    %1478 = vdwg.mxu0
    %v1480 = vrot.slane %v1477, 6
    %v1481 = vrot.slane %v1477, 7
    %v1484 = vadd.f32 %v1216, %v1480
    %v1485 = vadd.f32 %v1219, %v1481
    %v1486 = vxor.u32 %v1484, 2147483648
    %v1487 = vxor.u32 %v1485, 2147483648
    %v1488 = vmul.f32 %v1486, 1.442695
    %v1489 = vpow.pop %v1488
    %v1490 = vmul.f32 %v1487, 1.442695
    %v1491 = vpow.pop %v1490
    %v1492 = vadd.f32 %v1489, 1.0
    %v1493 = vadd.f32 %v1491, 1.0
    %v1494 = vrcp.pop %v1492
    %v1495 = vmul.f32 %v1492, %v1494
    %v1496 = vsub.f32 1.0, %v1495
    %v1497 = vmul.f32 %v1494, %v1496
    %v1498 = vadd.f32 %v1494, %v1497
    %vm1499 = vweird.f32 %v1492
    %vm1500 = vweird.f32 %v1494
    %vm1501 = vmor %vm1499, %vm1500
    %v1502 = vsel %vm1501, %v1494, %v1498
    %v1503 = vand.u32 2147483647, %v1492
    %vm1504 = vcmp.eq.f32.partialorder %v1503, 8.507059e+37
    %v1505 = vand.u32 %v1492, 2147483648
    %v1506 = vor.u32 1.1754944e-38, %v1505
    %v1507 = vsel %vm1504, %v1506, %v1502
    %v1508 = vmul.f32 1.0, %v1507
    %v1509 = vrcp.pop %v1493
    %v1510 = vmul.f32 %v1493, %v1509
    %v1511 = vsub.f32 1.0, %v1510
    %v1512 = vmul.f32 %v1509, %v1511
    %v1513 = vadd.f32 %v1509, %v1512
    %vm1514 = vweird.f32 %v1493
    %vm1515 = vweird.f32 %v1509
    %vm1516 = vmor %vm1514, %vm1515
    %v1517 = vsel %vm1516, %v1509, %v1513
    %v1518 = vand.u32 2147483647, %v1493
    %vm1519 = vcmp.eq.f32.partialorder %v1518, 8.507059e+37
    %v1520 = vand.u32 %v1493, 2147483648
    %v1521 = vor.u32 1.1754944e-38, %v1520
    %v1522 = vsel %vm1519, %v1521, %v1517
    %v1523 = vmul.f32 1.0, %v1522
    %v1524 = vtanh.pop %v1484
    %v1525 = vtanh.pop %v1485
    %v1528 = vrot.slane %v1429, 7
    %v1529 = vrot.slane %v1430, 7
    %v1532 = vmul.f32 %v1508, %v1528
    %v1533 = vmul.f32 %v1523, %v1529
    %1536 = vrot.lane.b32.xlu0 %v1524, 64
    %v1537 = vpop.permute.xlu0 %1536
    %1538 = vrot.lane.b32.xlu0 %v1525, 64
    %v1539 = vpop.permute.xlu0 %1538
    %v1542 = vmul.f32 %v1508, %v1537
    %v1543 = vmul.f32 %v1523, %v1539
    %1546 = vrot.lane.b32.xlu0 %v1542, 32
    %v1547 = vpop.permute.xlu0 %1546
    %1548 = vrot.lane.b32.xlu0 %v1543, 32
    %v1549 = vpop.permute.xlu0 %1548
    %v1552 = vadd.f32 %v1532, %v1547
    %v1553 = vadd.f32 %v1533, %v1549
    %v1554 = vtanh.pop %v1552
    %v1555 = vtanh.pop %v1553
    %1558 = vrot.lane.b32.xlu0 %v1554, 64
    %v1559 = vpop.permute.xlu0 %1558
    %1560 = vrot.lane.b32.xlu0 %v1555, 64
    %v1561 = vpop.permute.xlu0 %1560
    %v1564 = vmul.f32 %v1508, %v1559
    %v1565 = vmul.f32 %v1523, %v1561
    %1568 = vrot.lane.b32.xlu0 %v1564, 32
    %v1569 = vpop.permute.xlu0 %1568
    %1570 = vrot.lane.b32.xlu0 %v1565, 32
    %v1571 = vpop.permute.xlu0 %1570
    %1574 = vst.msk [vmem:[#allocation2] sm:$0x4] %vm550, %v1569
    %1575 = vst.msk [vmem:[#allocation2 + $0x8] sm:$0x4] %vm550, %v1571
    %v1576 = vrot.slane %v1564, 2
    %v1577 = vrot.slane %v1565, 1
    %v1578 = vsel %vm306, %v1577, %v1576
    %1579 = vrot.lane.b32.xlu0 %v1578, 32
    %v1580 = vpop.permute.xlu0 %1579
    %v1581 = vsel %vm190, %v1580, 0
    %1583 = vmatpush.msra.mxu0 0.0
    %1584 = vmatpush.msra.mxu0 0.0
    %1585 = vmatpush.msra.mxu0 0.0
    %1586 = vmatpush.msra.mxu0 0.0
    %1587 = vmatpush.msra.mxu0 0.0
    %1588 = vmatpush.msra.mxu0 0.0
    %1589 = vmatpush.msra.mxu0 0.0
    %1590 = vmatpush.msra.mxu0 0.0
    %1591 = vmatpush.msra.mxu0 0.0
    %1592 = vmatpush.msra.mxu0 0.0
    %1593 = vmatpush.msra.mxu0 0.0
    %1594 = vmatpush.msra.mxu0 0.0
    %1595 = vmatpush.msra.mxu0 %v1183
    %1596 = vmatpush.msra.mxu0 %v1182
    %1597 = vmatpush.msra.mxu0 %v1181
    %1598 = vmatpush.msra.mxu0 %v1180
    %1599 = vmatmul.f32.gmra.mxu0 %v1581
    %v1600 = vpop.f32.mrf.mxu0
    %v1601 = vadd.f32 0.0, %v1600
    %1602 = vdwg.mxu0
    %v1604 = vrot.slane %v1601, 5
    %v1605 = vrot.slane %v1601, 6
    %v1608 = vadd.f32 %v1216, %v1604
    %v1609 = vadd.f32 %v1219, %v1605
    %v1610 = vxor.u32 %v1608, 2147483648
    %v1611 = vxor.u32 %v1609, 2147483648
    %v1612 = vmul.f32 %v1610, 1.442695
    %v1613 = vpow.pop %v1612
    %v1614 = vmul.f32 %v1611, 1.442695
    %v1615 = vpow.pop %v1614
    %v1616 = vadd.f32 %v1613, 1.0
    %v1617 = vadd.f32 %v1615, 1.0
    %v1618 = vrcp.pop %v1616
    %v1619 = vmul.f32 %v1616, %v1618
    %v1620 = vsub.f32 1.0, %v1619
    %v1621 = vmul.f32 %v1618, %v1620
    %v1622 = vadd.f32 %v1618, %v1621
    %vm1623 = vweird.f32 %v1616
    %vm1624 = vweird.f32 %v1618
    %vm1625 = vmor %vm1623, %vm1624
    %v1626 = vsel %vm1625, %v1618, %v1622
    %v1627 = vand.u32 2147483647, %v1616
    %vm1628 = vcmp.eq.f32.partialorder %v1627, 8.507059e+37
    %v1629 = vand.u32 %v1616, 2147483648
    %v1630 = vor.u32 1.1754944e-38, %v1629
    %v1631 = vsel %vm1628, %v1630, %v1626
    %v1632 = vmul.f32 1.0, %v1631
    %v1633 = vrcp.pop %v1617
    %v1634 = vmul.f32 %v1617, %v1633
    %v1635 = vsub.f32 1.0, %v1634
    %v1636 = vmul.f32 %v1633, %v1635
    %v1637 = vadd.f32 %v1633, %v1636
    %vm1638 = vweird.f32 %v1617
    %vm1639 = vweird.f32 %v1633
    %vm1640 = vmor %vm1638, %vm1639
    %v1641 = vsel %vm1640, %v1633, %v1637
    %v1642 = vand.u32 2147483647, %v1617
    %vm1643 = vcmp.eq.f32.partialorder %v1642, 8.507059e+37
    %v1644 = vand.u32 %v1617, 2147483648
    %v1645 = vor.u32 1.1754944e-38, %v1644
    %v1646 = vsel %vm1643, %v1645, %v1641
    %v1647 = vmul.f32 1.0, %v1646
    %v1648 = vtanh.pop %v1608
    %v1649 = vtanh.pop %v1609
    %v1652 = vrot.slane %v1552, 7
    %v1653 = vrot.slane %v1553, 7
    %v1656 = vmul.f32 %v1632, %v1652
    %v1657 = vmul.f32 %v1647, %v1653
    %1660 = vrot.lane.b32.xlu0 %v1648, 64
    %v1661 = vpop.permute.xlu0 %1660
    %1662 = vrot.lane.b32.xlu0 %v1649, 64
    %v1663 = vpop.permute.xlu0 %1662
    %v1666 = vmul.f32 %v1632, %v1661
    %v1667 = vmul.f32 %v1647, %v1663
    %1670 = vrot.lane.b32.xlu0 %v1666, 32
    %v1671 = vpop.permute.xlu0 %1670
    %1672 = vrot.lane.b32.xlu0 %v1667, 32
    %v1673 = vpop.permute.xlu0 %1672
    %v1676 = vadd.f32 %v1656, %v1671
    %v1677 = vadd.f32 %v1657, %v1673
    %v1678 = vtanh.pop %v1676
    %v1679 = vtanh.pop %v1677
    %1682 = vrot.lane.b32.xlu0 %v1678, 64
    %v1683 = vpop.permute.xlu0 %1682
    %1684 = vrot.lane.b32.xlu0 %v1679, 64
    %v1685 = vpop.permute.xlu0 %1684
    %v1688 = vmul.f32 %v1632, %v1683
    %v1689 = vmul.f32 %v1647, %v1685
    %1692 = vrot.lane.b32.xlu0 %v1688, 32
    %v1693 = vpop.permute.xlu0 %1692
    %1694 = vrot.lane.b32.xlu0 %v1689, 32
    %v1695 = vpop.permute.xlu0 %1694
    %1698 = vst.msk [vmem:[#allocation2] sm:$0x8] %vm675, %v1693
    %1699 = vst.msk [vmem:[#allocation2 + $0x8] sm:$0x8] %vm675, %v1695
    %v1700 = vrot.slane %v1688, 3
    %v1701 = vrot.slane %v1689, 2
    %v1702 = vsel %vm306, %v1701, %v1700
    %1703 = vrot.lane.b32.xlu0 %v1702, 32
    %v1704 = vpop.permute.xlu0 %1703
    %v1705 = vsel %vm190, %v1704, 0
    %1707 = vmatpush.msra.mxu0 0.0
    %1708 = vmatpush.msra.mxu0 0.0
    %1709 = vmatpush.msra.mxu0 0.0
    %1710 = vmatpush.msra.mxu0 0.0
    %1711 = vmatpush.msra.mxu0 0.0
    %1712 = vmatpush.msra.mxu0 0.0
    %1713 = vmatpush.msra.mxu0 0.0
    %1714 = vmatpush.msra.mxu0 0.0
    %1715 = vmatpush.msra.mxu0 0.0
    %1716 = vmatpush.msra.mxu0 0.0
    %1717 = vmatpush.msra.mxu0 0.0
    %1718 = vmatpush.msra.mxu0 0.0
    %1719 = vmatpush.msra.mxu0 %v1183
    %1720 = vmatpush.msra.mxu0 %v1182
    %1721 = vmatpush.msra.mxu0 %v1181
    %1722 = vmatpush.msra.mxu0 %v1180
    %1723 = vmatmul.f32.gmra.mxu0 %v1705
    %v1724 = vpop.f32.mrf.mxu0
    %v1725 = vadd.f32 0.0, %v1724
    %1726 = vdwg.mxu0
    %v1728 = vrot.slane %v1725, 4
    %v1729 = vrot.slane %v1725, 5
    %v1732 = vadd.f32 %v1216, %v1728
    %v1733 = vadd.f32 %v1219, %v1729
    %v1734 = vxor.u32 %v1732, 2147483648
    %v1735 = vxor.u32 %v1733, 2147483648
    %v1736 = vmul.f32 %v1734, 1.442695
    %v1737 = vpow.pop %v1736
    %v1738 = vmul.f32 %v1735, 1.442695
    %v1739 = vpow.pop %v1738
    %v1740 = vadd.f32 %v1737, 1.0
    %v1741 = vadd.f32 %v1739, 1.0
    %v1742 = vrcp.pop %v1740
    %v1743 = vmul.f32 %v1740, %v1742
    %v1744 = vsub.f32 1.0, %v1743
    %v1745 = vmul.f32 %v1742, %v1744
    %v1746 = vadd.f32 %v1742, %v1745
    %vm1747 = vweird.f32 %v1740
    %vm1748 = vweird.f32 %v1742
    %vm1749 = vmor %vm1747, %vm1748
    %v1750 = vsel %vm1749, %v1742, %v1746
    %v1751 = vand.u32 2147483647, %v1740
    %vm1752 = vcmp.eq.f32.partialorder %v1751, 8.507059e+37
    %v1753 = vand.u32 %v1740, 2147483648
    %v1754 = vor.u32 1.1754944e-38, %v1753
    %v1755 = vsel %vm1752, %v1754, %v1750
    %v1756 = vmul.f32 1.0, %v1755
    %v1757 = vrcp.pop %v1741
    %v1758 = vmul.f32 %v1741, %v1757
    %v1759 = vsub.f32 1.0, %v1758
    %v1760 = vmul.f32 %v1757, %v1759
    %v1761 = vadd.f32 %v1757, %v1760
    %vm1762 = vweird.f32 %v1741
    %vm1763 = vweird.f32 %v1757
    %vm1764 = vmor %vm1762, %vm1763
    %v1765 = vsel %vm1764, %v1757, %v1761
    %v1766 = vand.u32 2147483647, %v1741
    %vm1767 = vcmp.eq.f32.partialorder %v1766, 8.507059e+37
    %v1768 = vand.u32 %v1741, 2147483648
    %v1769 = vor.u32 1.1754944e-38, %v1768
    %v1770 = vsel %vm1767, %v1769, %v1765
    %v1771 = vmul.f32 1.0, %v1770
    %v1772 = vtanh.pop %v1732
    %v1773 = vtanh.pop %v1733
    %v1776 = vrot.slane %v1676, 7
    %v1777 = vrot.slane %v1677, 7
    %v1780 = vmul.f32 %v1756, %v1776
    %v1781 = vmul.f32 %v1771, %v1777
    %1784 = vrot.lane.b32.xlu0 %v1772, 64
    %v1785 = vpop.permute.xlu0 %1784
    %1786 = vrot.lane.b32.xlu0 %v1773, 64
    %v1787 = vpop.permute.xlu0 %1786
    %v1790 = vmul.f32 %v1756, %v1785
    %v1791 = vmul.f32 %v1771, %v1787
    %1794 = vrot.lane.b32.xlu0 %v1790, 32
    %v1795 = vpop.permute.xlu0 %1794
    %1796 = vrot.lane.b32.xlu0 %v1791, 32
    %v1797 = vpop.permute.xlu0 %1796
    %v1800 = vadd.f32 %v1780, %v1795
    %v1801 = vadd.f32 %v1781, %v1797
    %v1802 = vtanh.pop %v1800
    %v1803 = vtanh.pop %v1801
    %1806 = vrot.lane.b32.xlu0 %v1802, 64
    %v1807 = vpop.permute.xlu0 %1806
    %1808 = vrot.lane.b32.xlu0 %v1803, 64
    %v1809 = vpop.permute.xlu0 %1808
    %v1812 = vmul.f32 %v1756, %v1807
    %v1813 = vmul.f32 %v1771, %v1809
    %1816 = vrot.lane.b32.xlu0 %v1812, 32
    %v1817 = vpop.permute.xlu0 %1816
    %1818 = vrot.lane.b32.xlu0 %v1813, 32
    %v1819 = vpop.permute.xlu0 %1818
    %1822 = vst.msk [vmem:[#allocation2] sm:$0x10] %vm800, %v1817
    %1823 = vst.msk [vmem:[#allocation2 + $0x8] sm:$0x10] %vm800, %v1819
    %v1824 = vrot.slane %v1812, 4
    %v1825 = vrot.slane %v1813, 3
    %v1826 = vsel %vm306, %v1825, %v1824
    %1827 = vrot.lane.b32.xlu0 %v1826, 32
    %v1828 = vpop.permute.xlu0 %1827
    %v1829 = vsel %vm190, %v1828, 0
    %1831 = vmatpush.msra.mxu0 0.0
    %1832 = vmatpush.msra.mxu0 0.0
    %1833 = vmatpush.msra.mxu0 0.0
    %1834 = vmatpush.msra.mxu0 0.0
    %1835 = vmatpush.msra.mxu0 0.0
    %1836 = vmatpush.msra.mxu0 0.0
    %1837 = vmatpush.msra.mxu0 0.0
    %1838 = vmatpush.msra.mxu0 0.0
    %1839 = vmatpush.msra.mxu0 0.0
    %1840 = vmatpush.msra.mxu0 0.0
    %1841 = vmatpush.msra.mxu0 0.0
    %1842 = vmatpush.msra.mxu0 0.0
    %1843 = vmatpush.msra.mxu0 %v1183
    %1844 = vmatpush.msra.mxu0 %v1182
    %1845 = vmatpush.msra.mxu0 %v1181
    %1846 = vmatpush.msra.mxu0 %v1180
    %1847 = vmatmul.f32.gmra.mxu0 %v1829
    %v1848 = vpop.f32.mrf.mxu0
    %v1849 = vadd.f32 0.0, %v1848
    %1850 = vdwg.mxu0
    %v1852 = vrot.slane %v1849, 3
    %v1853 = vrot.slane %v1849, 4
    %v1856 = vadd.f32 %v1216, %v1852
    %v1857 = vadd.f32 %v1219, %v1853
    %v1858 = vxor.u32 %v1856, 2147483648
    %v1859 = vxor.u32 %v1857, 2147483648
    %v1860 = vmul.f32 %v1858, 1.442695
    %v1861 = vpow.pop %v1860
    %v1862 = vmul.f32 %v1859, 1.442695
    %v1863 = vpow.pop %v1862
    %v1864 = vadd.f32 %v1861, 1.0
    %v1865 = vadd.f32 %v1863, 1.0
    %v1866 = vrcp.pop %v1864
    %v1867 = vmul.f32 %v1864, %v1866
    %v1868 = vsub.f32 1.0, %v1867
    %v1869 = vmul.f32 %v1866, %v1868
    %v1870 = vadd.f32 %v1866, %v1869
    %vm1871 = vweird.f32 %v1864
    %vm1872 = vweird.f32 %v1866
    %vm1873 = vmor %vm1871, %vm1872
    %v1874 = vsel %vm1873, %v1866, %v1870
    %v1875 = vand.u32 2147483647, %v1864
    %vm1876 = vcmp.eq.f32.partialorder %v1875, 8.507059e+37
    %v1877 = vand.u32 %v1864, 2147483648
    %v1878 = vor.u32 1.1754944e-38, %v1877
    %v1879 = vsel %vm1876, %v1878, %v1874
    %v1880 = vmul.f32 1.0, %v1879
    %v1881 = vrcp.pop %v1865
    %v1882 = vmul.f32 %v1865, %v1881
    %v1883 = vsub.f32 1.0, %v1882
    %v1884 = vmul.f32 %v1881, %v1883
    %v1885 = vadd.f32 %v1881, %v1884
    %vm1886 = vweird.f32 %v1865
    %vm1887 = vweird.f32 %v1881
    %vm1888 = vmor %vm1886, %vm1887
    %v1889 = vsel %vm1888, %v1881, %v1885
    %v1890 = vand.u32 2147483647, %v1865
    %vm1891 = vcmp.eq.f32.partialorder %v1890, 8.507059e+37
    %v1892 = vand.u32 %v1865, 2147483648
    %v1893 = vor.u32 1.1754944e-38, %v1892
    %v1894 = vsel %vm1891, %v1893, %v1889
    %v1895 = vmul.f32 1.0, %v1894
    %v1896 = vtanh.pop %v1856
    %v1897 = vtanh.pop %v1857
    %v1900 = vrot.slane %v1800, 7
    %v1901 = vrot.slane %v1801, 7
    %v1904 = vmul.f32 %v1880, %v1900
    %v1905 = vmul.f32 %v1895, %v1901
    %1908 = vrot.lane.b32.xlu0 %v1896, 64
    %v1909 = vpop.permute.xlu0 %1908
    %1910 = vrot.lane.b32.xlu0 %v1897, 64
    %v1911 = vpop.permute.xlu0 %1910
    %v1914 = vmul.f32 %v1880, %v1909
    %v1915 = vmul.f32 %v1895, %v1911
    %1918 = vrot.lane.b32.xlu0 %v1914, 32
    %v1919 = vpop.permute.xlu0 %1918
    %1920 = vrot.lane.b32.xlu0 %v1915, 32
    %v1921 = vpop.permute.xlu0 %1920
    %v1924 = vadd.f32 %v1904, %v1919
    %v1925 = vadd.f32 %v1905, %v1921
    %v1926 = vtanh.pop %v1924
    %v1927 = vtanh.pop %v1925
    %1930 = vrot.lane.b32.xlu0 %v1926, 64
    %v1931 = vpop.permute.xlu0 %1930
    %1932 = vrot.lane.b32.xlu0 %v1927, 64
    %v1933 = vpop.permute.xlu0 %1932
    %v1936 = vmul.f32 %v1880, %v1931
    %v1937 = vmul.f32 %v1895, %v1933
    %1940 = vrot.lane.b32.xlu0 %v1936, 32
    %v1941 = vpop.permute.xlu0 %1940
    %1942 = vrot.lane.b32.xlu0 %v1937, 32
    %v1943 = vpop.permute.xlu0 %1942
    %1946 = vst.msk [vmem:[#allocation2] sm:$0x20] %vm925, %v1941
    %1947 = vst.msk [vmem:[#allocation2 + $0x8] sm:$0x20] %vm925, %v1943
    %v1948 = vrot.slane %v1936, 5
    %v1949 = vrot.slane %v1937, 4
    %v1950 = vsel %vm306, %v1949, %v1948
    %1951 = vrot.lane.b32.xlu0 %v1950, 32
    %v1952 = vpop.permute.xlu0 %1951
    %v1953 = vsel %vm190, %v1952, 0
    %1955 = vmatpush.msra.mxu0 0.0
    %1956 = vmatpush.msra.mxu0 0.0
    %1957 = vmatpush.msra.mxu0 0.0
    %1958 = vmatpush.msra.mxu0 0.0
    %1959 = vmatpush.msra.mxu0 0.0
    %1960 = vmatpush.msra.mxu0 0.0
    %1961 = vmatpush.msra.mxu0 0.0
    %1962 = vmatpush.msra.mxu0 0.0
    %1963 = vmatpush.msra.mxu0 0.0
    %1964 = vmatpush.msra.mxu0 0.0
    %1965 = vmatpush.msra.mxu0 0.0
    %1966 = vmatpush.msra.mxu0 0.0
    %1967 = vmatpush.msra.mxu0 %v1183
    %1968 = vmatpush.msra.mxu0 %v1182
    %1969 = vmatpush.msra.mxu0 %v1181
    %1970 = vmatpush.msra.mxu0 %v1180
    %1971 = vmatmul.f32.gmra.mxu0 %v1953
    %v1972 = vpop.f32.mrf.mxu0
    %v1973 = vadd.f32 0.0, %v1972
    %1974 = vdwg.mxu0
    %v1976 = vrot.slane %v1973, 2
    %v1977 = vrot.slane %v1973, 3
    %v1980 = vadd.f32 %v1216, %v1976
    %v1981 = vadd.f32 %v1219, %v1977
    %v1982 = vxor.u32 %v1980, 2147483648
    %v1983 = vxor.u32 %v1981, 2147483648
    %v1984 = vmul.f32 %v1982, 1.442695
    %v1985 = vpow.pop %v1984
    %v1986 = vmul.f32 %v1983, 1.442695
    %v1987 = vpow.pop %v1986
    %v1988 = vadd.f32 %v1985, 1.0
    %v1989 = vadd.f32 %v1987, 1.0
    %v1990 = vrcp.pop %v1988
    %v1991 = vmul.f32 %v1988, %v1990
    %v1992 = vsub.f32 1.0, %v1991
    %v1993 = vmul.f32 %v1990, %v1992
    %v1994 = vadd.f32 %v1990, %v1993
    %vm1995 = vweird.f32 %v1988
    %vm1996 = vweird.f32 %v1990
    %vm1997 = vmor %vm1995, %vm1996
    %v1998 = vsel %vm1997, %v1990, %v1994
    %v1999 = vand.u32 2147483647, %v1988
    %vm2000 = vcmp.eq.f32.partialorder %v1999, 8.507059e+37
    %v2001 = vand.u32 %v1988, 2147483648
    %v2002 = vor.u32 1.1754944e-38, %v2001
    %v2003 = vsel %vm2000, %v2002, %v1998
    %v2004 = vmul.f32 1.0, %v2003
    %v2005 = vrcp.pop %v1989
    %v2006 = vmul.f32 %v1989, %v2005
    %v2007 = vsub.f32 1.0, %v2006
    %v2008 = vmul.f32 %v2005, %v2007
    %v2009 = vadd.f32 %v2005, %v2008
    %vm2010 = vweird.f32 %v1989
    %vm2011 = vweird.f32 %v2005
    %vm2012 = vmor %vm2010, %vm2011
    %v2013 = vsel %vm2012, %v2005, %v2009
    %v2014 = vand.u32 2147483647, %v1989
    %vm2015 = vcmp.eq.f32.partialorder %v2014, 8.507059e+37
    %v2016 = vand.u32 %v1989, 2147483648
    %v2017 = vor.u32 1.1754944e-38, %v2016
    %v2018 = vsel %vm2015, %v2017, %v2013
    %v2019 = vmul.f32 1.0, %v2018
    %v2020 = vtanh.pop %v1980
    %v2021 = vtanh.pop %v1981
    %v2024 = vrot.slane %v1924, 7
    %v2025 = vrot.slane %v1925, 7
    %v2028 = vmul.f32 %v2004, %v2024
    %v2029 = vmul.f32 %v2019, %v2025
    %2032 = vrot.lane.b32.xlu0 %v2020, 64
    %v2033 = vpop.permute.xlu0 %2032
    %2034 = vrot.lane.b32.xlu0 %v2021, 64
    %v2035 = vpop.permute.xlu0 %2034
    %v2038 = vmul.f32 %v2004, %v2033
    %v2039 = vmul.f32 %v2019, %v2035
    %2042 = vrot.lane.b32.xlu0 %v2038, 32
    %v2043 = vpop.permute.xlu0 %2042
    %2044 = vrot.lane.b32.xlu0 %v2039, 32
    %v2045 = vpop.permute.xlu0 %2044
    %v2048 = vadd.f32 %v2028, %v2043
    %v2049 = vadd.f32 %v2029, %v2045
    %v2050 = vtanh.pop %v2048
    %v2051 = vtanh.pop %v2049
    %2054 = vrot.lane.b32.xlu0 %v2050, 64
    %v2055 = vpop.permute.xlu0 %2054
    %2056 = vrot.lane.b32.xlu0 %v2051, 64
    %v2057 = vpop.permute.xlu0 %2056
    %v2060 = vmul.f32 %v2004, %v2055
    %v2061 = vmul.f32 %v2019, %v2057
    %2064 = vrot.lane.b32.xlu0 %v2060, 32
    %v2065 = vpop.permute.xlu0 %2064
    %2066 = vrot.lane.b32.xlu0 %v2061, 32
    %v2067 = vpop.permute.xlu0 %2066
    %2070 = vst.msk [vmem:[#allocation2] sm:$0x40] %vm1050, %v2065
    %2071 = vst.msk [vmem:[#allocation2 + $0x8] sm:$0x40] %vm1050, %v2067
    %v2072 = vrot.slane %v2060, 6
    %v2073 = vrot.slane %v2061, 5
    %v2074 = vsel %vm306, %v2073, %v2072
    %2075 = vrot.lane.b32.xlu0 %v2074, 32
    %v2076 = vpop.permute.xlu0 %2075
    %v2077 = vsel %vm190, %v2076, 0
    %2079 = vmatpush.msra.mxu0 0.0
    %2080 = vmatpush.msra.mxu0 0.0
    %2081 = vmatpush.msra.mxu0 0.0
    %2082 = vmatpush.msra.mxu0 0.0
    %2083 = vmatpush.msra.mxu0 0.0
    %2084 = vmatpush.msra.mxu0 0.0
    %2085 = vmatpush.msra.mxu0 0.0
    %2086 = vmatpush.msra.mxu0 0.0
    %2087 = vmatpush.msra.mxu0 0.0
    %2088 = vmatpush.msra.mxu0 0.0
    %2089 = vmatpush.msra.mxu0 0.0
    %2090 = vmatpush.msra.mxu0 0.0
    %2091 = vmatpush.msra.mxu0 %v1183
    %2092 = vmatpush.msra.mxu0 %v1182
    %2093 = vmatpush.msra.mxu0 %v1181
    %2094 = vmatpush.msra.mxu0 %v1180
    %2095 = vmatmul.f32.gmra.mxu0 %v2077
    %v2096 = vpop.f32.mrf.mxu0
    %v2097 = vadd.f32 0.0, %v2096
    %2098 = vdwg.mxu0
    %v2100 = vrot.slane %v2097, 1
    %v2101 = vrot.slane %v2097, 2
    %v2104 = vadd.f32 %v1216, %v2100
    %v2105 = vadd.f32 %v1219, %v2101
    %v2106 = vxor.u32 %v2104, 2147483648
    %v2107 = vxor.u32 %v2105, 2147483648
    %v2108 = vmul.f32 %v2106, 1.442695
    %v2109 = vpow.pop %v2108
    %v2110 = vmul.f32 %v2107, 1.442695
    %v2111 = vpow.pop %v2110
    %v2112 = vadd.f32 %v2109, 1.0
    %v2113 = vadd.f32 %v2111, 1.0
    %v2114 = vrcp.pop %v2112
    %v2115 = vmul.f32 %v2112, %v2114
    %v2116 = vsub.f32 1.0, %v2115
    %v2117 = vmul.f32 %v2114, %v2116
    %v2118 = vadd.f32 %v2114, %v2117
    %vm2119 = vweird.f32 %v2112
    %vm2120 = vweird.f32 %v2114
    %vm2121 = vmor %vm2119, %vm2120
    %v2122 = vsel %vm2121, %v2114, %v2118
    %v2123 = vand.u32 2147483647, %v2112
    %vm2124 = vcmp.eq.f32.partialorder %v2123, 8.507059e+37
    %v2125 = vand.u32 %v2112, 2147483648
    %v2126 = vor.u32 1.1754944e-38, %v2125
    %v2127 = vsel %vm2124, %v2126, %v2122
    %v2128 = vmul.f32 1.0, %v2127
    %v2129 = vrcp.pop %v2113
    %v2130 = vmul.f32 %v2113, %v2129
    %v2131 = vsub.f32 1.0, %v2130
    %v2132 = vmul.f32 %v2129, %v2131
    %v2133 = vadd.f32 %v2129, %v2132
    %vm2134 = vweird.f32 %v2113
    %vm2135 = vweird.f32 %v2129
    %vm2136 = vmor %vm2134, %vm2135
    %v2137 = vsel %vm2136, %v2129, %v2133
    %v2138 = vand.u32 2147483647, %v2113
    %vm2139 = vcmp.eq.f32.partialorder %v2138, 8.507059e+37
    %v2140 = vand.u32 %v2113, 2147483648
    %v2141 = vor.u32 1.1754944e-38, %v2140
    %v2142 = vsel %vm2139, %v2141, %v2137
    %v2143 = vmul.f32 1.0, %v2142
    %v2144 = vtanh.pop %v2104
    %v2145 = vtanh.pop %v2105
    %v2148 = vrot.slane %v2048, 7
    %v2149 = vrot.slane %v2049, 7
    %v2152 = vmul.f32 %v2128, %v2148
    %v2153 = vmul.f32 %v2143, %v2149
    %2156 = vrot.lane.b32.xlu0 %v2144, 64
    %v2157 = vpop.permute.xlu0 %2156
    %2158 = vrot.lane.b32.xlu0 %v2145, 64
    %v2159 = vpop.permute.xlu0 %2158
    %v2162 = vmul.f32 %v2128, %v2157
    %v2163 = vmul.f32 %v2143, %v2159
    %2166 = vrot.lane.b32.xlu0 %v2162, 32
    %v2167 = vpop.permute.xlu0 %2166
    %2168 = vrot.lane.b32.xlu0 %v2163, 32
    %v2169 = vpop.permute.xlu0 %2168
    %v2172 = vadd.f32 %v2152, %v2167
    %v2173 = vadd.f32 %v2153, %v2169
    %v2174 = vtanh.pop %v2172
    %v2175 = vtanh.pop %v2173
    %2178 = vrot.lane.b32.xlu0 %v2174, 64
    %v2179 = vpop.permute.xlu0 %2178
    %2180 = vrot.lane.b32.xlu0 %v2175, 64
    %v2181 = vpop.permute.xlu0 %2180
    %v2184 = vmul.f32 %v2128, %v2179
    %v2185 = vmul.f32 %v2143, %v2181
    %2188 = vrot.lane.b32.xlu0 %v2184, 32
    %v2189 = vpop.permute.xlu0 %2188
    %2190 = vrot.lane.b32.xlu0 %v2185, 32
    %v2191 = vpop.permute.xlu0 %2190
    %2194 = vst.msk [vmem:[#allocation2] sm:$0x80] %vm1175, %v2189
    %2195 = vst.msk [vmem:[#allocation2 + $0x8] sm:$0x80] %vm1175, %v2191
    %v2196 = vld [vmem:[#allocation2] sm:$0xff]
    %v2197 = vld [vmem:[#allocation2 + $0x8] sm:$0xff]
    %v2198 = vmax.f32 %v2196, 0.0
    %v2199 = vmax.f32 %v2197, 0.0
    %v2200 = vld [vmem:[#allocation14] sm:$0xff]
    %v2201 = vld [vmem:[#allocation14 + $0x8] sm:$0xff]
    %v2202 = vld [vmem:[#allocation14 + $0x10] sm:$0xff]
    %v2203 = vld [vmem:[#allocation14 + $0x18] sm:$0xff]
    %v2204 = vld [vmem:[#allocation12] sm:$0xff]
    %v2205 = vld [vmem:[#allocation12 + $0x8] sm:$0xff]
    %v2206 = vld [vmem:[#allocation12 + $0x10] sm:$0xff]
    %v2207 = vld [vmem:[#allocation12 + $0x18] sm:$0xff]
    %v2208 = vld [vmem:[%s9] sm:$0x1]
    %v2210 = vperm.slane %v2208, 0
    %v2213 = vsel %vm190, %v2198, 0
    %v2216 = vsel %vm190, %v2199, 0
    %2218 = vmatpush.msra.mxu0 0.0
    %2219 = vmatpush.msra.mxu0 0.0
    %2220 = vmatpush.msra.mxu0 0.0
    %2221 = vmatpush.msra.mxu0 0.0
    %2222 = vmatpush.msra.mxu0 0.0
    %2223 = vmatpush.msra.mxu0 0.0
    %2224 = vmatpush.msra.mxu0 0.0
    %2225 = vmatpush.msra.mxu0 0.0
    %2226 = vmatpush.msra.mxu0 0.0
    %2227 = vmatpush.msra.mxu0 0.0
    %2228 = vmatpush.msra.mxu0 0.0
    %2229 = vmatpush.msra.mxu0 0.0
    %2230 = vmatpush.msra.mxu0 %v2207
    %2231 = vmatpush.msra.mxu0 %v2206
    %2232 = vmatpush.msra.mxu0 %v2205
    %2233 = vmatpush.msra.mxu0 %v2204
    %2234 = vmatmul.f32.gmra.mxu0 %v2213
    %v2235 = vpop.f32.mrf.mxu0
    %v2236 = vadd.f32 %v2210, %v2235
    %2237 = vmatmul.f32.gmra.mxu0 %v2216
    %v2238 = vpop.f32.mrf.mxu0
    %v2239 = vadd.f32 %v2210, %v2238
    %2240 = vdwg.mxu0
    %2241 = vmatpush.msra.mxu0 0.0
    %2242 = vmatpush.msra.mxu0 0.0
    %2243 = vmatpush.msra.mxu0 0.0
    %2244 = vmatpush.msra.mxu0 0.0
    %2245 = vmatpush.msra.mxu0 0.0
    %2246 = vmatpush.msra.mxu0 0.0
    %2247 = vmatpush.msra.mxu0 0.0
    %2248 = vmatpush.msra.mxu0 0.0
    %2249 = vmatpush.msra.mxu0 0.0
    %2250 = vmatpush.msra.mxu0 0.0
    %2251 = vmatpush.msra.mxu0 0.0
    %2252 = vmatpush.msra.mxu0 0.0
    %2253 = vmatpush.msra.mxu0 %v2203
    %2254 = vmatpush.msra.mxu0 %v2202
    %2255 = vmatpush.msra.mxu0 %v2201
    %2256 = vmatpush.msra.mxu0 %v2200
    %2257 = vmatmul.f32.gmra.mxu0 %v192
    %v2258 = vpop.f32.mrf.mxu0
    %v2259 = vadd.f32 0.0, %v2258
    %2260 = vdwg.mxu0
    %v2262 = vrot.slane %v2259, 1
    %v2265 = vadd.f32 %v2236, %v2259
    %v2266 = vadd.f32 %v2239, %v2262
    %v2267 = vxor.u32 %v2265, 2147483648
    %v2268 = vxor.u32 %v2266, 2147483648
    %v2269 = vmul.f32 %v2267, 1.442695
    %v2270 = vpow.pop %v2269
    %v2271 = vmul.f32 %v2268, 1.442695
    %v2272 = vpow.pop %v2271
    %v2273 = vadd.f32 %v2270, 1.0
    %v2274 = vadd.f32 %v2272, 1.0
    %v2275 = vrcp.pop %v2273
    %v2276 = vmul.f32 %v2273, %v2275
    %v2277 = vsub.f32 1.0, %v2276
    %v2278 = vmul.f32 %v2275, %v2277
    %v2279 = vadd.f32 %v2275, %v2278
    %vm2280 = vweird.f32 %v2273
    %vm2281 = vweird.f32 %v2275
    %vm2282 = vmor %vm2280, %vm2281
    %v2283 = vsel %vm2282, %v2275, %v2279
    %v2284 = vand.u32 2147483647, %v2273
    %vm2285 = vcmp.eq.f32.partialorder %v2284, 8.507059e+37
    %v2286 = vand.u32 %v2273, 2147483648
    %v2287 = vor.u32 1.1754944e-38, %v2286
    %v2288 = vsel %vm2285, %v2287, %v2283
    %v2289 = vmul.f32 1.0, %v2288
    %v2290 = vrcp.pop %v2274
    %v2291 = vmul.f32 %v2274, %v2290
    %v2292 = vsub.f32 1.0, %v2291
    %v2293 = vmul.f32 %v2290, %v2292
    %v2294 = vadd.f32 %v2290, %v2293
    %vm2295 = vweird.f32 %v2274
    %vm2296 = vweird.f32 %v2290
    %vm2297 = vmor %vm2295, %vm2296
    %v2298 = vsel %vm2297, %v2290, %v2294
    %v2299 = vand.u32 2147483647, %v2274
    %vm2300 = vcmp.eq.f32.partialorder %v2299, 8.507059e+37
    %v2301 = vand.u32 %v2274, 2147483648
    %v2302 = vor.u32 1.1754944e-38, %v2301
    %v2303 = vsel %vm2300, %v2302, %v2298
    %v2304 = vmul.f32 1.0, %v2303
    %v2305 = vtanh.pop %v2265
    %v2306 = vtanh.pop %v2266
    %v2307 = vmul.f32 %v2289, 0.0
    %v2308 = vmul.f32 %v2304, 0.0
    %2311 = vrot.lane.b32.xlu0 %v2305, 64
    %v2312 = vpop.permute.xlu0 %2311
    %2313 = vrot.lane.b32.xlu0 %v2306, 64
    %v2314 = vpop.permute.xlu0 %2313
    %v2317 = vmul.f32 %v2289, %v2312
    %v2318 = vmul.f32 %v2304, %v2314
    %2321 = vrot.lane.b32.xlu0 %v2317, 32
    %v2322 = vpop.permute.xlu0 %2321
    %2323 = vrot.lane.b32.xlu0 %v2318, 32
    %v2324 = vpop.permute.xlu0 %2323
    %v2327 = vadd.f32 %v2307, %v2322
    %v2328 = vadd.f32 %v2308, %v2324
    %v2329 = vtanh.pop %v2327
    %v2330 = vtanh.pop %v2328
    %2333 = vrot.lane.b32.xlu0 %v2329, 64
    %v2334 = vpop.permute.xlu0 %2333
    %2335 = vrot.lane.b32.xlu0 %v2330, 64
    %v2336 = vpop.permute.xlu0 %2335
    %v2339 = vmul.f32 %v2289, %v2334
    %v2340 = vmul.f32 %v2304, %v2336
    %2343 = vrot.lane.b32.xlu0 %v2339, 32
    %v2344 = vpop.permute.xlu0 %2343
    %2345 = vrot.lane.b32.xlu0 %v2340, 32
    %v2346 = vpop.permute.xlu0 %2345
    %2349 = vst.msk [vmem:[#allocation15] sm:$0x1] %vm302, %v2344
    %2350 = vst.msk [vmem:[#allocation15 + $0x8] sm:$0x1] %vm302, %v2346
    %v2351 = vrot.slane %v2340, 7
    %v2352 = vsel %vm306, %v2351, %v2339
    %2353 = vrot.lane.b32.xlu0 %v2352, 32
    %v2354 = vpop.permute.xlu0 %2353
    %v2355 = vsel %vm190, %v2354, 0
    %2357 = vmatpush.msra.mxu0 0.0
    %2358 = vmatpush.msra.mxu0 0.0
    %2359 = vmatpush.msra.mxu0 0.0
    %2360 = vmatpush.msra.mxu0 0.0
    %2361 = vmatpush.msra.mxu0 0.0
    %2362 = vmatpush.msra.mxu0 0.0
    %2363 = vmatpush.msra.mxu0 0.0
    %2364 = vmatpush.msra.mxu0 0.0
    %2365 = vmatpush.msra.mxu0 0.0
    %2366 = vmatpush.msra.mxu0 0.0
    %2367 = vmatpush.msra.mxu0 0.0
    %2368 = vmatpush.msra.mxu0 0.0
    %2369 = vmatpush.msra.mxu0 %v2203
    %2370 = vmatpush.msra.mxu0 %v2202
    %2371 = vmatpush.msra.mxu0 %v2201
    %2372 = vmatpush.msra.mxu0 %v2200
    %2373 = vmatmul.f32.gmra.mxu0 %v2355
    %v2374 = vpop.f32.mrf.mxu0
    %v2375 = vadd.f32 0.0, %v2374
    %2376 = vdwg.mxu0
    %v2378 = vrot.slane %v2375, 7
    %v2381 = vadd.f32 %v2236, %v2378
    %v2382 = vadd.f32 %v2239, %v2375
    %v2383 = vxor.u32 %v2381, 2147483648
    %v2384 = vxor.u32 %v2382, 2147483648
    %v2385 = vmul.f32 %v2383, 1.442695
    %v2386 = vpow.pop %v2385
    %v2387 = vmul.f32 %v2384, 1.442695
    %v2388 = vpow.pop %v2387
    %v2389 = vadd.f32 %v2386, 1.0
    %v2390 = vadd.f32 %v2388, 1.0
    %v2391 = vrcp.pop %v2389
    %v2392 = vmul.f32 %v2389, %v2391
    %v2393 = vsub.f32 1.0, %v2392
    %v2394 = vmul.f32 %v2391, %v2393
    %v2395 = vadd.f32 %v2391, %v2394
    %vm2396 = vweird.f32 %v2389
    %vm2397 = vweird.f32 %v2391
    %vm2398 = vmor %vm2396, %vm2397
    %v2399 = vsel %vm2398, %v2391, %v2395
    %v2400 = vand.u32 2147483647, %v2389
    %vm2401 = vcmp.eq.f32.partialorder %v2400, 8.507059e+37
    %v2402 = vand.u32 %v2389, 2147483648
    %v2403 = vor.u32 1.1754944e-38, %v2402
    %v2404 = vsel %vm2401, %v2403, %v2399
    %v2405 = vmul.f32 1.0, %v2404
    %v2406 = vrcp.pop %v2390
    %v2407 = vmul.f32 %v2390, %v2406
    %v2408 = vsub.f32 1.0, %v2407
    %v2409 = vmul.f32 %v2406, %v2408
    %v2410 = vadd.f32 %v2406, %v2409
    %vm2411 = vweird.f32 %v2390
    %vm2412 = vweird.f32 %v2406
    %vm2413 = vmor %vm2411, %vm2412
    %v2414 = vsel %vm2413, %v2406, %v2410
    %v2415 = vand.u32 2147483647, %v2390
    %vm2416 = vcmp.eq.f32.partialorder %v2415, 8.507059e+37
    %v2417 = vand.u32 %v2390, 2147483648
    %v2418 = vor.u32 1.1754944e-38, %v2417
    %v2419 = vsel %vm2416, %v2418, %v2414
    %v2420 = vmul.f32 1.0, %v2419
    %v2421 = vtanh.pop %v2381
    %v2422 = vtanh.pop %v2382
    %v2425 = vrot.slane %v2327, 7
    %v2426 = vrot.slane %v2328, 7
    %v2429 = vmul.f32 %v2405, %v2425
    %v2430 = vmul.f32 %v2420, %v2426
    %2433 = vrot.lane.b32.xlu0 %v2421, 64
    %v2434 = vpop.permute.xlu0 %2433
    %2435 = vrot.lane.b32.xlu0 %v2422, 64
    %v2436 = vpop.permute.xlu0 %2435
    %v2439 = vmul.f32 %v2405, %v2434
    %v2440 = vmul.f32 %v2420, %v2436
    %2443 = vrot.lane.b32.xlu0 %v2439, 32
    %v2444 = vpop.permute.xlu0 %2443
    %2445 = vrot.lane.b32.xlu0 %v2440, 32
    %v2446 = vpop.permute.xlu0 %2445
    %v2449 = vadd.f32 %v2429, %v2444
    %v2450 = vadd.f32 %v2430, %v2446
    %v2451 = vtanh.pop %v2449
    %v2452 = vtanh.pop %v2450
    %2455 = vrot.lane.b32.xlu0 %v2451, 64
    %v2456 = vpop.permute.xlu0 %2455
    %2457 = vrot.lane.b32.xlu0 %v2452, 64
    %v2458 = vpop.permute.xlu0 %2457
    %v2461 = vmul.f32 %v2405, %v2456
    %v2462 = vmul.f32 %v2420, %v2458
    %2465 = vrot.lane.b32.xlu0 %v2461, 32
    %v2466 = vpop.permute.xlu0 %2465
    %2467 = vrot.lane.b32.xlu0 %v2462, 32
    %v2468 = vpop.permute.xlu0 %2467
    %2471 = vst.msk [vmem:[#allocation15] sm:$0x2] %vm426, %v2466
    %2472 = vst.msk [vmem:[#allocation15 + $0x8] sm:$0x2] %vm426, %v2468
    %v2473 = vrot.slane %v2461, 1
    %v2474 = vsel %vm306, %v2462, %v2473
    %2475 = vrot.lane.b32.xlu0 %v2474, 32
    %v2476 = vpop.permute.xlu0 %2475
    %v2477 = vsel %vm190, %v2476, 0
    %2479 = vmatpush.msra.mxu0 0.0
    %2480 = vmatpush.msra.mxu0 0.0
    %2481 = vmatpush.msra.mxu0 0.0
    %2482 = vmatpush.msra.mxu0 0.0
    %2483 = vmatpush.msra.mxu0 0.0
    %2484 = vmatpush.msra.mxu0 0.0
    %2485 = vmatpush.msra.mxu0 0.0
    %2486 = vmatpush.msra.mxu0 0.0
    %2487 = vmatpush.msra.mxu0 0.0
    %2488 = vmatpush.msra.mxu0 0.0
    %2489 = vmatpush.msra.mxu0 0.0
    %2490 = vmatpush.msra.mxu0 0.0
    %2491 = vmatpush.msra.mxu0 %v2203
    %2492 = vmatpush.msra.mxu0 %v2202
    %2493 = vmatpush.msra.mxu0 %v2201
    %2494 = vmatpush.msra.mxu0 %v2200
    %2495 = vmatmul.f32.gmra.mxu0 %v2477
    %v2496 = vpop.f32.mrf.mxu0
    %v2497 = vadd.f32 0.0, %v2496
    %2498 = vdwg.mxu0
    %v2500 = vrot.slane %v2497, 6
    %v2501 = vrot.slane %v2497, 7
    %v2504 = vadd.f32 %v2236, %v2500
    %v2505 = vadd.f32 %v2239, %v2501
    %v2506 = vxor.u32 %v2504, 2147483648
    %v2507 = vxor.u32 %v2505, 2147483648
    %v2508 = vmul.f32 %v2506, 1.442695
    %v2509 = vpow.pop %v2508
    %v2510 = vmul.f32 %v2507, 1.442695
    %v2511 = vpow.pop %v2510
    %v2512 = vadd.f32 %v2509, 1.0
    %v2513 = vadd.f32 %v2511, 1.0
    %v2514 = vrcp.pop %v2512
    %v2515 = vmul.f32 %v2512, %v2514
    %v2516 = vsub.f32 1.0, %v2515
    %v2517 = vmul.f32 %v2514, %v2516
    %v2518 = vadd.f32 %v2514, %v2517
    %vm2519 = vweird.f32 %v2512
    %vm2520 = vweird.f32 %v2514
    %vm2521 = vmor %vm2519, %vm2520
    %v2522 = vsel %vm2521, %v2514, %v2518
    %v2523 = vand.u32 2147483647, %v2512
    %vm2524 = vcmp.eq.f32.partialorder %v2523, 8.507059e+37
    %v2525 = vand.u32 %v2512, 2147483648
    %v2526 = vor.u32 1.1754944e-38, %v2525
    %v2527 = vsel %vm2524, %v2526, %v2522
    %v2528 = vmul.f32 1.0, %v2527
    %v2529 = vrcp.pop %v2513
    %v2530 = vmul.f32 %v2513, %v2529
    %v2531 = vsub.f32 1.0, %v2530
    %v2532 = vmul.f32 %v2529, %v2531
    %v2533 = vadd.f32 %v2529, %v2532
    %vm2534 = vweird.f32 %v2513
    %vm2535 = vweird.f32 %v2529
    %vm2536 = vmor %vm2534, %vm2535
    %v2537 = vsel %vm2536, %v2529, %v2533
    %v2538 = vand.u32 2147483647, %v2513
    %vm2539 = vcmp.eq.f32.partialorder %v2538, 8.507059e+37
    %v2540 = vand.u32 %v2513, 2147483648
    %v2541 = vor.u32 1.1754944e-38, %v2540
    %v2542 = vsel %vm2539, %v2541, %v2537
    %v2543 = vmul.f32 1.0, %v2542
    %v2544 = vtanh.pop %v2504
    %v2545 = vtanh.pop %v2505
    %v2548 = vrot.slane %v2449, 7
    %v2549 = vrot.slane %v2450, 7
    %v2552 = vmul.f32 %v2528, %v2548
    %v2553 = vmul.f32 %v2543, %v2549
    %2556 = vrot.lane.b32.xlu0 %v2544, 64
    %v2557 = vpop.permute.xlu0 %2556
    %2558 = vrot.lane.b32.xlu0 %v2545, 64
    %v2559 = vpop.permute.xlu0 %2558
    %v2562 = vmul.f32 %v2528, %v2557
    %v2563 = vmul.f32 %v2543, %v2559
    %2566 = vrot.lane.b32.xlu0 %v2562, 32
    %v2567 = vpop.permute.xlu0 %2566
    %2568 = vrot.lane.b32.xlu0 %v2563, 32
    %v2569 = vpop.permute.xlu0 %2568
    %v2572 = vadd.f32 %v2552, %v2567
    %v2573 = vadd.f32 %v2553, %v2569
    %v2574 = vtanh.pop %v2572
    %v2575 = vtanh.pop %v2573
    %2578 = vrot.lane.b32.xlu0 %v2574, 64
    %v2579 = vpop.permute.xlu0 %2578
    %2580 = vrot.lane.b32.xlu0 %v2575, 64
    %v2581 = vpop.permute.xlu0 %2580
    %v2584 = vmul.f32 %v2528, %v2579
    %v2585 = vmul.f32 %v2543, %v2581
    %2588 = vrot.lane.b32.xlu0 %v2584, 32
    %v2589 = vpop.permute.xlu0 %2588
    %2590 = vrot.lane.b32.xlu0 %v2585, 32
    %v2591 = vpop.permute.xlu0 %2590
    %2594 = vst.msk [vmem:[#allocation15] sm:$0x4] %vm550, %v2589
    %2595 = vst.msk [vmem:[#allocation15 + $0x8] sm:$0x4] %vm550, %v2591
    %v2596 = vrot.slane %v2584, 2
    %v2597 = vrot.slane %v2585, 1
    %v2598 = vsel %vm306, %v2597, %v2596
    %2599 = vrot.lane.b32.xlu0 %v2598, 32
    %v2600 = vpop.permute.xlu0 %2599
    %v2601 = vsel %vm190, %v2600, 0
    %2603 = vmatpush.msra.mxu0 0.0
    %2604 = vmatpush.msra.mxu0 0.0
    %2605 = vmatpush.msra.mxu0 0.0
    %2606 = vmatpush.msra.mxu0 0.0
    %2607 = vmatpush.msra.mxu0 0.0
    %2608 = vmatpush.msra.mxu0 0.0
    %2609 = vmatpush.msra.mxu0 0.0
    %2610 = vmatpush.msra.mxu0 0.0
    %2611 = vmatpush.msra.mxu0 0.0
    %2612 = vmatpush.msra.mxu0 0.0
    %2613 = vmatpush.msra.mxu0 0.0
    %2614 = vmatpush.msra.mxu0 0.0
    %2615 = vmatpush.msra.mxu0 %v2203
    %2616 = vmatpush.msra.mxu0 %v2202
    %2617 = vmatpush.msra.mxu0 %v2201
    %2618 = vmatpush.msra.mxu0 %v2200
    %2619 = vmatmul.f32.gmra.mxu0 %v2601
    %v2620 = vpop.f32.mrf.mxu0
    %v2621 = vadd.f32 0.0, %v2620
    %2622 = vdwg.mxu0
    %v2624 = vrot.slane %v2621, 5
    %v2625 = vrot.slane %v2621, 6
    %v2628 = vadd.f32 %v2236, %v2624
    %v2629 = vadd.f32 %v2239, %v2625
    %v2630 = vxor.u32 %v2628, 2147483648
    %v2631 = vxor.u32 %v2629, 2147483648
    %v2632 = vmul.f32 %v2630, 1.442695
    %v2633 = vpow.pop %v2632
    %v2634 = vmul.f32 %v2631, 1.442695
    %v2635 = vpow.pop %v2634
    %v2636 = vadd.f32 %v2633, 1.0
    %v2637 = vadd.f32 %v2635, 1.0
    %v2638 = vrcp.pop %v2636
    %v2639 = vmul.f32 %v2636, %v2638
    %v2640 = vsub.f32 1.0, %v2639
    %v2641 = vmul.f32 %v2638, %v2640
    %v2642 = vadd.f32 %v2638, %v2641
    %vm2643 = vweird.f32 %v2636
    %vm2644 = vweird.f32 %v2638
    %vm2645 = vmor %vm2643, %vm2644
    %v2646 = vsel %vm2645, %v2638, %v2642
    %v2647 = vand.u32 2147483647, %v2636
    %vm2648 = vcmp.eq.f32.partialorder %v2647, 8.507059e+37
    %v2649 = vand.u32 %v2636, 2147483648
    %v2650 = vor.u32 1.1754944e-38, %v2649
    %v2651 = vsel %vm2648, %v2650, %v2646
    %v2652 = vmul.f32 1.0, %v2651
    %v2653 = vrcp.pop %v2637
    %v2654 = vmul.f32 %v2637, %v2653
    %v2655 = vsub.f32 1.0, %v2654
    %v2656 = vmul.f32 %v2653, %v2655
    %v2657 = vadd.f32 %v2653, %v2656
    %vm2658 = vweird.f32 %v2637
    %vm2659 = vweird.f32 %v2653
    %vm2660 = vmor %vm2658, %vm2659
    %v2661 = vsel %vm2660, %v2653, %v2657
    %v2662 = vand.u32 2147483647, %v2637
    %vm2663 = vcmp.eq.f32.partialorder %v2662, 8.507059e+37
    %v2664 = vand.u32 %v2637, 2147483648
    %v2665 = vor.u32 1.1754944e-38, %v2664
    %v2666 = vsel %vm2663, %v2665, %v2661
    %v2667 = vmul.f32 1.0, %v2666
    %v2668 = vtanh.pop %v2628
    %v2669 = vtanh.pop %v2629
    %v2672 = vrot.slane %v2572, 7
    %v2673 = vrot.slane %v2573, 7
    %v2676 = vmul.f32 %v2652, %v2672
    %v2677 = vmul.f32 %v2667, %v2673
    %2680 = vrot.lane.b32.xlu0 %v2668, 64
    %v2681 = vpop.permute.xlu0 %2680
    %2682 = vrot.lane.b32.xlu0 %v2669, 64
    %v2683 = vpop.permute.xlu0 %2682
    %v2686 = vmul.f32 %v2652, %v2681
    %v2687 = vmul.f32 %v2667, %v2683
    %2690 = vrot.lane.b32.xlu0 %v2686, 32
    %v2691 = vpop.permute.xlu0 %2690
    %2692 = vrot.lane.b32.xlu0 %v2687, 32
    %v2693 = vpop.permute.xlu0 %2692
    %v2696 = vadd.f32 %v2676, %v2691
    %v2697 = vadd.f32 %v2677, %v2693
    %v2698 = vtanh.pop %v2696
    %v2699 = vtanh.pop %v2697
    %2702 = vrot.lane.b32.xlu0 %v2698, 64
    %v2703 = vpop.permute.xlu0 %2702
    %2704 = vrot.lane.b32.xlu0 %v2699, 64
    %v2705 = vpop.permute.xlu0 %2704
    %v2708 = vmul.f32 %v2652, %v2703
    %v2709 = vmul.f32 %v2667, %v2705
    %2712 = vrot.lane.b32.xlu0 %v2708, 32
    %v2713 = vpop.permute.xlu0 %2712
    %2714 = vrot.lane.b32.xlu0 %v2709, 32
    %v2715 = vpop.permute.xlu0 %2714
    %2718 = vst.msk [vmem:[#allocation15] sm:$0x8] %vm675, %v2713
    %2719 = vst.msk [vmem:[#allocation15 + $0x8] sm:$0x8] %vm675, %v2715
    %v2720 = vrot.slane %v2708, 3
    %v2721 = vrot.slane %v2709, 2
    %v2722 = vsel %vm306, %v2721, %v2720
    %2723 = vrot.lane.b32.xlu0 %v2722, 32
    %v2724 = vpop.permute.xlu0 %2723
    %v2725 = vsel %vm190, %v2724, 0
    %2727 = vmatpush.msra.mxu0 0.0
    %2728 = vmatpush.msra.mxu0 0.0
    %2729 = vmatpush.msra.mxu0 0.0
    %2730 = vmatpush.msra.mxu0 0.0
    %2731 = vmatpush.msra.mxu0 0.0
    %2732 = vmatpush.msra.mxu0 0.0
    %2733 = vmatpush.msra.mxu0 0.0
    %2734 = vmatpush.msra.mxu0 0.0
    %2735 = vmatpush.msra.mxu0 0.0
    %2736 = vmatpush.msra.mxu0 0.0
    %2737 = vmatpush.msra.mxu0 0.0
    %2738 = vmatpush.msra.mxu0 0.0
    %2739 = vmatpush.msra.mxu0 %v2203
    %2740 = vmatpush.msra.mxu0 %v2202
    %2741 = vmatpush.msra.mxu0 %v2201
    %2742 = vmatpush.msra.mxu0 %v2200
    %2743 = vmatmul.f32.gmra.mxu0 %v2725
    %v2744 = vpop.f32.mrf.mxu0
    %v2745 = vadd.f32 0.0, %v2744
    %2746 = vdwg.mxu0
    %v2748 = vrot.slane %v2745, 4
    %v2749 = vrot.slane %v2745, 5
    %v2752 = vadd.f32 %v2236, %v2748
    %v2753 = vadd.f32 %v2239, %v2749
    %v2754 = vxor.u32 %v2752, 2147483648
    %v2755 = vxor.u32 %v2753, 2147483648
    %v2756 = vmul.f32 %v2754, 1.442695
    %v2757 = vpow.pop %v2756
    %v2758 = vmul.f32 %v2755, 1.442695
    %v2759 = vpow.pop %v2758
    %v2760 = vadd.f32 %v2757, 1.0
    %v2761 = vadd.f32 %v2759, 1.0
    %v2762 = vrcp.pop %v2760
    %v2763 = vmul.f32 %v2760, %v2762
    %v2764 = vsub.f32 1.0, %v2763
    %v2765 = vmul.f32 %v2762, %v2764
    %v2766 = vadd.f32 %v2762, %v2765
    %vm2767 = vweird.f32 %v2760
    %vm2768 = vweird.f32 %v2762
    %vm2769 = vmor %vm2767, %vm2768
    %v2770 = vsel %vm2769, %v2762, %v2766
    %v2771 = vand.u32 2147483647, %v2760
    %vm2772 = vcmp.eq.f32.partialorder %v2771, 8.507059e+37
    %v2773 = vand.u32 %v2760, 2147483648
    %v2774 = vor.u32 1.1754944e-38, %v2773
    %v2775 = vsel %vm2772, %v2774, %v2770
    %v2776 = vmul.f32 1.0, %v2775
    %v2777 = vrcp.pop %v2761
    %v2778 = vmul.f32 %v2761, %v2777
    %v2779 = vsub.f32 1.0, %v2778
    %v2780 = vmul.f32 %v2777, %v2779
    %v2781 = vadd.f32 %v2777, %v2780
    %vm2782 = vweird.f32 %v2761
    %vm2783 = vweird.f32 %v2777
    %vm2784 = vmor %vm2782, %vm2783
    %v2785 = vsel %vm2784, %v2777, %v2781
    %v2786 = vand.u32 2147483647, %v2761
    %vm2787 = vcmp.eq.f32.partialorder %v2786, 8.507059e+37
    %v2788 = vand.u32 %v2761, 2147483648
    %v2789 = vor.u32 1.1754944e-38, %v2788
    %v2790 = vsel %vm2787, %v2789, %v2785
    %v2791 = vmul.f32 1.0, %v2790
    %v2792 = vtanh.pop %v2752
    %v2793 = vtanh.pop %v2753
    %v2796 = vrot.slane %v2696, 7
    %v2797 = vrot.slane %v2697, 7
    %v2800 = vmul.f32 %v2776, %v2796
    %v2801 = vmul.f32 %v2791, %v2797
    %2804 = vrot.lane.b32.xlu0 %v2792, 64
    %v2805 = vpop.permute.xlu0 %2804
    %2806 = vrot.lane.b32.xlu0 %v2793, 64
    %v2807 = vpop.permute.xlu0 %2806
    %v2810 = vmul.f32 %v2776, %v2805
    %v2811 = vmul.f32 %v2791, %v2807
    %2814 = vrot.lane.b32.xlu0 %v2810, 32
    %v2815 = vpop.permute.xlu0 %2814
    %2816 = vrot.lane.b32.xlu0 %v2811, 32
    %v2817 = vpop.permute.xlu0 %2816
    %v2820 = vadd.f32 %v2800, %v2815
    %v2821 = vadd.f32 %v2801, %v2817
    %v2822 = vtanh.pop %v2820
    %v2823 = vtanh.pop %v2821
    %2826 = vrot.lane.b32.xlu0 %v2822, 64
    %v2827 = vpop.permute.xlu0 %2826
    %2828 = vrot.lane.b32.xlu0 %v2823, 64
    %v2829 = vpop.permute.xlu0 %2828
    %v2832 = vmul.f32 %v2776, %v2827
    %v2833 = vmul.f32 %v2791, %v2829
    %2836 = vrot.lane.b32.xlu0 %v2832, 32
    %v2837 = vpop.permute.xlu0 %2836
    %2838 = vrot.lane.b32.xlu0 %v2833, 32
    %v2839 = vpop.permute.xlu0 %2838
    %2842 = vst.msk [vmem:[#allocation15] sm:$0x10] %vm800, %v2837
    %2843 = vst.msk [vmem:[#allocation15 + $0x8] sm:$0x10] %vm800, %v2839
    %v2844 = vrot.slane %v2832, 4
    %v2845 = vrot.slane %v2833, 3
    %v2846 = vsel %vm306, %v2845, %v2844
    %2847 = vrot.lane.b32.xlu0 %v2846, 32
    %v2848 = vpop.permute.xlu0 %2847
    %v2849 = vsel %vm190, %v2848, 0
    %2851 = vmatpush.msra.mxu0 0.0
    %2852 = vmatpush.msra.mxu0 0.0
    %2853 = vmatpush.msra.mxu0 0.0
    %2854 = vmatpush.msra.mxu0 0.0
    %2855 = vmatpush.msra.mxu0 0.0
    %2856 = vmatpush.msra.mxu0 0.0
    %2857 = vmatpush.msra.mxu0 0.0
    %2858 = vmatpush.msra.mxu0 0.0
    %2859 = vmatpush.msra.mxu0 0.0
    %2860 = vmatpush.msra.mxu0 0.0
    %2861 = vmatpush.msra.mxu0 0.0
    %2862 = vmatpush.msra.mxu0 0.0
    %2863 = vmatpush.msra.mxu0 %v2203
    %2864 = vmatpush.msra.mxu0 %v2202
    %2865 = vmatpush.msra.mxu0 %v2201
    %2866 = vmatpush.msra.mxu0 %v2200
    %2867 = vmatmul.f32.gmra.mxu0 %v2849
    %v2868 = vpop.f32.mrf.mxu0
    %v2869 = vadd.f32 0.0, %v2868
    %2870 = vdwg.mxu0
    %v2872 = vrot.slane %v2869, 3
    %v2873 = vrot.slane %v2869, 4
    %v2876 = vadd.f32 %v2236, %v2872
    %v2877 = vadd.f32 %v2239, %v2873
    %v2878 = vxor.u32 %v2876, 2147483648
    %v2879 = vxor.u32 %v2877, 2147483648
    %v2880 = vmul.f32 %v2878, 1.442695
    %v2881 = vpow.pop %v2880
    %v2882 = vmul.f32 %v2879, 1.442695
    %v2883 = vpow.pop %v2882
    %v2884 = vadd.f32 %v2881, 1.0
    %v2885 = vadd.f32 %v2883, 1.0
    %v2886 = vrcp.pop %v2884
    %v2887 = vmul.f32 %v2884, %v2886
    %v2888 = vsub.f32 1.0, %v2887
    %v2889 = vmul.f32 %v2886, %v2888
    %v2890 = vadd.f32 %v2886, %v2889
    %vm2891 = vweird.f32 %v2884
    %vm2892 = vweird.f32 %v2886
    %vm2893 = vmor %vm2891, %vm2892
    %v2894 = vsel %vm2893, %v2886, %v2890
    %v2895 = vand.u32 2147483647, %v2884
    %vm2896 = vcmp.eq.f32.partialorder %v2895, 8.507059e+37
    %v2897 = vand.u32 %v2884, 2147483648
    %v2898 = vor.u32 1.1754944e-38, %v2897
    %v2899 = vsel %vm2896, %v2898, %v2894
    %v2900 = vmul.f32 1.0, %v2899
    %v2901 = vrcp.pop %v2885
    %v2902 = vmul.f32 %v2885, %v2901
    %v2903 = vsub.f32 1.0, %v2902
    %v2904 = vmul.f32 %v2901, %v2903
    %v2905 = vadd.f32 %v2901, %v2904
    %vm2906 = vweird.f32 %v2885
    %vm2907 = vweird.f32 %v2901
    %vm2908 = vmor %vm2906, %vm2907
    %v2909 = vsel %vm2908, %v2901, %v2905
    %v2910 = vand.u32 2147483647, %v2885
    %vm2911 = vcmp.eq.f32.partialorder %v2910, 8.507059e+37
    %v2912 = vand.u32 %v2885, 2147483648
    %v2913 = vor.u32 1.1754944e-38, %v2912
    %v2914 = vsel %vm2911, %v2913, %v2909
    %v2915 = vmul.f32 1.0, %v2914
    %v2916 = vtanh.pop %v2876
    %v2917 = vtanh.pop %v2877
    %v2920 = vrot.slane %v2820, 7
    %v2921 = vrot.slane %v2821, 7
    %v2924 = vmul.f32 %v2900, %v2920
    %v2925 = vmul.f32 %v2915, %v2921
    %2928 = vrot.lane.b32.xlu0 %v2916, 64
    %v2929 = vpop.permute.xlu0 %2928
    %2930 = vrot.lane.b32.xlu0 %v2917, 64
    %v2931 = vpop.permute.xlu0 %2930
    %v2934 = vmul.f32 %v2900, %v2929
    %v2935 = vmul.f32 %v2915, %v2931
    %2938 = vrot.lane.b32.xlu0 %v2934, 32
    %v2939 = vpop.permute.xlu0 %2938
    %2940 = vrot.lane.b32.xlu0 %v2935, 32
    %v2941 = vpop.permute.xlu0 %2940
    %v2944 = vadd.f32 %v2924, %v2939
    %v2945 = vadd.f32 %v2925, %v2941
    %v2946 = vtanh.pop %v2944
    %v2947 = vtanh.pop %v2945
    %2950 = vrot.lane.b32.xlu0 %v2946, 64
    %v2951 = vpop.permute.xlu0 %2950
    %2952 = vrot.lane.b32.xlu0 %v2947, 64
    %v2953 = vpop.permute.xlu0 %2952
    %v2956 = vmul.f32 %v2900, %v2951
    %v2957 = vmul.f32 %v2915, %v2953
    %2960 = vrot.lane.b32.xlu0 %v2956, 32
    %v2961 = vpop.permute.xlu0 %2960
    %2962 = vrot.lane.b32.xlu0 %v2957, 32
    %v2963 = vpop.permute.xlu0 %2962
    %2966 = vst.msk [vmem:[#allocation15] sm:$0x20] %vm925, %v2961
    %2967 = vst.msk [vmem:[#allocation15 + $0x8] sm:$0x20] %vm925, %v2963
    %v2968 = vrot.slane %v2956, 5
    %v2969 = vrot.slane %v2957, 4
    %v2970 = vsel %vm306, %v2969, %v2968
    %2971 = vrot.lane.b32.xlu0 %v2970, 32
    %v2972 = vpop.permute.xlu0 %2971
    %v2973 = vsel %vm190, %v2972, 0
    %2975 = vmatpush.msra.mxu0 0.0
    %2976 = vmatpush.msra.mxu0 0.0
    %2977 = vmatpush.msra.mxu0 0.0
    %2978 = vmatpush.msra.mxu0 0.0
    %2979 = vmatpush.msra.mxu0 0.0
    %2980 = vmatpush.msra.mxu0 0.0
    %2981 = vmatpush.msra.mxu0 0.0
    %2982 = vmatpush.msra.mxu0 0.0
    %2983 = vmatpush.msra.mxu0 0.0
    %2984 = vmatpush.msra.mxu0 0.0
    %2985 = vmatpush.msra.mxu0 0.0
    %2986 = vmatpush.msra.mxu0 0.0
    %2987 = vmatpush.msra.mxu0 %v2203
    %2988 = vmatpush.msra.mxu0 %v2202
    %2989 = vmatpush.msra.mxu0 %v2201
    %2990 = vmatpush.msra.mxu0 %v2200
    %2991 = vmatmul.f32.gmra.mxu0 %v2973
    %v2992 = vpop.f32.mrf.mxu0
    %v2993 = vadd.f32 0.0, %v2992
    %2994 = vdwg.mxu0
    %v2996 = vrot.slane %v2993, 2
    %v2997 = vrot.slane %v2993, 3
    %v3000 = vadd.f32 %v2236, %v2996
    %v3001 = vadd.f32 %v2239, %v2997
    %v3002 = vxor.u32 %v3000, 2147483648
    %v3003 = vxor.u32 %v3001, 2147483648
    %v3004 = vmul.f32 %v3002, 1.442695
    %v3005 = vpow.pop %v3004
    %v3006 = vmul.f32 %v3003, 1.442695
    %v3007 = vpow.pop %v3006
    %v3008 = vadd.f32 %v3005, 1.0
    %v3009 = vadd.f32 %v3007, 1.0
    %v3010 = vrcp.pop %v3008
    %v3011 = vmul.f32 %v3008, %v3010
    %v3012 = vsub.f32 1.0, %v3011
    %v3013 = vmul.f32 %v3010, %v3012
    %v3014 = vadd.f32 %v3010, %v3013
    %vm3015 = vweird.f32 %v3008
    %vm3016 = vweird.f32 %v3010
    %vm3017 = vmor %vm3015, %vm3016
    %v3018 = vsel %vm3017, %v3010, %v3014
    %v3019 = vand.u32 2147483647, %v3008
    %vm3020 = vcmp.eq.f32.partialorder %v3019, 8.507059e+37
    %v3021 = vand.u32 %v3008, 2147483648
    %v3022 = vor.u32 1.1754944e-38, %v3021
    %v3023 = vsel %vm3020, %v3022, %v3018
    %v3024 = vmul.f32 1.0, %v3023
    %v3025 = vrcp.pop %v3009
    %v3026 = vmul.f32 %v3009, %v3025
    %v3027 = vsub.f32 1.0, %v3026
    %v3028 = vmul.f32 %v3025, %v3027
    %v3029 = vadd.f32 %v3025, %v3028
    %vm3030 = vweird.f32 %v3009
    %vm3031 = vweird.f32 %v3025
    %vm3032 = vmor %vm3030, %vm3031
    %v3033 = vsel %vm3032, %v3025, %v3029
    %v3034 = vand.u32 2147483647, %v3009
    %vm3035 = vcmp.eq.f32.partialorder %v3034, 8.507059e+37
    %v3036 = vand.u32 %v3009, 2147483648
    %v3037 = vor.u32 1.1754944e-38, %v3036
    %v3038 = vsel %vm3035, %v3037, %v3033
    %v3039 = vmul.f32 1.0, %v3038
    %v3040 = vtanh.pop %v3000
    %v3041 = vtanh.pop %v3001
    %v3044 = vrot.slane %v2944, 7
    %v3045 = vrot.slane %v2945, 7
    %v3048 = vmul.f32 %v3024, %v3044
    %v3049 = vmul.f32 %v3039, %v3045
    %3052 = vrot.lane.b32.xlu0 %v3040, 64
    %v3053 = vpop.permute.xlu0 %3052
    %3054 = vrot.lane.b32.xlu0 %v3041, 64
    %v3055 = vpop.permute.xlu0 %3054
    %v3058 = vmul.f32 %v3024, %v3053
    %v3059 = vmul.f32 %v3039, %v3055
    %3062 = vrot.lane.b32.xlu0 %v3058, 32
    %v3063 = vpop.permute.xlu0 %3062
    %3064 = vrot.lane.b32.xlu0 %v3059, 32
    %v3065 = vpop.permute.xlu0 %3064
    %v3068 = vadd.f32 %v3048, %v3063
    %v3069 = vadd.f32 %v3049, %v3065
    %v3070 = vtanh.pop %v3068
    %v3071 = vtanh.pop %v3069
    %3074 = vrot.lane.b32.xlu0 %v3070, 64
    %v3075 = vpop.permute.xlu0 %3074
    %3076 = vrot.lane.b32.xlu0 %v3071, 64
    %v3077 = vpop.permute.xlu0 %3076
    %v3080 = vmul.f32 %v3024, %v3075
    %v3081 = vmul.f32 %v3039, %v3077
    %3084 = vrot.lane.b32.xlu0 %v3080, 32
    %v3085 = vpop.permute.xlu0 %3084
    %3086 = vrot.lane.b32.xlu0 %v3081, 32
    %v3087 = vpop.permute.xlu0 %3086
    %3090 = vst.msk [vmem:[#allocation15] sm:$0x40] %vm1050, %v3085
    %3091 = vst.msk [vmem:[#allocation15 + $0x8] sm:$0x40] %vm1050, %v3087
    %v3092 = vrot.slane %v3080, 6
    %v3093 = vrot.slane %v3081, 5
    %v3094 = vsel %vm306, %v3093, %v3092
    %3095 = vrot.lane.b32.xlu0 %v3094, 32
    %v3096 = vpop.permute.xlu0 %3095
    %v3097 = vsel %vm190, %v3096, 0
    %3099 = vmatpush.msra.mxu0 0.0
    %3100 = vmatpush.msra.mxu0 0.0
    %3101 = vmatpush.msra.mxu0 0.0
    %3102 = vmatpush.msra.mxu0 0.0
    %3103 = vmatpush.msra.mxu0 0.0
    %3104 = vmatpush.msra.mxu0 0.0
    %3105 = vmatpush.msra.mxu0 0.0
    %3106 = vmatpush.msra.mxu0 0.0
    %3107 = vmatpush.msra.mxu0 0.0
    %3108 = vmatpush.msra.mxu0 0.0
    %3109 = vmatpush.msra.mxu0 0.0
    %3110 = vmatpush.msra.mxu0 0.0
    %3111 = vmatpush.msra.mxu0 %v2203
    %3112 = vmatpush.msra.mxu0 %v2202
    %3113 = vmatpush.msra.mxu0 %v2201
    %3114 = vmatpush.msra.mxu0 %v2200
    %3115 = vmatmul.f32.gmra.mxu0 %v3097
    %v3116 = vpop.f32.mrf.mxu0
    %v3117 = vadd.f32 0.0, %v3116
    %3118 = vdwg.mxu0
    %v3120 = vrot.slane %v3117, 1
    %v3121 = vrot.slane %v3117, 2
    %v3124 = vadd.f32 %v2236, %v3120
    %v3125 = vadd.f32 %v2239, %v3121
    %v3126 = vxor.u32 %v3124, 2147483648
    %v3127 = vxor.u32 %v3125, 2147483648
    %v3128 = vmul.f32 %v3126, 1.442695
    %v3129 = vpow.pop %v3128
    %v3130 = vmul.f32 %v3127, 1.442695
    %v3131 = vpow.pop %v3130
    %v3132 = vadd.f32 %v3129, 1.0
    %v3133 = vadd.f32 %v3131, 1.0
    %v3134 = vrcp.pop %v3132
    %v3135 = vmul.f32 %v3132, %v3134
    %v3136 = vsub.f32 1.0, %v3135
    %v3137 = vmul.f32 %v3134, %v3136
    %v3138 = vadd.f32 %v3134, %v3137
    %vm3139 = vweird.f32 %v3132
    %vm3140 = vweird.f32 %v3134
    %vm3141 = vmor %vm3139, %vm3140
    %v3142 = vsel %vm3141, %v3134, %v3138
    %v3143 = vand.u32 2147483647, %v3132
    %vm3144 = vcmp.eq.f32.partialorder %v3143, 8.507059e+37
    %v3145 = vand.u32 %v3132, 2147483648
    %v3146 = vor.u32 1.1754944e-38, %v3145
    %v3147 = vsel %vm3144, %v3146, %v3142
    %v3148 = vmul.f32 1.0, %v3147
    %v3149 = vrcp.pop %v3133
    %v3150 = vmul.f32 %v3133, %v3149
    %v3151 = vsub.f32 1.0, %v3150
    %v3152 = vmul.f32 %v3149, %v3151
    %v3153 = vadd.f32 %v3149, %v3152
    %vm3154 = vweird.f32 %v3133
    %vm3155 = vweird.f32 %v3149
    %vm3156 = vmor %vm3154, %vm3155
    %v3157 = vsel %vm3156, %v3149, %v3153
    %v3158 = vand.u32 2147483647, %v3133
    %vm3159 = vcmp.eq.f32.partialorder %v3158, 8.507059e+37
    %v3160 = vand.u32 %v3133, 2147483648
    %v3161 = vor.u32 1.1754944e-38, %v3160
    %v3162 = vsel %vm3159, %v3161, %v3157
    %v3163 = vmul.f32 1.0, %v3162
    %v3164 = vtanh.pop %v3124
    %v3165 = vtanh.pop %v3125
    %v3168 = vrot.slane %v3068, 7
    %v3169 = vrot.slane %v3069, 7
    %v3172 = vmul.f32 %v3148, %v3168
    %v3173 = vmul.f32 %v3163, %v3169
    %3176 = vrot.lane.b32.xlu0 %v3164, 64
    %v3177 = vpop.permute.xlu0 %3176
    %3178 = vrot.lane.b32.xlu0 %v3165, 64
    %v3179 = vpop.permute.xlu0 %3178
    %v3182 = vmul.f32 %v3148, %v3177
    %v3183 = vmul.f32 %v3163, %v3179
    %3186 = vrot.lane.b32.xlu0 %v3182, 32
    %v3187 = vpop.permute.xlu0 %3186
    %3188 = vrot.lane.b32.xlu0 %v3183, 32
    %v3189 = vpop.permute.xlu0 %3188
    %v3192 = vadd.f32 %v3172, %v3187
    %v3193 = vadd.f32 %v3173, %v3189
    %v3194 = vtanh.pop %v3192
    %v3195 = vtanh.pop %v3193
    %3198 = vrot.lane.b32.xlu0 %v3194, 64
    %v3199 = vpop.permute.xlu0 %3198
    %3200 = vrot.lane.b32.xlu0 %v3195, 64
    %v3201 = vpop.permute.xlu0 %3200
    %v3204 = vmul.f32 %v3148, %v3199
    %v3205 = vmul.f32 %v3163, %v3201
    %3208 = vrot.lane.b32.xlu0 %v3204, 32
    %v3209 = vpop.permute.xlu0 %3208
    %3210 = vrot.lane.b32.xlu0 %v3205, 32
    %v3211 = vpop.permute.xlu0 %3210
    %3214 = vst.msk [vmem:[#allocation15] sm:$0x80] %vm1175, %v3209
    %3215 = vst.msk [vmem:[#allocation15 + $0x8] sm:$0x80] %vm1175, %v3211
    %v3216 = vrot.slane %v3205, 7
    %3217 = vrot.lane.b32.xlu0 %v3216, 32
    %v3218 = vpop.permute.xlu0 %3217
    %3220 = vst.msk [vmem:[#allocation16 - $0x7] sm:$0x80] %vm1175, %v3209
    %3221 = vst.msk [vmem:[#allocation16 + $0x1] sm:$0x1] %vm302, %v3218
    // Predicated region
    $region70: #{lstm_encoder_forward.1} parent=1 // pred_check
      _
    $region71: #{lstm_encoder_forward.1} parent=1 // pred_check_branch
      %3223 = sbr.rel (0) target = $region73
    $region72: #{lstm_encoder_forward.1} parent=1 // pred_region
      %3225 = vsyncadd [#allocation5], 0
      %s3226 = sshll.u32 [#allocation15], 4
      %s3227 = int_to_ptr.vmem [resolvable:$true] %s3226
      %s3228 = sshll.u32 %s10, 4
      %s3229 = int_to_ptr.hbm [resolvable:$true] %s3228
      %3234 = dma.vmem_to_hbm [thread:$0]  %s3227, 256, %s3229, [#allocation5], 128, 128, 8
    $region73: #{lstm_encoder_forward.1} parent=1 // pred_fallthru
      _
    // Predicated region
    $region74: #{lstm_encoder_forward.1} parent=1 // pred_check
      _
    $region75: #{lstm_encoder_forward.1} parent=1 // pred_check_branch
      %3236 = sbr.rel (0) target = $region77
    $region76: #{lstm_encoder_forward.1} parent=1 // pred_region
      %3238 = vsyncadd [#allocation17], 0
      %s3240 = sshll.u32 [#allocation16], 4
      %s3241 = int_to_ptr.vmem [resolvable:$true] %s3240
      %s3242 = sshll.u32 %s11, 4
      %s3243 = int_to_ptr.hbm [resolvable:$true] %s3242
      %3245 = dma.vmem_to_hbm [thread:$0]  %s3241, 32, %s3243, [#allocation17]
    $region77: #{lstm_encoder_forward.1} parent=1 // pred_fallthru
      _
    // Predicated region
    $region78: #{lstm_encoder_forward.1} parent=1 // pred_check
      _
    $region79: #{lstm_encoder_forward.1} parent=1 // pred_check_branch
      %3247 = sbr.rel (0) target = $region81
    $region80: #{lstm_encoder_forward.1} parent=1 // pred_region
      %3249 = dma.done [#allocation5], 256
    $region81: #{lstm_encoder_forward.1} parent=1 // pred_fallthru
      _
    // Predicated region
    $region82: #{lstm_encoder_forward.1} parent=1 // pred_check
      _
    $region83: #{lstm_encoder_forward.1} parent=1 // pred_check_branch
      %3251 = sbr.rel (0) target = $region85
    $region84: #{lstm_encoder_forward.1} parent=1 // pred_region
      %3253 = dma.done [#allocation17], 32
    $region85: #{lstm_encoder_forward.1} parent=1 // pred_fallthru
      _
    %3254 = vsyncpa [#allocation4], 1
    %3255 = vsyncpa [#allocation7], 1
    %3256 = vsyncpa [#allocation10], 1
    %3257 = vsyncpa [#allocation13], 1
    %3258 = vsyncpa [#allocation5], 1
    %3259 = vsyncpa [#allocation17], 1

</llo_original>
